<compile_context>
chip_gen: v5e
topology: v5e:2x2
jax: 0.10.0
libtpu: 0.0.40
codegen_flags: <defaults>
</compile_context>

<pallas_src>
import functools

import jax
import jax.numpy as jnp
from jax import lax
from jax.experimental import pallas as pl
from jax.experimental.pallas import tpu as pltpu


def _round_up(x, m):
    return (x + m - 1) // m * m


def _ln_normalize(x_f32, eps=1e-5):
    # PyTorch nn.LayerNorm: biased variance, eps inside rsqrt.
    mean = jnp.mean(x_f32, axis=-1, keepdims=True)
    var = jnp.mean(jnp.square(x_f32 - mean), axis=-1, keepdims=True)
    return (x_f32 - mean) * lax.rsqrt(var + eps)


def cross_attention_kernel(
    target_ref, source_ref,
    nq_g_ref, nq_b_ref, wq_ref, bq_ref,
    nk_g_ref, nk_b_ref, wk_ref, bk_ref,
    nv_g_ref, nv_b_ref, wv_ref, bv_ref,
    wo_ref, bo_ref,
    out_ref,
    k_scratch, v_scratch,
    *, num_heads, mxu_dtype, exp_dtype):

    f32 = jnp.float32
    qi = pl.program_id(1)

    # ---- K / V projections: once per batch row, streamed per head into VMEM
    @pl.when(qi == 0)
    def _():
        # One shared LayerNorm reduction for both K and V (only gamma/beta differ).
        s_hat = _ln_normalize(source_ref[0].astype(f32))
        k_in = (s_hat * nk_g_ref[...] + nk_b_ref[...]).astype(mxu_dtype)
        v_in = (s_hat * nv_g_ref[...] + nv_b_ref[...]).astype(mxu_dtype)
        for h in range(num_heads):      # static loop; per-head live temp only
            k_scratch[h] = (
                jnp.dot(k_in, wk_ref[h], preferred_element_type=f32) + bk_ref[h]
            ).astype(k_scratch.dtype)
            v_scratch[h] = (
                jnp.dot(v_in, wv_ref[h], preferred_element_type=f32) + bv_ref[h]
            ).astype(v_scratch.dtype)

    # ---- Q LayerNorm for this query tile -------------------------------------
    q_hat = _ln_normalize(target_ref[0].astype(f32))
    q_in = (q_hat * nq_g_ref[...] + nq_b_ref[...]).astype(mxu_dtype)

    tq = target_ref.shape[1]
    out_pad = out_ref.shape[2]
    acc = jnp.zeros((tq, out_pad), f32)     # fc_out accumulator (sum over heads)

    # ---- per-head attention + folded output projection ----------------------
    # (the 1/sqrt(d_k) attention scale is pre-folded into wq/bq by the wrapper)
    for h in range(num_heads):
        q_h = (jnp.dot(q_in, wq_ref[h], preferred_element_type=f32)
               + bq_ref[h]).astype(mxu_dtype)                   # (tq, hd_p)
        s = lax.dot_general(q_h, k_scratch[h], (((1,), (1,)), ((), ())),
                            preferred_element_type=f32)         # (tq, Skv)
        m = jnp.max(s, axis=-1, keepdims=True)
        p = jnp.exp((s - m).astype(exp_dtype))                  # EUP (bf16 on v6e/v7x)
        l = jnp.sum(p.astype(f32), axis=-1, keepdims=True)      # (tq, 1) f32
        o = lax.dot_general(p.astype(mxu_dtype), v_scratch[h],
                            (((1,), (0,)), ((), ())),
                            preferred_element_type=f32)         # (tq, hd_p)
        # Deferred softmax normalization on the small per-head output.
        o = o * pl.reciprocal(l, approx=True)
        # fc_out(concat_h o_h) == sum_h o_h @ Wo_h  -- accumulate in f32.
        acc = acc + jnp.dot(o.astype(mxu_dtype), wo_ref[h],
                            preferred_element_type=f32)         # (tq, out_pad)

    # dropout(p=0.1) is the identity at inference time (eval mode).
    out_ref[0] = (acc + bo_ref[...]).astype(out_ref.dtype)


def cross_attention_forward(target, source, params, *, num_heads,
                            mxu_dtype=jnp.bfloat16):
    N, Sq, Dq = target.shape
    Ns, Skv, Dkv = source.shape
    assert Ns == N
    inner_dim = params["wq"].shape[1]
    inner_kv_dim = params["wk"].shape[1]
    out_dim = params["wo"].shape[1]
    head_dim = inner_dim // num_heads
    # The PyTorch .view() of K/V into (N, Skv, H, inner_dim // H) requires this:
    assert inner_kv_dim == inner_dim
    # The PyTorch .view(N, kv_seq_len, inner_kv_dim) of the attention output
    # requires q_seq_len == kv_seq_len:
    assert Sq == Skv

    out_dtype = target.dtype
    f32 = jnp.float32

    # ---------------- per-chip heuristics -------------------------------------
    try:
        kind = jax.devices()[0].device_kind.lower()
    except Exception:  # pragma: no cover
        kind = ""
    is_v5 = "v5" in kind
    is_v7 = "v7" in kind
    preferred_exp_dtype = f32 if is_v5 else jnp.bfloat16     # bf16 EUP on v6e/v7x
    vmem_limit = (48 << 20) if is_v7 else (100 << 20)        # v7x has 64 MiB VMEM
    tq_cap = 256 if is_v7 else 512

    # ---------------- wrapper-side layout prep (runs once in XLA) -------------
    hd_p = _round_up(head_dim, 128)           # lane-dense per-head width
    out_pad = _round_up(out_dim, 128)         # lane-dense output stores

    def head_split_w(w):                      # (D, H*hd) -> (H, D, hd_p)
        D = w.shape[0]
        w3 = w.reshape(D, num_heads, head_dim)
        w3 = jnp.pad(w3, ((0, 0), (0, 0), (0, hd_p - head_dim)))
        return jnp.transpose(w3, (1, 0, 2))

    def head_split_b(b):                      # (1, H*hd) -> (H, 1, hd_p)
        b2 = b.reshape(num_heads, head_dim)
        b2 = jnp.pad(b2, ((0, 0), (0, hd_p - head_dim)))
        return b2[:, None, :]

    scale = 1.0 / (head_dim ** 0.5)           # fold attention scale into Q proj
    wq = (head_split_w(params["wq"]) * scale).astype(mxu_dtype)
    bq = (head_split_b(params["bq"]) * scale).astype(f32)
    wk = head_split_w(params["wk"]).astype(mxu_dtype)
    bk = head_split_b(params["bk"]).astype(f32)
    wv = head_split_w(params["wv"]).astype(mxu_dtype)
    bv = head_split_b(params["bv"]).astype(f32)

    wo = params["wo"].reshape(num_heads, head_dim, out_dim)
    wo = jnp.pad(wo, ((0, 0), (0, hd_p - head_dim), (0, out_pad - out_dim)))
    wo = wo.astype(mxu_dtype)                 # (H, hd_p, out_pad)
    bo = jnp.pad(params["bo"], ((0, 0), (0, out_pad - out_dim))).astype(f32)

    nq_g = params["nq_g"].astype(f32); nq_b = params["nq_b"].astype(f32)
    nk_g = params["nk_g"].astype(f32); nk_b = params["nk_b"].astype(f32)
    nv_g = params["nv_g"].astype(f32); nv_b = params["nv_b"].astype(f32)

    # ---------------- query-sequence tiling ------------------------------------
    itemsize = jnp.dtype(out_dtype).itemsize
    row_mult = max(8, 32 // max(itemsize, 1))   # 8 rows/vreg f32, 16 bf16, 32 int8
    tq = min(_round_up(Sq, row_mult), _round_up(tq_cap, row_mult))
    Sq_p = _round_up(Sq, tq)
    target_p = target
    if Sq_p != Sq:
        target_p = jnp.pad(target, ((0, 0), (0, Sq_p - Sq), (0, 0)))
    n_q = Sq_p // tq

    param_list = [nq_g, nq_b, wq, bq, nk_g, nk_b, wk, bk, nv_g, nv_b, wv, bv, wo, bo]

    def run(single_buffer_params, exp_dtype):
        pm = pl.Buffered(buffer_count=1) if single_buffer_params else None

        def full_spec(shape):
            nd = len(shape)
            im = lambda n, qi, _nd=nd: (0,) * _nd
            if pm is None:
                return pl.BlockSpec(shape, im)
            return pl.BlockSpec(shape, im, pipeline_mode=pm)

        in_specs = [
            pl.BlockSpec((1, tq, Dq), lambda n, qi: (n, qi, 0)),
            pl.BlockSpec((1, Skv, Dkv), lambda n, qi: (n, 0, 0)),
        ] + [full_spec(p.shape) for p in param_list]

        kernel = functools.partial(
            cross_attention_kernel, num_heads=num_heads,
            mxu_dtype=mxu_dtype, exp_dtype=exp_dtype)

        return pl.pallas_call(
            kernel,
            out_shape=jax.ShapeDtypeStruct((N, Sq_p, out_pad), out_dtype),
            grid=(N, n_q),
            in_specs=in_specs,
            out_specs=pl.BlockSpec((1, tq, out_pad), lambda n, qi: (n, qi, 0)),
            scratch_shapes=[
                pltpu.VMEM((num_heads, Skv, hd_p), mxu_dtype),   # K (per-head)
                pltpu.VMEM((num_heads, Skv, hd_p), mxu_dtype),   # V (per-head)
            ],
            compiler_params=pltpu.CompilerParams(
                dimension_semantics=("parallel", "arbitrary"),
                vmem_limit_bytes=vmem_limit),
        )(target_p, source, *param_list)

    try:
        # Aggressive configuration: single-buffered constant params, bf16 exp
        # (f32 on v5*).
        out_p = run(True, preferred_exp_dtype)
    except Exception:
        # Conservative fallback: default double-buffering, f32 exp.
        out_p = run(False, f32)

    return out_p[:, :Sq, :out_dim]


def reference_forward(target, source, params, *, num_heads):
    """Plain-JAX (f32) mirror of the PyTorch forward (eval mode) for validation."""
    N, Sq, Dq = target.shape
    _, Skv, Dkv = source.shape
    inner_dim = params["wq"].shape[1]
    head_dim = inner_dim // num_heads

    def ln(x, g, b):
        m = jnp.mean(x, axis=-1, keepdims=True)
        v = jnp.mean(jnp.square(x - m), axis=-1, keepdims=True)
        return (x - m) * lax.rsqrt(v + 1e-5) * g + b

    Q = ln(target, params["nq_g"], params["nq_b"]) @ params["wq"] + params["bq"]
    K = ln(source, params["nk_g"], params["nk_b"]) @ params["wk"] + params["bk"]
    V = ln(source, params["nv_g"], params["nv_b"]) @ params["wv"] + params["bv"]
    Q = Q.reshape(N, Sq, num_heads, head_dim).transpose(0, 2, 1, 3)
    K = K.reshape(N, Skv, num_heads, head_dim).transpose(0, 2, 1, 3)
    V = V.reshape(N, Skv, num_heads, head_dim).transpose(0, 2, 1, 3)
    scores = jnp.einsum("nhqd,nhkd->nhqk", Q, K) / jnp.sqrt(jnp.float32(head_dim))
    attn = jax.nn.softmax(scores, axis=-1)
    out = jnp.einsum("nhqk,nhkd->nhqd", attn, V)
    out = out.transpose(0, 2, 1, 3).reshape(N, Sq, inner_dim)
    return out @ params["wo"] + params["bo"]


def make_params(key, query_dim, kv_dim, inner_dim, inner_kv_dim, out_dim):
    """Deterministic synthetic parameters (PyTorch Linear weights stored
    pre-transposed as (in, out); biases/LN params stored as (1, D))."""
    ks = jax.random.split(key, 8)
    scale = 0.05
    p = {
        "nq_g": jnp.ones((1, query_dim), jnp.float32),
        "nq_b": jnp.zeros((1, query_dim), jnp.float32),
        "nk_g": jnp.ones((1, kv_dim), jnp.float32),
        "nk_b": jnp.zeros((1, kv_dim), jnp.float32),
        "nv_g": jnp.ones((1, kv_dim), jnp.float32),
        "nv_b": jnp.zeros((1, kv_dim), jnp.float32),
        "wq": scale * jax.random.normal(ks[0], (query_dim, inner_dim), jnp.float32),
        "bq": scale * jax.random.normal(ks[1], (1, inner_dim), jnp.float32),
        "wk": scale * jax.random.normal(ks[2], (kv_dim, inner_kv_dim), jnp.float32),
        "bk": scale * jax.random.normal(ks[3], (1, inner_kv_dim), jnp.float32),
        "wv": scale * jax.random.normal(ks[4], (kv_dim, inner_kv_dim), jnp.float32),
        "bv": scale * jax.random.normal(ks[5], (1, inner_kv_dim), jnp.float32),
        "wo": scale * jax.random.normal(ks[6], (inner_dim, out_dim), jnp.float32),
        "bo": scale * jax.random.normal(ks[7], (1, out_dim), jnp.float32),
    }
    # Make LN affine params non-trivial (still deterministic).
    p["nq_g"] = p["nq_g"] + 0.1 * jax.random.normal(
        jax.random.PRNGKey(1), (1, query_dim), jnp.float32)
    p["nk_g"] = p["nk_g"] + 0.1 * jax.random.normal(
        jax.random.PRNGKey(2), (1, kv_dim), jnp.float32)
    p["nv_g"] = p["nv_g"] + 0.1 * jax.random.normal(
        jax.random.PRNGKey(3), (1, kv_dim), jnp.float32)
    return p


if __name__ == "__main__":
    # Small shapes consistent with the module's forward.
    N, Sq, Skv = 2, 8, 8            # q_seq_len must equal kv_seq_len (PyTorch .view)
    query_dim, kv_dim = 32, 48
    inner_dim, inner_kv_dim = 32, 32    # must be equal for the PyTorch .view of K/V
    out_dim = 16
    num_heads = 4

    key = jax.random.PRNGKey(0)
    k_t, k_s, k_p = jax.random.split(key, 3)
    target = jax.random.normal(k_t, (N, Sq, query_dim), jnp.float32)
    source = jax.random.normal(k_s, (N, Skv, kv_dim), jnp.float32)
    params = make_params(k_p, query_dim, kv_dim, inner_dim, inner_kv_dim, out_dim)

    out = cross_attention_forward(target, source, params, num_heads=num_heads)
    out = jax.block_until_ready(out)

    ref = reference_forward(target, source, params, num_heads=num_heads)
    assert out.shape == (N, Sq, out_dim)
    # Relaxed tolerance: the kernel runs bf16 MXU operands (+ bf16 exp on
    # v6e/v7x) and an approx-reciprocal softmax normalizer vs. the f32 reference.
    assert jnp.allclose(out, ref, atol=1e-2, rtol=1e-2), (
        float(jnp.max(jnp.abs(out - ref))))

    print("KERNEL_OK")
</pallas_src>

<mosaic_0001>
module attributes {stable_mosaic.version = 11 : i64} {
  func.func @cross_attention_kernel(%arg0: i32, %arg1: i32, %arg2: memref<1x8x32xf32, #tpu.memory_space<vmem>>, %arg3: memref<1x8x48xf32, #tpu.memory_space<vmem>>, %arg4: memref<1x32xf32, #tpu.memory_space<vmem>>, %arg5: memref<1x32xf32, #tpu.memory_space<vmem>>, %arg6: memref<4x32x128xbf16, #tpu.memory_space<vmem>>, %arg7: memref<4x1x128xf32, #tpu.memory_space<vmem>>, %arg8: memref<1x48xf32, #tpu.memory_space<vmem>>, %arg9: memref<1x48xf32, #tpu.memory_space<vmem>>, %arg10: memref<4x48x128xbf16, #tpu.memory_space<vmem>>, %arg11: memref<4x1x128xf32, #tpu.memory_space<vmem>>, %arg12: memref<1x48xf32, #tpu.memory_space<vmem>>, %arg13: memref<1x48xf32, #tpu.memory_space<vmem>>, %arg14: memref<4x48x128xbf16, #tpu.memory_space<vmem>>, %arg15: memref<4x1x128xf32, #tpu.memory_space<vmem>>, %arg16: memref<4x128x128xbf16, #tpu.memory_space<vmem>>, %arg17: memref<1x128xf32, #tpu.memory_space<vmem>>, %arg18: memref<1x8x128xf32, #tpu.memory_space<vmem>>, %arg19: memref<4x8x128xbf16, #tpu.memory_space<vmem>>, %arg20: memref<4x8x128xbf16, #tpu.memory_space<vmem>>) attributes {dimension_semantics = [#tpu.dimension_semantics<parallel>, #tpu.dimension_semantics<arbitrary>], iteration_bounds = array<i64: 2, 1>, scalar_prefetch = 0 : i64, scratch_operands = 2 : i64, tpu.core_type = #tpu.core_type<tc>, window_params = [{transform_indices = @transform_0, window_bounds = array<i64: 1, 8, 32>}, {transform_indices = @transform_1, window_bounds = array<i64: 1, 8, 48>}, {pipeline_mode = #tpu.pipeline_mode<synchronous>, transform_indices = @transform_2, window_bounds = array<i64: 1, 32>}, {pipeline_mode = #tpu.pipeline_mode<synchronous>, transform_indices = @transform_3, window_bounds = array<i64: 1, 32>}, {pipeline_mode = #tpu.pipeline_mode<synchronous>, transform_indices = @transform_4, window_bounds = array<i64: 4, 32, 128>}, {pipeline_mode = #tpu.pipeline_mode<synchronous>, transform_indices = @transform_5, window_bounds = array<i64: 4, 1, 128>}, {pipeline_mode = #tpu.pipeline_mode<synchronous>, transform_indices = @transform_6, window_bounds = array<i64: 1, 48>}, {pipeline_mode = #tpu.pipeline_mode<synchronous>, transform_indices = @transform_7, window_bounds = array<i64: 1, 48>}, {pipeline_mode = #tpu.pipeline_mode<synchronous>, transform_indices = @transform_8, window_bounds = array<i64: 4, 48, 128>}, {pipeline_mode = #tpu.pipeline_mode<synchronous>, transform_indices = @transform_9, window_bounds = array<i64: 4, 1, 128>}, {pipeline_mode = #tpu.pipeline_mode<synchronous>, transform_indices = @transform_10, window_bounds = array<i64: 1, 48>}, {pipeline_mode = #tpu.pipeline_mode<synchronous>, transform_indices = @transform_11, window_bounds = array<i64: 1, 48>}, {pipeline_mode = #tpu.pipeline_mode<synchronous>, transform_indices = @transform_12, window_bounds = array<i64: 4, 48, 128>}, {pipeline_mode = #tpu.pipeline_mode<synchronous>, transform_indices = @transform_13, window_bounds = array<i64: 4, 1, 128>}, {pipeline_mode = #tpu.pipeline_mode<synchronous>, transform_indices = @transform_14, window_bounds = array<i64: 4, 128, 128>}, {pipeline_mode = #tpu.pipeline_mode<synchronous>, transform_indices = @transform_15, window_bounds = array<i64: 1, 128>}, {transform_indices = @transform_16, window_bounds = array<i64: 1, 8, 128>}]} {
    %c0_i32 = arith.constant 0 : i32
    %0 = arith.cmpi eq, %arg1, %c0_i32 : i32
    %1 = arith.extui %0 : i1 to i32
    %c0_i32_0 = arith.constant 0 : i32
    %2 = arith.cmpi ne, %1, %c0_i32_0 : i32
    scf.if %2 {
      %c0_98 = arith.constant 0 : index
      %c0_99 = arith.constant 0 : index
      %c0_100 = arith.constant 0 : index
      %161 = vector.load %arg3[%c0_98, %c0_99, %c0_100] : memref<1x8x48xf32, #tpu.memory_space<vmem>>, vector<1x8x48xf32>
      %162 = vector.shape_cast %161 : vector<1x8x48xf32> to vector<8x48xf32>
      %cst_101 = arith.constant dense<0.000000e+00> : vector<8xf32>
      %163 = vector.multi_reduction <add>, %162, %cst_101 [1] : vector<8x48xf32> to vector<8xf32>
      %164 = vector.shape_cast %163 : vector<8xf32> to vector<8x1xf32>
      %cst_102 = arith.constant 4.800000e+01 : f32
      %165 = vector.broadcast %cst_102 : f32 to vector<8x1xf32>
      %166 = arith.divf %164, %165 : vector<8x1xf32>
      %167 = vector.broadcast %166 : vector<8x1xf32> to vector<8x48xf32>
      %168 = arith.subf %162, %167 : vector<8x48xf32>
      %169 = arith.mulf %168, %168 : vector<8x48xf32>
      %cst_103 = arith.constant dense<0.000000e+00> : vector<8xf32>
      %170 = vector.multi_reduction <add>, %169, %cst_103 [1] : vector<8x48xf32> to vector<8xf32>
      %171 = vector.shape_cast %170 : vector<8xf32> to vector<8x1xf32>
      %cst_104 = arith.constant 4.800000e+01 : f32
      %172 = vector.broadcast %cst_104 : f32 to vector<8x1xf32>
      %173 = arith.divf %171, %172 : vector<8x1xf32>
      %174 = vector.broadcast %166 : vector<8x1xf32> to vector<8x48xf32>
      %175 = arith.subf %162, %174 : vector<8x48xf32>
      %cst_105 = arith.constant 9.99999974E-6 : f32
      %176 = vector.broadcast %cst_105 : f32 to vector<8x1xf32>
      %177 = arith.addf %173, %176 : vector<8x1xf32>
      %178 = math.rsqrt %177 : vector<8x1xf32>
      %179 = vector.broadcast %178 : vector<8x1xf32> to vector<8x48xf32>
      %180 = arith.mulf %175, %179 : vector<8x48xf32>
      %c0_106 = arith.constant 0 : index
      %c0_107 = arith.constant 0 : index
      %181 = vector.load %arg8[%c0_106, %c0_107] : memref<1x48xf32, #tpu.memory_space<vmem>>, vector<1x48xf32>
      %182 = vector.broadcast %181 : vector<1x48xf32> to vector<8x48xf32>
      %183 = arith.mulf %180, %182 : vector<8x48xf32>
      %c0_108 = arith.constant 0 : index
      %c0_109 = arith.constant 0 : index
      %184 = vector.load %arg9[%c0_108, %c0_109] : memref<1x48xf32, #tpu.memory_space<vmem>>, vector<1x48xf32>
      %185 = vector.broadcast %184 : vector<1x48xf32> to vector<8x48xf32>
      %186 = arith.addf %183, %185 : vector<8x48xf32>
      %187 = arith.truncf %186 : vector<8x48xf32> to vector<8x48xbf16>
      %c0_110 = arith.constant 0 : index
      %c0_111 = arith.constant 0 : index
      %188 = vector.load %arg12[%c0_110, %c0_111] : memref<1x48xf32, #tpu.memory_space<vmem>>, vector<1x48xf32>
      %189 = vector.broadcast %188 : vector<1x48xf32> to vector<8x48xf32>
      %190 = arith.mulf %180, %189 : vector<8x48xf32>
      %c0_112 = arith.constant 0 : index
      %c0_113 = arith.constant 0 : index
      %191 = vector.load %arg13[%c0_112, %c0_113] : memref<1x48xf32, #tpu.memory_space<vmem>>, vector<1x48xf32>
      %192 = vector.broadcast %191 : vector<1x48xf32> to vector<8x48xf32>
      %193 = arith.addf %190, %192 : vector<8x48xf32>
      %194 = arith.truncf %193 : vector<8x48xf32> to vector<8x48xbf16>
      %c0_114 = arith.constant 0 : index
      %c0_115 = arith.constant 0 : index
      %c0_116 = arith.constant 0 : index
      %195 = vector.load %arg10[%c0_114, %c0_115, %c0_116] : memref<4x48x128xbf16, #tpu.memory_space<vmem>>, vector<1x48x128xbf16>
      %196 = vector.shape_cast %195 : vector<1x48x128xbf16> to vector<48x128xbf16>
      %cst_117 = arith.constant dense<0.000000e+00> : vector<8x128xf32>
      %197 = tpu.matmul %187, %196, %cst_117 {dimension_numbers = #tpu.dot_dimension_numbers<[1], [0], [0], [1], [0, 0, 1, 1], [], []>} : vector<8x48xbf16>, vector<48x128xbf16>, vector<8x128xf32> -> vector<8x128xf32>
      %c0_118 = arith.constant 0 : index
      %c0_119 = arith.constant 0 : index
      %c0_120 = arith.constant 0 : index
      %198 = vector.load %arg11[%c0_118, %c0_119, %c0_120] : memref<4x1x128xf32, #tpu.memory_space<vmem>>, vector<1x1x128xf32>
      %199 = vector.shape_cast %198 : vector<1x1x128xf32> to vector<1x128xf32>
      %200 = vector.broadcast %199 : vector<1x128xf32> to vector<8x128xf32>
      %201 = arith.addf %197, %200 : vector<8x128xf32>
      %202 = arith.truncf %201 : vector<8x128xf32> to vector<8x128xbf16>
      %c0_121 = arith.constant 0 : index
      %c0_122 = arith.constant 0 : index
      %c0_123 = arith.constant 0 : index
      %203 = vector.load %arg19[%c0_121, %c0_122, %c0_123] : memref<4x8x128xbf16, #tpu.memory_space<vmem>>, vector<1x8x128xbf16>
      %204 = vector.shape_cast %203 : vector<1x8x128xbf16> to vector<8x128xbf16>
      %205 = vector.shape_cast %202 : vector<8x128xbf16> to vector<1x8x128xbf16>
      tpu.vector_store %arg19[%c0_121, %c0_122, %c0_123], %205 {strides = array<i32>} : memref<4x8x128xbf16, #tpu.memory_space<vmem>>, vector<1x8x128xbf16>,
      %c0_124 = arith.constant 0 : index
      %c0_125 = arith.constant 0 : index
      %c0_126 = arith.constant 0 : index
      %206 = vector.load %arg14[%c0_124, %c0_125, %c0_126] : memref<4x48x128xbf16, #tpu.memory_space<vmem>>, vector<1x48x128xbf16>
      %207 = vector.shape_cast %206 : vector<1x48x128xbf16> to vector<48x128xbf16>
      %cst_127 = arith.constant dense<0.000000e+00> : vector<8x128xf32>
      %208 = tpu.matmul %194, %207, %cst_127 {dimension_numbers = #tpu.dot_dimension_numbers<[1], [0], [0], [1], [0, 0, 1, 1], [], []>} : vector<8x48xbf16>, vector<48x128xbf16>, vector<8x128xf32> -> vector<8x128xf32>
      %c0_128 = arith.constant 0 : index
      %c0_129 = arith.constant 0 : index
      %c0_130 = arith.constant 0 : index
      %209 = vector.load %arg15[%c0_128, %c0_129, %c0_130] : memref<4x1x128xf32, #tpu.memory_space<vmem>>, vector<1x1x128xf32>
      %210 = vector.shape_cast %209 : vector<1x1x128xf32> to vector<1x128xf32>
      %211 = vector.broadcast %210 : vector<1x128xf32> to vector<8x128xf32>
      %212 = arith.addf %208, %211 : vector<8x128xf32>
      %213 = arith.truncf %212 : vector<8x128xf32> to vector<8x128xbf16>
      %c0_131 = arith.constant 0 : index
      %c0_132 = arith.constant 0 : index
      %c0_133 = arith.constant 0 : index
      %214 = vector.load %arg20[%c0_131, %c0_132, %c0_133] : memref<4x8x128xbf16, #tpu.memory_space<vmem>>, vector<1x8x128xbf16>
      %215 = vector.shape_cast %214 : vector<1x8x128xbf16> to vector<8x128xbf16>
      %216 = vector.shape_cast %213 : vector<8x128xbf16> to vector<1x8x128xbf16>
      tpu.vector_store %arg20[%c0_131, %c0_132, %c0_133], %216 {strides = array<i32>} : memref<4x8x128xbf16, #tpu.memory_space<vmem>>, vector<1x8x128xbf16>,
      %c1_134 = arith.constant 1 : index
      %c0_135 = arith.constant 0 : index
      %c0_136 = arith.constant 0 : index
      %217 = vector.load %arg10[%c1_134, %c0_135, %c0_136] : memref<4x48x128xbf16, #tpu.memory_space<vmem>>, vector<1x48x128xbf16>
      %218 = vector.shape_cast %217 : vector<1x48x128xbf16> to vector<48x128xbf16>
      %cst_137 = arith.constant dense<0.000000e+00> : vector<8x128xf32>
      %219 = tpu.matmul %187, %218, %cst_137 {dimension_numbers = #tpu.dot_dimension_numbers<[1], [0], [0], [1], [0, 0, 1, 1], [], []>} : vector<8x48xbf16>, vector<48x128xbf16>, vector<8x128xf32> -> vector<8x128xf32>
      %c1_138 = arith.constant 1 : index
      %c0_139 = arith.constant 0 : index
      %c0_140 = arith.constant 0 : index
      %220 = vector.load %arg11[%c1_138, %c0_139, %c0_140] : memref<4x1x128xf32, #tpu.memory_space<vmem>>, vector<1x1x128xf32>
      %221 = vector.shape_cast %220 : vector<1x1x128xf32> to vector<1x128xf32>
      %222 = vector.broadcast %221 : vector<1x128xf32> to vector<8x128xf32>
      %223 = arith.addf %219, %222 : vector<8x128xf32>
      %224 = arith.truncf %223 : vector<8x128xf32> to vector<8x128xbf16>
      %c1_141 = arith.constant 1 : index
      %c0_142 = arith.constant 0 : index
      %c0_143 = arith.constant 0 : index
      %225 = vector.load %arg19[%c1_141, %c0_142, %c0_143] : memref<4x8x128xbf16, #tpu.memory_space<vmem>>, vector<1x8x128xbf16>
      %226 = vector.shape_cast %225 : vector<1x8x128xbf16> to vector<8x128xbf16>
      %227 = vector.shape_cast %224 : vector<8x128xbf16> to vector<1x8x128xbf16>
      tpu.vector_store %arg19[%c1_141, %c0_142, %c0_143], %227 {strides = array<i32>} : memref<4x8x128xbf16, #tpu.memory_space<vmem>>, vector<1x8x128xbf16>,
      %c1_144 = arith.constant 1 : index
      %c0_145 = arith.constant 0 : index
      %c0_146 = arith.constant 0 : index
      %228 = vector.load %arg14[%c1_144, %c0_145, %c0_146] : memref<4x48x128xbf16, #tpu.memory_space<vmem>>, vector<1x48x128xbf16>
      %229 = vector.shape_cast %228 : vector<1x48x128xbf16> to vector<48x128xbf16>
      %cst_147 = arith.constant dense<0.000000e+00> : vector<8x128xf32>
      %230 = tpu.matmul %194, %229, %cst_147 {dimension_numbers = #tpu.dot_dimension_numbers<[1], [0], [0], [1], [0, 0, 1, 1], [], []>} : vector<8x48xbf16>, vector<48x128xbf16>, vector<8x128xf32> -> vector<8x128xf32>
      %c1_148 = arith.constant 1 : index
      %c0_149 = arith.constant 0 : index
      %c0_150 = arith.constant 0 : index
      %231 = vector.load %arg15[%c1_148, %c0_149, %c0_150] : memref<4x1x128xf32, #tpu.memory_space<vmem>>, vector<1x1x128xf32>
      %232 = vector.shape_cast %231 : vector<1x1x128xf32> to vector<1x128xf32>
      %233 = vector.broadcast %232 : vector<1x128xf32> to vector<8x128xf32>
      %234 = arith.addf %230, %233 : vector<8x128xf32>
      %235 = arith.truncf %234 : vector<8x128xf32> to vector<8x128xbf16>
      %c1_151 = arith.constant 1 : index
      %c0_152 = arith.constant 0 : index
      %c0_153 = arith.constant 0 : index
      %236 = vector.load %arg20[%c1_151, %c0_152, %c0_153] : memref<4x8x128xbf16, #tpu.memory_space<vmem>>, vector<1x8x128xbf16>
      %237 = vector.shape_cast %236 : vector<1x8x128xbf16> to vector<8x128xbf16>
      %238 = vector.shape_cast %235 : vector<8x128xbf16> to vector<1x8x128xbf16>
      tpu.vector_store %arg20[%c1_151, %c0_152, %c0_153], %238 {strides = array<i32>} : memref<4x8x128xbf16, #tpu.memory_space<vmem>>, vector<1x8x128xbf16>,
      %c2_154 = arith.constant 2 : index
      %c0_155 = arith.constant 0 : index
      %c0_156 = arith.constant 0 : index
      %239 = vector.load %arg10[%c2_154, %c0_155, %c0_156] : memref<4x48x128xbf16, #tpu.memory_space<vmem>>, vector<1x48x128xbf16>
      %240 = vector.shape_cast %239 : vector<1x48x128xbf16> to vector<48x128xbf16>
      %cst_157 = arith.constant dense<0.000000e+00> : vector<8x128xf32>
      %241 = tpu.matmul %187, %240, %cst_157 {dimension_numbers = #tpu.dot_dimension_numbers<[1], [0], [0], [1], [0, 0, 1, 1], [], []>} : vector<8x48xbf16>, vector<48x128xbf16>, vector<8x128xf32> -> vector<8x128xf32>
      %c2_158 = arith.constant 2 : index
      %c0_159 = arith.constant 0 : index
      %c0_160 = arith.constant 0 : index
      %242 = vector.load %arg11[%c2_158, %c0_159, %c0_160] : memref<4x1x128xf32, #tpu.memory_space<vmem>>, vector<1x1x128xf32>
      %243 = vector.shape_cast %242 : vector<1x1x128xf32> to vector<1x128xf32>
      %244 = vector.broadcast %243 : vector<1x128xf32> to vector<8x128xf32>
      %245 = arith.addf %241, %244 : vector<8x128xf32>
      %246 = arith.truncf %245 : vector<8x128xf32> to vector<8x128xbf16>
      %c2_161 = arith.constant 2 : index
      %c0_162 = arith.constant 0 : index
      %c0_163 = arith.constant 0 : index
      %247 = vector.load %arg19[%c2_161, %c0_162, %c0_163] : memref<4x8x128xbf16, #tpu.memory_space<vmem>>, vector<1x8x128xbf16>
      %248 = vector.shape_cast %247 : vector<1x8x128xbf16> to vector<8x128xbf16>
      %249 = vector.shape_cast %246 : vector<8x128xbf16> to vector<1x8x128xbf16>
      tpu.vector_store %arg19[%c2_161, %c0_162, %c0_163], %249 {strides = array<i32>} : memref<4x8x128xbf16, #tpu.memory_space<vmem>>, vector<1x8x128xbf16>,
      %c2_164 = arith.constant 2 : index
      %c0_165 = arith.constant 0 : index
      %c0_166 = arith.constant 0 : index
      %250 = vector.load %arg14[%c2_164, %c0_165, %c0_166] : memref<4x48x128xbf16, #tpu.memory_space<vmem>>, vector<1x48x128xbf16>
      %251 = vector.shape_cast %250 : vector<1x48x128xbf16> to vector<48x128xbf16>
      %cst_167 = arith.constant dense<0.000000e+00> : vector<8x128xf32>
      %252 = tpu.matmul %194, %251, %cst_167 {dimension_numbers = #tpu.dot_dimension_numbers<[1], [0], [0], [1], [0, 0, 1, 1], [], []>} : vector<8x48xbf16>, vector<48x128xbf16>, vector<8x128xf32> -> vector<8x128xf32>
      %c2_168 = arith.constant 2 : index
      %c0_169 = arith.constant 0 : index
      %c0_170 = arith.constant 0 : index
      %253 = vector.load %arg15[%c2_168, %c0_169, %c0_170] : memref<4x1x128xf32, #tpu.memory_space<vmem>>, vector<1x1x128xf32>
      %254 = vector.shape_cast %253 : vector<1x1x128xf32> to vector<1x128xf32>
      %255 = vector.broadcast %254 : vector<1x128xf32> to vector<8x128xf32>
      %256 = arith.addf %252, %255 : vector<8x128xf32>
      %257 = arith.truncf %256 : vector<8x128xf32> to vector<8x128xbf16>
      %c2_171 = arith.constant 2 : index
      %c0_172 = arith.constant 0 : index
      %c0_173 = arith.constant 0 : index
      %258 = vector.load %arg20[%c2_171, %c0_172, %c0_173] : memref<4x8x128xbf16, #tpu.memory_space<vmem>>, vector<1x8x128xbf16>
      %259 = vector.shape_cast %258 : vector<1x8x128xbf16> to vector<8x128xbf16>
      %260 = vector.shape_cast %257 : vector<8x128xbf16> to vector<1x8x128xbf16>
      tpu.vector_store %arg20[%c2_171, %c0_172, %c0_173], %260 {strides = array<i32>} : memref<4x8x128xbf16, #tpu.memory_space<vmem>>, vector<1x8x128xbf16>,
      %c3_174 = arith.constant 3 : index
      %c0_175 = arith.constant 0 : index
      %c0_176 = arith.constant 0 : index
      %261 = vector.load %arg10[%c3_174, %c0_175, %c0_176] : memref<4x48x128xbf16, #tpu.memory_space<vmem>>, vector<1x48x128xbf16>
      %262 = vector.shape_cast %261 : vector<1x48x128xbf16> to vector<48x128xbf16>
      %cst_177 = arith.constant dense<0.000000e+00> : vector<8x128xf32>
      %263 = tpu.matmul %187, %262, %cst_177 {dimension_numbers = #tpu.dot_dimension_numbers<[1], [0], [0], [1], [0, 0, 1, 1], [], []>} : vector<8x48xbf16>, vector<48x128xbf16>, vector<8x128xf32> -> vector<8x128xf32>
      %c3_178 = arith.constant 3 : index
      %c0_179 = arith.constant 0 : index
      %c0_180 = arith.constant 0 : index
      %264 = vector.load %arg11[%c3_178, %c0_179, %c0_180] : memref<4x1x128xf32, #tpu.memory_space<vmem>>, vector<1x1x128xf32>
      %265 = vector.shape_cast %264 : vector<1x1x128xf32> to vector<1x128xf32>
      %266 = vector.broadcast %265 : vector<1x128xf32> to vector<8x128xf32>
      %267 = arith.addf %263, %266 : vector<8x128xf32>
      %268 = arith.truncf %267 : vector<8x128xf32> to vector<8x128xbf16>
      %c3_181 = arith.constant 3 : index
      %c0_182 = arith.constant 0 : index
      %c0_183 = arith.constant 0 : index
      %269 = vector.load %arg19[%c3_181, %c0_182, %c0_183] : memref<4x8x128xbf16, #tpu.memory_space<vmem>>, vector<1x8x128xbf16>
      %270 = vector.shape_cast %269 : vector<1x8x128xbf16> to vector<8x128xbf16>
      %271 = vector.shape_cast %268 : vector<8x128xbf16> to vector<1x8x128xbf16>
      tpu.vector_store %arg19[%c3_181, %c0_182, %c0_183], %271 {strides = array<i32>} : memref<4x8x128xbf16, #tpu.memory_space<vmem>>, vector<1x8x128xbf16>,
      %c3_184 = arith.constant 3 : index
      %c0_185 = arith.constant 0 : index
      %c0_186 = arith.constant 0 : index
      %272 = vector.load %arg14[%c3_184, %c0_185, %c0_186] : memref<4x48x128xbf16, #tpu.memory_space<vmem>>, vector<1x48x128xbf16>
      %273 = vector.shape_cast %272 : vector<1x48x128xbf16> to vector<48x128xbf16>
      %cst_187 = arith.constant dense<0.000000e+00> : vector<8x128xf32>
      %274 = tpu.matmul %194, %273, %cst_187 {dimension_numbers = #tpu.dot_dimension_numbers<[1], [0], [0], [1], [0, 0, 1, 1], [], []>} : vector<8x48xbf16>, vector<48x128xbf16>, vector<8x128xf32> -> vector<8x128xf32>
      %c3_188 = arith.constant 3 : index
      %c0_189 = arith.constant 0 : index
      %c0_190 = arith.constant 0 : index
      %275 = vector.load %arg15[%c3_188, %c0_189, %c0_190] : memref<4x1x128xf32, #tpu.memory_space<vmem>>, vector<1x1x128xf32>
      %276 = vector.shape_cast %275 : vector<1x1x128xf32> to vector<1x128xf32>
      %277 = vector.broadcast %276 : vector<1x128xf32> to vector<8x128xf32>
      %278 = arith.addf %274, %277 : vector<8x128xf32>
      %279 = arith.truncf %278 : vector<8x128xf32> to vector<8x128xbf16>
      %c3_191 = arith.constant 3 : index
      %c0_192 = arith.constant 0 : index
      %c0_193 = arith.constant 0 : index
      %280 = vector.load %arg20[%c3_191, %c0_192, %c0_193] : memref<4x8x128xbf16, #tpu.memory_space<vmem>>, vector<1x8x128xbf16>
      %281 = vector.shape_cast %280 : vector<1x8x128xbf16> to vector<8x128xbf16>
      %282 = vector.shape_cast %279 : vector<8x128xbf16> to vector<1x8x128xbf16>
      tpu.vector_store %arg20[%c3_191, %c0_192, %c0_193], %282 {strides = array<i32>} : memref<4x8x128xbf16, #tpu.memory_space<vmem>>, vector<1x8x128xbf16>,
    } else {
    }
    %c0 = arith.constant 0 : index
    %c0_1 = arith.constant 0 : index
    %c0_2 = arith.constant 0 : index
    %3 = vector.load %arg2[%c0, %c0_1, %c0_2] : memref<1x8x32xf32, #tpu.memory_space<vmem>>, vector<1x8x32xf32>
    %4 = vector.shape_cast %3 : vector<1x8x32xf32> to vector<8x32xf32>
    %cst = arith.constant dense<0.000000e+00> : vector<8xf32>
    %5 = vector.multi_reduction <add>, %4, %cst [1] : vector<8x32xf32> to vector<8xf32>
    %6 = vector.shape_cast %5 : vector<8xf32> to vector<8x1xf32>
    %cst_3 = arith.constant 3.200000e+01 : f32
    %7 = vector.broadcast %cst_3 : f32 to vector<8x1xf32>
    %8 = arith.divf %6, %7 : vector<8x1xf32>
    %9 = vector.broadcast %8 : vector<8x1xf32> to vector<8x32xf32>
    %10 = arith.subf %4, %9 : vector<8x32xf32>
    %11 = arith.mulf %10, %10 : vector<8x32xf32>
    %cst_4 = arith.constant dense<0.000000e+00> : vector<8xf32>
    %12 = vector.multi_reduction <add>, %11, %cst_4 [1] : vector<8x32xf32> to vector<8xf32>
    %13 = vector.shape_cast %12 : vector<8xf32> to vector<8x1xf32>
    %cst_5 = arith.constant 3.200000e+01 : f32
    %14 = vector.broadcast %cst_5 : f32 to vector<8x1xf32>
    %15 = arith.divf %13, %14 : vector<8x1xf32>
    %16 = vector.broadcast %8 : vector<8x1xf32> to vector<8x32xf32>
    %17 = arith.subf %4, %16 : vector<8x32xf32>
    %cst_6 = arith.constant 9.99999974E-6 : f32
    %18 = vector.broadcast %cst_6 : f32 to vector<8x1xf32>
    %19 = arith.addf %15, %18 : vector<8x1xf32>
    %20 = math.rsqrt %19 : vector<8x1xf32>
    %21 = vector.broadcast %20 : vector<8x1xf32> to vector<8x32xf32>
    %22 = arith.mulf %17, %21 : vector<8x32xf32>
    %c0_7 = arith.constant 0 : index
    %c0_8 = arith.constant 0 : index
    %23 = vector.load %arg4[%c0_7, %c0_8] : memref<1x32xf32, #tpu.memory_space<vmem>>, vector<1x32xf32>
    %24 = vector.broadcast %23 : vector<1x32xf32> to vector<8x32xf32>
    %25 = arith.mulf %22, %24 : vector<8x32xf32>
    %c0_9 = arith.constant 0 : index
    %c0_10 = arith.constant 0 : index
    %26 = vector.load %arg5[%c0_9, %c0_10] : memref<1x32xf32, #tpu.memory_space<vmem>>, vector<1x32xf32>
    %27 = vector.broadcast %26 : vector<1x32xf32> to vector<8x32xf32>
    %28 = arith.addf %25, %27 : vector<8x32xf32>
    %29 = arith.truncf %28 : vector<8x32xf32> to vector<8x32xbf16>
    %cst_11 = arith.constant 0.000000e+00 : f32
    %30 = vector.broadcast %cst_11 : f32 to vector<8x128xf32>
    %c0_12 = arith.constant 0 : index
    %c0_13 = arith.constant 0 : index
    %c0_14 = arith.constant 0 : index
    %31 = vector.load %arg6[%c0_12, %c0_13, %c0_14] : memref<4x32x128xbf16, #tpu.memory_space<vmem>>, vector<1x32x128xbf16>
    %32 = vector.shape_cast %31 : vector<1x32x128xbf16> to vector<32x128xbf16>
    %cst_15 = arith.constant dense<0.000000e+00> : vector<8x128xf32>
    %33 = tpu.matmul %29, %32, %cst_15 {dimension_numbers = #tpu.dot_dimension_numbers<[1], [0], [0], [1], [0, 0, 1, 1], [], []>} : vector<8x32xbf16>, vector<32x128xbf16>, vector<8x128xf32> -> vector<8x128xf32>
    %c0_16 = arith.constant 0 : index
    %c0_17 = arith.constant 0 : index
    %c0_18 = arith.constant 0 : index
    %34 = vector.load %arg7[%c0_16, %c0_17, %c0_18] : memref<4x1x128xf32, #tpu.memory_space<vmem>>, vector<1x1x128xf32>
    %35 = vector.shape_cast %34 : vector<1x1x128xf32> to vector<1x128xf32>
    %36 = vector.broadcast %35 : vector<1x128xf32> to vector<8x128xf32>
    %37 = arith.addf %33, %36 : vector<8x128xf32>
    %38 = arith.truncf %37 : vector<8x128xf32> to vector<8x128xbf16>
    %c0_19 = arith.constant 0 : index
    %c0_20 = arith.constant 0 : index
    %c0_21 = arith.constant 0 : index
    %39 = vector.load %arg19[%c0_19, %c0_20, %c0_21] : memref<4x8x128xbf16, #tpu.memory_space<vmem>>, vector<1x8x128xbf16>
    %40 = vector.shape_cast %39 : vector<1x8x128xbf16> to vector<8x128xbf16>
    %cst_22 = arith.constant dense<0.000000e+00> : vector<8x8xf32>
    %41 = tpu.matmul %38, %40, %cst_22 {dimension_numbers = #tpu.dot_dimension_numbers<[1], [1], [0], [0], [0, 0, 1, 0], [], []>} : vector<8x128xbf16>, vector<8x128xbf16>, vector<8x8xf32> -> vector<8x8xf32>
    %cst_23 = arith.constant dense<0xFF800000> : vector<8xf32>
    %42 = vector.multi_reduction <maximumf>, %41, %cst_23 [1] : vector<8x8xf32> to vector<8xf32>
    %43 = vector.shape_cast %42 : vector<8xf32> to vector<8x1xf32>
    %44 = vector.broadcast %43 : vector<8x1xf32> to vector<8x8xf32>
    %45 = arith.subf %41, %44 : vector<8x8xf32>
    %46 = arith.truncf %45 : vector<8x8xf32> to vector<8x8xbf16>
    %47 = math.exp %46 : vector<8x8xbf16>
    %48 = arith.extf %47 : vector<8x8xbf16> to vector<8x8xf32>
    %cst_24 = arith.constant dense<0.000000e+00> : vector<8xf32>
    %49 = vector.multi_reduction <add>, %48, %cst_24 [1] : vector<8x8xf32> to vector<8xf32>
    %50 = vector.shape_cast %49 : vector<8xf32> to vector<8x1xf32>
    %c0_25 = arith.constant 0 : index
    %c0_26 = arith.constant 0 : index
    %c0_27 = arith.constant 0 : index
    %51 = vector.load %arg20[%c0_25, %c0_26, %c0_27] : memref<4x8x128xbf16, #tpu.memory_space<vmem>>, vector<1x8x128xbf16>
    %52 = vector.shape_cast %51 : vector<1x8x128xbf16> to vector<8x128xbf16>
    %cst_28 = arith.constant dense<0.000000e+00> : vector<8x128xf32>
    %53 = tpu.matmul %47, %52, %cst_28 {dimension_numbers = #tpu.dot_dimension_numbers<[1], [0], [0], [1], [0, 0, 1, 1], [], []>} : vector<8x8xbf16>, vector<8x128xbf16>, vector<8x128xf32> -> vector<8x128xf32>
    %54 = tpu.reciprocal %50 {approx = true} : vector<8x1xf32> -> vector<8x1xf32>
    %55 = vector.broadcast %54 : vector<8x1xf32> to vector<8x128xf32>
    %56 = arith.mulf %53, %55 : vector<8x128xf32>
    %57 = arith.truncf %56 : vector<8x128xf32> to vector<8x128xbf16>
    %c0_29 = arith.constant 0 : index
    %c0_30 = arith.constant 0 : index
    %c0_31 = arith.constant 0 : index
    %58 = vector.load %arg16[%c0_29, %c0_30, %c0_31] : memref<4x128x128xbf16, #tpu.memory_space<vmem>>, vector<1x128x128xbf16>
    %59 = vector.shape_cast %58 : vector<1x128x128xbf16> to vector<128x128xbf16>
    %cst_32 = arith.constant dense<0.000000e+00> : vector<8x128xf32>
    %60 = tpu.matmul %57, %59, %cst_32 {dimension_numbers = #tpu.dot_dimension_numbers<[1], [0], [0], [1], [0, 0, 1, 1], [], []>} : vector<8x128xbf16>, vector<128x128xbf16>, vector<8x128xf32> -> vector<8x128xf32>
    %61 = arith.addf %30, %60 : vector<8x128xf32>
    %c1 = arith.constant 1 : index
    %c0_33 = arith.constant 0 : index
    %c0_34 = arith.constant 0 : index
    %62 = vector.load %arg6[%c1, %c0_33, %c0_34] : memref<4x32x128xbf16, #tpu.memory_space<vmem>>, vector<1x32x128xbf16>
    %63 = vector.shape_cast %62 : vector<1x32x128xbf16> to vector<32x128xbf16>
    %cst_35 = arith.constant dense<0.000000e+00> : vector<8x128xf32>
    %64 = tpu.matmul %29, %63, %cst_35 {dimension_numbers = #tpu.dot_dimension_numbers<[1], [0], [0], [1], [0, 0, 1, 1], [], []>} : vector<8x32xbf16>, vector<32x128xbf16>, vector<8x128xf32> -> vector<8x128xf32>
    %c1_36 = arith.constant 1 : index
    %c0_37 = arith.constant 0 : index
    %c0_38 = arith.constant 0 : index
    %65 = vector.load %arg7[%c1_36, %c0_37, %c0_38] : memref<4x1x128xf32, #tpu.memory_space<vmem>>, vector<1x1x128xf32>
    %66 = vector.shape_cast %65 : vector<1x1x128xf32> to vector<1x128xf32>
    %67 = vector.broadcast %66 : vector<1x128xf32> to vector<8x128xf32>
    %68 = arith.addf %64, %67 : vector<8x128xf32>
    %69 = arith.truncf %68 : vector<8x128xf32> to vector<8x128xbf16>
    %c1_39 = arith.constant 1 : index
    %c0_40 = arith.constant 0 : index
    %c0_41 = arith.constant 0 : index
    %70 = vector.load %arg19[%c1_39, %c0_40, %c0_41] : memref<4x8x128xbf16, #tpu.memory_space<vmem>>, vector<1x8x128xbf16>
    %71 = vector.shape_cast %70 : vector<1x8x128xbf16> to vector<8x128xbf16>
    %cst_42 = arith.constant dense<0.000000e+00> : vector<8x8xf32>
    %72 = tpu.matmul %69, %71, %cst_42 {dimension_numbers = #tpu.dot_dimension_numbers<[1], [1], [0], [0], [0, 0, 1, 0], [], []>} : vector<8x128xbf16>, vector<8x128xbf16>, vector<8x8xf32> -> vector<8x8xf32>
    %cst_43 = arith.constant dense<0xFF800000> : vector<8xf32>
    %73 = vector.multi_reduction <maximumf>, %72, %cst_43 [1] : vector<8x8xf32> to vector<8xf32>
    %74 = vector.shape_cast %73 : vector<8xf32> to vector<8x1xf32>
    %75 = vector.broadcast %74 : vector<8x1xf32> to vector<8x8xf32>
    %76 = arith.subf %72, %75 : vector<8x8xf32>
    %77 = arith.truncf %76 : vector<8x8xf32> to vector<8x8xbf16>
    %78 = math.exp %77 : vector<8x8xbf16>
    %79 = arith.extf %78 : vector<8x8xbf16> to vector<8x8xf32>
    %cst_44 = arith.constant dense<0.000000e+00> : vector<8xf32>
    %80 = vector.multi_reduction <add>, %79, %cst_44 [1] : vector<8x8xf32> to vector<8xf32>
    %81 = vector.shape_cast %80 : vector<8xf32> to vector<8x1xf32>
    %c1_45 = arith.constant 1 : index
    %c0_46 = arith.constant 0 : index
    %c0_47 = arith.constant 0 : index
    %82 = vector.load %arg20[%c1_45, %c0_46, %c0_47] : memref<4x8x128xbf16, #tpu.memory_space<vmem>>, vector<1x8x128xbf16>
    %83 = vector.shape_cast %82 : vector<1x8x128xbf16> to vector<8x128xbf16>
    %cst_48 = arith.constant dense<0.000000e+00> : vector<8x128xf32>
    %84 = tpu.matmul %78, %83, %cst_48 {dimension_numbers = #tpu.dot_dimension_numbers<[1], [0], [0], [1], [0, 0, 1, 1], [], []>} : vector<8x8xbf16>, vector<8x128xbf16>, vector<8x128xf32> -> vector<8x128xf32>
    %85 = tpu.reciprocal %81 {approx = true} : vector<8x1xf32> -> vector<8x1xf32>
    %86 = vector.broadcast %85 : vector<8x1xf32> to vector<8x128xf32>
    %87 = arith.mulf %84, %86 : vector<8x128xf32>
    %88 = arith.truncf %87 : vector<8x128xf32> to vector<8x128xbf16>
    %c1_49 = arith.constant 1 : index
    %c0_50 = arith.constant 0 : index
    %c0_51 = arith.constant 0 : index
    %89 = vector.load %arg16[%c1_49, %c0_50, %c0_51] : memref<4x128x128xbf16, #tpu.memory_space<vmem>>, vector<1x128x128xbf16>
    %90 = vector.shape_cast %89 : vector<1x128x128xbf16> to vector<128x128xbf16>
    %cst_52 = arith.constant dense<0.000000e+00> : vector<8x128xf32>
    %91 = tpu.matmul %88, %90, %cst_52 {dimension_numbers = #tpu.dot_dimension_numbers<[1], [0], [0], [1], [0, 0, 1, 1], [], []>} : vector<8x128xbf16>, vector<128x128xbf16>, vector<8x128xf32> -> vector<8x128xf32>
    %92 = arith.addf %61, %91 : vector<8x128xf32>
    %c2 = arith.constant 2 : index
    %c0_53 = arith.constant 0 : index
    %c0_54 = arith.constant 0 : index
    %93 = vector.load %arg6[%c2, %c0_53, %c0_54] : memref<4x32x128xbf16, #tpu.memory_space<vmem>>, vector<1x32x128xbf16>
    %94 = vector.shape_cast %93 : vector<1x32x128xbf16> to vector<32x128xbf16>
    %cst_55 = arith.constant dense<0.000000e+00> : vector<8x128xf32>
    %95 = tpu.matmul %29, %94, %cst_55 {dimension_numbers = #tpu.dot_dimension_numbers<[1], [0], [0], [1], [0, 0, 1, 1], [], []>} : vector<8x32xbf16>, vector<32x128xbf16>, vector<8x128xf32> -> vector<8x128xf32>
    %c2_56 = arith.constant 2 : index
    %c0_57 = arith.constant 0 : index
    %c0_58 = arith.constant 0 : index
    %96 = vector.load %arg7[%c2_56, %c0_57, %c0_58] : memref<4x1x128xf32, #tpu.memory_space<vmem>>, vector<1x1x128xf32>
    %97 = vector.shape_cast %96 : vector<1x1x128xf32> to vector<1x128xf32>
    %98 = vector.broadcast %97 : vector<1x128xf32> to vector<8x128xf32>
    %99 = arith.addf %95, %98 : vector<8x128xf32>
    %100 = arith.truncf %99 : vector<8x128xf32> to vector<8x128xbf16>
    %c2_59 = arith.constant 2 : index
    %c0_60 = arith.constant 0 : index
    %c0_61 = arith.constant 0 : index
    %101 = vector.load %arg19[%c2_59, %c0_60, %c0_61] : memref<4x8x128xbf16, #tpu.memory_space<vmem>>, vector<1x8x128xbf16>
    %102 = vector.shape_cast %101 : vector<1x8x128xbf16> to vector<8x128xbf16>
    %cst_62 = arith.constant dense<0.000000e+00> : vector<8x8xf32>
    %103 = tpu.matmul %100, %102, %cst_62 {dimension_numbers = #tpu.dot_dimension_numbers<[1], [1], [0], [0], [0, 0, 1, 0], [], []>} : vector<8x128xbf16>, vector<8x128xbf16>, vector<8x8xf32> -> vector<8x8xf32>
    %cst_63 = arith.constant dense<0xFF800000> : vector<8xf32>
    %104 = vector.multi_reduction <maximumf>, %103, %cst_63 [1] : vector<8x8xf32> to vector<8xf32>
    %105 = vector.shape_cast %104 : vector<8xf32> to vector<8x1xf32>
    %106 = vector.broadcast %105 : vector<8x1xf32> to vector<8x8xf32>
    %107 = arith.subf %103, %106 : vector<8x8xf32>
    %108 = arith.truncf %107 : vector<8x8xf32> to vector<8x8xbf16>
    %109 = math.exp %108 : vector<8x8xbf16>
    %110 = arith.extf %109 : vector<8x8xbf16> to vector<8x8xf32>
    %cst_64 = arith.constant dense<0.000000e+00> : vector<8xf32>
    %111 = vector.multi_reduction <add>, %110, %cst_64 [1] : vector<8x8xf32> to vector<8xf32>
    %112 = vector.shape_cast %111 : vector<8xf32> to vector<8x1xf32>
    %c2_65 = arith.constant 2 : index
    %c0_66 = arith.constant 0 : index
    %c0_67 = arith.constant 0 : index
    %113 = vector.load %arg20[%c2_65, %c0_66, %c0_67] : memref<4x8x128xbf16, #tpu.memory_space<vmem>>, vector<1x8x128xbf16>
    %114 = vector.shape_cast %113 : vector<1x8x128xbf16> to vector<8x128xbf16>
    %cst_68 = arith.constant dense<0.000000e+00> : vector<8x128xf32>
    %115 = tpu.matmul %109, %114, %cst_68 {dimension_numbers = #tpu.dot_dimension_numbers<[1], [0], [0], [1], [0, 0, 1, 1], [], []>} : vector<8x8xbf16>, vector<8x128xbf16>, vector<8x128xf32> -> vector<8x128xf32>
    %116 = tpu.reciprocal %112 {approx = true} : vector<8x1xf32> -> vector<8x1xf32>
    %117 = vector.broadcast %116 : vector<8x1xf32> to vector<8x128xf32>
    %118 = arith.mulf %115, %117 : vector<8x128xf32>
    %119 = arith.truncf %118 : vector<8x128xf32> to vector<8x128xbf16>
    %c2_69 = arith.constant 2 : index
    %c0_70 = arith.constant 0 : index
    %c0_71 = arith.constant 0 : index
    %120 = vector.load %arg16[%c2_69, %c0_70, %c0_71] : memref<4x128x128xbf16, #tpu.memory_space<vmem>>, vector<1x128x128xbf16>
    %121 = vector.shape_cast %120 : vector<1x128x128xbf16> to vector<128x128xbf16>
    %cst_72 = arith.constant dense<0.000000e+00> : vector<8x128xf32>
    %122 = tpu.matmul %119, %121, %cst_72 {dimension_numbers = #tpu.dot_dimension_numbers<[1], [0], [0], [1], [0, 0, 1, 1], [], []>} : vector<8x128xbf16>, vector<128x128xbf16>, vector<8x128xf32> -> vector<8x128xf32>
    %123 = arith.addf %92, %122 : vector<8x128xf32>
    %c3 = arith.constant 3 : index
    %c0_73 = arith.constant 0 : index
    %c0_74 = arith.constant 0 : index
    %124 = vector.load %arg6[%c3, %c0_73, %c0_74] : memref<4x32x128xbf16, #tpu.memory_space<vmem>>, vector<1x32x128xbf16>
    %125 = vector.shape_cast %124 : vector<1x32x128xbf16> to vector<32x128xbf16>
    %cst_75 = arith.constant dense<0.000000e+00> : vector<8x128xf32>
    %126 = tpu.matmul %29, %125, %cst_75 {dimension_numbers = #tpu.dot_dimension_numbers<[1], [0], [0], [1], [0, 0, 1, 1], [], []>} : vector<8x32xbf16>, vector<32x128xbf16>, vector<8x128xf32> -> vector<8x128xf32>
    %c3_76 = arith.constant 3 : index
    %c0_77 = arith.constant 0 : index
    %c0_78 = arith.constant 0 : index
    %127 = vector.load %arg7[%c3_76, %c0_77, %c0_78] : memref<4x1x128xf32, #tpu.memory_space<vmem>>, vector<1x1x128xf32>
    %128 = vector.shape_cast %127 : vector<1x1x128xf32> to vector<1x128xf32>
    %129 = vector.broadcast %128 : vector<1x128xf32> to vector<8x128xf32>
    %130 = arith.addf %126, %129 : vector<8x128xf32>
    %131 = arith.truncf %130 : vector<8x128xf32> to vector<8x128xbf16>
    %c3_79 = arith.constant 3 : index
    %c0_80 = arith.constant 0 : index
    %c0_81 = arith.constant 0 : index
    %132 = vector.load %arg19[%c3_79, %c0_80, %c0_81] : memref<4x8x128xbf16, #tpu.memory_space<vmem>>, vector<1x8x128xbf16>
    %133 = vector.shape_cast %132 : vector<1x8x128xbf16> to vector<8x128xbf16>
    %cst_82 = arith.constant dense<0.000000e+00> : vector<8x8xf32>
    %134 = tpu.matmul %131, %133, %cst_82 {dimension_numbers = #tpu.dot_dimension_numbers<[1], [1], [0], [0], [0, 0, 1, 0], [], []>} : vector<8x128xbf16>, vector<8x128xbf16>, vector<8x8xf32> -> vector<8x8xf32>
    %cst_83 = arith.constant dense<0xFF800000> : vector<8xf32>
    %135 = vector.multi_reduction <maximumf>, %134, %cst_83 [1] : vector<8x8xf32> to vector<8xf32>
    %136 = vector.shape_cast %135 : vector<8xf32> to vector<8x1xf32>
    %137 = vector.broadcast %136 : vector<8x1xf32> to vector<8x8xf32>
    %138 = arith.subf %134, %137 : vector<8x8xf32>
    %139 = arith.truncf %138 : vector<8x8xf32> to vector<8x8xbf16>
    %140 = math.exp %139 : vector<8x8xbf16>
    %141 = arith.extf %140 : vector<8x8xbf16> to vector<8x8xf32>
    %cst_84 = arith.constant dense<0.000000e+00> : vector<8xf32>
    %142 = vector.multi_reduction <add>, %141, %cst_84 [1] : vector<8x8xf32> to vector<8xf32>
    %143 = vector.shape_cast %142 : vector<8xf32> to vector<8x1xf32>
    %c3_85 = arith.constant 3 : index
    %c0_86 = arith.constant 0 : index
    %c0_87 = arith.constant 0 : index
    %144 = vector.load %arg20[%c3_85, %c0_86, %c0_87] : memref<4x8x128xbf16, #tpu.memory_space<vmem>>, vector<1x8x128xbf16>
    %145 = vector.shape_cast %144 : vector<1x8x128xbf16> to vector<8x128xbf16>
    %cst_88 = arith.constant dense<0.000000e+00> : vector<8x128xf32>
    %146 = tpu.matmul %140, %145, %cst_88 {dimension_numbers = #tpu.dot_dimension_numbers<[1], [0], [0], [1], [0, 0, 1, 1], [], []>} : vector<8x8xbf16>, vector<8x128xbf16>, vector<8x128xf32> -> vector<8x128xf32>
    %147 = tpu.reciprocal %143 {approx = true} : vector<8x1xf32> -> vector<8x1xf32>
    %148 = vector.broadcast %147 : vector<8x1xf32> to vector<8x128xf32>
    %149 = arith.mulf %146, %148 : vector<8x128xf32>
    %150 = arith.truncf %149 : vector<8x128xf32> to vector<8x128xbf16>
    %c3_89 = arith.constant 3 : index
    %c0_90 = arith.constant 0 : index
    %c0_91 = arith.constant 0 : index
    %151 = vector.load %arg16[%c3_89, %c0_90, %c0_91] : memref<4x128x128xbf16, #tpu.memory_space<vmem>>, vector<1x128x128xbf16>
    %152 = vector.shape_cast %151 : vector<1x128x128xbf16> to vector<128x128xbf16>
    %cst_92 = arith.constant dense<0.000000e+00> : vector<8x128xf32>
    %153 = tpu.matmul %150, %152, %cst_92 {dimension_numbers = #tpu.dot_dimension_numbers<[1], [0], [0], [1], [0, 0, 1, 1], [], []>} : vector<8x128xbf16>, vector<128x128xbf16>, vector<8x128xf32> -> vector<8x128xf32>
    %154 = arith.addf %123, %153 : vector<8x128xf32>
    %c0_93 = arith.constant 0 : index
    %c0_94 = arith.constant 0 : index
    %155 = vector.load %arg17[%c0_93, %c0_94] : memref<1x128xf32, #tpu.memory_space<vmem>>, vector<1x128xf32>
    %156 = vector.broadcast %155 : vector<1x128xf32> to vector<8x128xf32>
    %157 = arith.addf %154, %156 : vector<8x128xf32>
    %c0_95 = arith.constant 0 : index
    %c0_96 = arith.constant 0 : index
    %c0_97 = arith.constant 0 : index
    %158 = vector.load %arg18[%c0_95, %c0_96, %c0_97] : memref<1x8x128xf32, #tpu.memory_space<vmem>>, vector<1x8x128xf32>
    %159 = vector.shape_cast %158 : vector<1x8x128xf32> to vector<8x128xf32>
    %160 = vector.shape_cast %157 : vector<8x128xf32> to vector<1x8x128xf32>
    tpu.vector_store %arg18[%c0_95, %c0_96, %c0_97], %160 {strides = array<i32>} : memref<1x8x128xf32, #tpu.memory_space<vmem>>, vector<1x8x128xf32>,
    return
  }
  func.func @transform_0(%arg0: i32, %arg1: i32) -> (i32, i32, i32) {
    %c0_i32 = arith.constant 0 : i32
    %c0_i32_0 = arith.constant 0 : i32
    return %arg0, %arg1, %c0_i32 : i32, i32, i32
  }
  func.func @transform_1(%arg0: i32, %arg1: i32) -> (i32, i32, i32) {
    %c0_i32 = arith.constant 0 : i32
    %c0_i32_0 = arith.constant 0 : i32
    %c0_i32_1 = arith.constant 0 : i32
    return %arg0, %c0_i32, %c0_i32_0 : i32, i32, i32
  }
  func.func @transform_2(%arg0: i32, %arg1: i32) -> (i32, i32) {
    %c0_i32 = arith.constant 0 : i32
    %c0_i32_0 = arith.constant 0 : i32
    %c0_i32_1 = arith.constant 0 : i32
    return %c0_i32, %c0_i32_0 : i32, i32
  }
  func.func @transform_3(%arg0: i32, %arg1: i32) -> (i32, i32) {
    %c0_i32 = arith.constant 0 : i32
    %c0_i32_0 = arith.constant 0 : i32
    %c0_i32_1 = arith.constant 0 : i32
    return %c0_i32, %c0_i32_0 : i32, i32
  }
  func.func @transform_4(%arg0: i32, %arg1: i32) -> (i32, i32, i32) {
    %c0_i32 = arith.constant 0 : i32
    %c0_i32_0 = arith.constant 0 : i32
    %c0_i32_1 = arith.constant 0 : i32
    %c0_i32_2 = arith.constant 0 : i32
    return %c0_i32, %c0_i32_0, %c0_i32_1 : i32, i32, i32
  }
  func.func @transform_5(%arg0: i32, %arg1: i32) -> (i32, i32, i32) {
    %c0_i32 = arith.constant 0 : i32
    %c0_i32_0 = arith.constant 0 : i32
    %c0_i32_1 = arith.constant 0 : i32
    %c0_i32_2 = arith.constant 0 : i32
    return %c0_i32, %c0_i32_0, %c0_i32_1 : i32, i32, i32
  }
  func.func @transform_6(%arg0: i32, %arg1: i32) -> (i32, i32) {
    %c0_i32 = arith.constant 0 : i32
    %c0_i32_0 = arith.constant 0 : i32
    %c0_i32_1 = arith.constant 0 : i32
    return %c0_i32, %c0_i32_0 : i32, i32
  }
  func.func @transform_7(%arg0: i32, %arg1: i32) -> (i32, i32) {
    %c0_i32 = arith.constant 0 : i32
    %c0_i32_0 = arith.constant 0 : i32
    %c0_i32_1 = arith.constant 0 : i32
    return %c0_i32, %c0_i32_0 : i32, i32
  }
  func.func @transform_8(%arg0: i32, %arg1: i32) -> (i32, i32, i32) {
    %c0_i32 = arith.constant 0 : i32
    %c0_i32_0 = arith.constant 0 : i32
    %c0_i32_1 = arith.constant 0 : i32
    %c0_i32_2 = arith.constant 0 : i32
    return %c0_i32, %c0_i32_0, %c0_i32_1 : i32, i32, i32
  }
  func.func @transform_9(%arg0: i32, %arg1: i32) -> (i32, i32, i32) {
    %c0_i32 = arith.constant 0 : i32
    %c0_i32_0 = arith.constant 0 : i32
    %c0_i32_1 = arith.constant 0 : i32
    %c0_i32_2 = arith.constant 0 : i32
    return %c0_i32, %c0_i32_0, %c0_i32_1 : i32, i32, i32
  }
  func.func @transform_10(%arg0: i32, %arg1: i32) -> (i32, i32) {
    %c0_i32 = arith.constant 0 : i32
    %c0_i32_0 = arith.constant 0 : i32
    %c0_i32_1 = arith.constant 0 : i32
    return %c0_i32, %c0_i32_0 : i32, i32
  }
  func.func @transform_11(%arg0: i32, %arg1: i32) -> (i32, i32) {
    %c0_i32 = arith.constant 0 : i32
    %c0_i32_0 = arith.constant 0 : i32
    %c0_i32_1 = arith.constant 0 : i32
    return %c0_i32, %c0_i32_0 : i32, i32
  }
  func.func @transform_12(%arg0: i32, %arg1: i32) -> (i32, i32, i32) {
    %c0_i32 = arith.constant 0 : i32
    %c0_i32_0 = arith.constant 0 : i32
    %c0_i32_1 = arith.constant 0 : i32
    %c0_i32_2 = arith.constant 0 : i32
    return %c0_i32, %c0_i32_0, %c0_i32_1 : i32, i32, i32
  }
  func.func @transform_13(%arg0: i32, %arg1: i32) -> (i32, i32, i32) {
    %c0_i32 = arith.constant 0 : i32
    %c0_i32_0 = arith.constant 0 : i32
    %c0_i32_1 = arith.constant 0 : i32
    %c0_i32_2 = arith.constant 0 : i32
    return %c0_i32, %c0_i32_0, %c0_i32_1 : i32, i32, i32
  }
  func.func @transform_14(%arg0: i32, %arg1: i32) -> (i32, i32, i32) {
    %c0_i32 = arith.constant 0 : i32
    %c0_i32_0 = arith.constant 0 : i32
    %c0_i32_1 = arith.constant 0 : i32
    %c0_i32_2 = arith.constant 0 : i32
    return %c0_i32, %c0_i32_0, %c0_i32_1 : i32, i32, i32
  }
  func.func @transform_15(%arg0: i32, %arg1: i32) -> (i32, i32) {
    %c0_i32 = arith.constant 0 : i32
    %c0_i32_0 = arith.constant 0 : i32
    %c0_i32_1 = arith.constant 0 : i32
    return %c0_i32, %c0_i32_0 : i32, i32
  }
  func.func @transform_16(%arg0: i32, %arg1: i32) -> (i32, i32, i32) {
    %c0_i32 = arith.constant 0 : i32
    %c0_i32_0 = arith.constant 0 : i32
    return %arg0, %arg1, %c0_i32 : i32, i32, i32
  }
}

module attributes {stable_mosaic.version = 11 : i64} {
  func.func @cross_attention_kernel(%arg0: i32, %arg1: i32, %arg2: memref<1x8x32xf32, #tpu.memory_space<vmem>>, %arg3: memref<1x8x48xf32, #tpu.memory_space<vmem>>, %arg4: memref<1x32xf32, #tpu.memory_space<vmem>>, %arg5: memref<1x32xf32, #tpu.memory_space<vmem>>, %arg6: memref<4x32x128xbf16, #tpu.memory_space<vmem>>, %arg7: memref<4x1x128xf32, #tpu.memory_space<vmem>>, %arg8: memref<1x48xf32, #tpu.memory_space<vmem>>, %arg9: memref<1x48xf32, #tpu.memory_space<vmem>>, %arg10: memref<4x48x128xbf16, #tpu.memory_space<vmem>>, %arg11: memref<4x1x128xf32, #tpu.memory_space<vmem>>, %arg12: memref<1x48xf32, #tpu.memory_space<vmem>>, %arg13: memref<1x48xf32, #tpu.memory_space<vmem>>, %arg14: memref<4x48x128xbf16, #tpu.memory_space<vmem>>, %arg15: memref<4x1x128xf32, #tpu.memory_space<vmem>>, %arg16: memref<4x128x128xbf16, #tpu.memory_space<vmem>>, %arg17: memref<1x128xf32, #tpu.memory_space<vmem>>, %arg18: memref<1x8x128xf32, #tpu.memory_space<vmem>>, %arg19: memref<4x8x128xbf16, #tpu.memory_space<vmem>>, %arg20: memref<4x8x128xbf16, #tpu.memory_space<vmem>>) attributes {dimension_semantics = [#tpu.dimension_semantics<parallel>, #tpu.dimension_semantics<arbitrary>], iteration_bounds = array<i64: 2, 1>, scalar_prefetch = 0 : i64, scratch_operands = 2 : i64, tpu.core_type = #tpu.core_type<tc>, window_params = [{transform_indices = @transform_0, window_bounds = array<i64: 1, 8, 32>}, {transform_indices = @transform_1, window_bounds = array<i64: 1, 8, 48>}, {pipeline_mode = #tpu.pipeline_mode<synchronous>, transform_indices = @transform_2, window_bounds = array<i64: 1, 32>}, {pipeline_mode = #tpu.pipeline_mode<synchronous>, transform_indices = @transform_3, window_bounds = array<i64: 1, 32>}, {pipeline_mode = #tpu.pipeline_mode<synchronous>, transform_indices = @transform_4, window_bounds = array<i64: 4, 32, 128>}, {pipeline_mode = #tpu.pipeline_mode<synchronous>, transform_indices = @transform_5, window_bounds = array<i64: 4, 1, 128>}, {pipeline_mode = #tpu.pipeline_mode<synchronous>, transform_indices = @transform_6, window_bounds = array<i64: 1, 48>}, {pipeline_mode = #tpu.pipeline_mode<synchronous>, transform_indices = @transform_7, window_bounds = array<i64: 1, 48>}, {pipeline_mode = #tpu.pipeline_mode<synchronous>, transform_indices = @transform_8, window_bounds = array<i64: 4, 48, 128>}, {pipeline_mode = #tpu.pipeline_mode<synchronous>, transform_indices = @transform_9, window_bounds = array<i64: 4, 1, 128>}, {pipeline_mode = #tpu.pipeline_mode<synchronous>, transform_indices = @transform_10, window_bounds = array<i64: 1, 48>}, {pipeline_mode = #tpu.pipeline_mode<synchronous>, transform_indices = @transform_11, window_bounds = array<i64: 1, 48>}, {pipeline_mode = #tpu.pipeline_mode<synchronous>, transform_indices = @transform_12, window_bounds = array<i64: 4, 48, 128>}, {pipeline_mode = #tpu.pipeline_mode<synchronous>, transform_indices = @transform_13, window_bounds = array<i64: 4, 1, 128>}, {pipeline_mode = #tpu.pipeline_mode<synchronous>, transform_indices = @transform_14, window_bounds = array<i64: 4, 128, 128>}, {pipeline_mode = #tpu.pipeline_mode<synchronous>, transform_indices = @transform_15, window_bounds = array<i64: 1, 128>}, {transform_indices = @transform_16, window_bounds = array<i64: 1, 8, 128>}]} {
    %c0_i32 = arith.constant 0 : i32
    %0 = arith.cmpi eq, %arg1, %c0_i32 : i32
    %1 = arith.extui %0 : i1 to i32
    %c0_i32_0 = arith.constant 0 : i32
    %2 = arith.cmpi ne, %1, %c0_i32_0 : i32
    scf.if %2 {
      %c0_98 = arith.constant 0 : index
      %c0_99 = arith.constant 0 : index
      %c0_100 = arith.constant 0 : index
      %157 = vector.load %arg3[%c0_98, %c0_99, %c0_100] : memref<1x8x48xf32, #tpu.memory_space<vmem>>, vector<1x8x48xf32>
      %158 = vector.shape_cast %157 : vector<1x8x48xf32> to vector<8x48xf32>
      %cst_101 = arith.constant dense<0.000000e+00> : vector<8xf32>
      %159 = vector.multi_reduction <add>, %158, %cst_101 [1] : vector<8x48xf32> to vector<8xf32>
      %160 = vector.shape_cast %159 : vector<8xf32> to vector<8x1xf32>
      %cst_102 = arith.constant 4.800000e+01 : f32
      %161 = vector.broadcast %cst_102 : f32 to vector<8x1xf32>
      %162 = arith.divf %160, %161 : vector<8x1xf32>
      %163 = vector.broadcast %162 : vector<8x1xf32> to vector<8x48xf32>
      %164 = arith.subf %158, %163 : vector<8x48xf32>
      %165 = arith.mulf %164, %164 : vector<8x48xf32>
      %cst_103 = arith.constant dense<0.000000e+00> : vector<8xf32>
      %166 = vector.multi_reduction <add>, %165, %cst_103 [1] : vector<8x48xf32> to vector<8xf32>
      %167 = vector.shape_cast %166 : vector<8xf32> to vector<8x1xf32>
      %cst_104 = arith.constant 4.800000e+01 : f32
      %168 = vector.broadcast %cst_104 : f32 to vector<8x1xf32>
      %169 = arith.divf %167, %168 : vector<8x1xf32>
      %170 = vector.broadcast %162 : vector<8x1xf32> to vector<8x48xf32>
      %171 = arith.subf %158, %170 : vector<8x48xf32>
      %cst_105 = arith.constant 9.99999974E-6 : f32
      %172 = vector.broadcast %cst_105 : f32 to vector<8x1xf32>
      %173 = arith.addf %169, %172 : vector<8x1xf32>
      %174 = math.rsqrt %173 : vector<8x1xf32>
      %175 = vector.broadcast %174 : vector<8x1xf32> to vector<8x48xf32>
      %176 = arith.mulf %171, %175 : vector<8x48xf32>
      %c0_106 = arith.constant 0 : index
      %c0_107 = arith.constant 0 : index
      %177 = vector.load %arg8[%c0_106, %c0_107] : memref<1x48xf32, #tpu.memory_space<vmem>>, vector<1x48xf32>
      %178 = vector.broadcast %177 : vector<1x48xf32> to vector<8x48xf32>
      %179 = arith.mulf %176, %178 : vector<8x48xf32>
      %c0_108 = arith.constant 0 : index
      %c0_109 = arith.constant 0 : index
      %180 = vector.load %arg9[%c0_108, %c0_109] : memref<1x48xf32, #tpu.memory_space<vmem>>, vector<1x48xf32>
      %181 = vector.broadcast %180 : vector<1x48xf32> to vector<8x48xf32>
      %182 = arith.addf %179, %181 : vector<8x48xf32>
      %183 = arith.truncf %182 : vector<8x48xf32> to vector<8x48xbf16>
      %c0_110 = arith.constant 0 : index
      %c0_111 = arith.constant 0 : index
      %184 = vector.load %arg12[%c0_110, %c0_111] : memref<1x48xf32, #tpu.memory_space<vmem>>, vector<1x48xf32>
      %185 = vector.broadcast %184 : vector<1x48xf32> to vector<8x48xf32>
      %186 = arith.mulf %176, %185 : vector<8x48xf32>
      %c0_112 = arith.constant 0 : index
      %c0_113 = arith.constant 0 : index
      %187 = vector.load %arg13[%c0_112, %c0_113] : memref<1x48xf32, #tpu.memory_space<vmem>>, vector<1x48xf32>
      %188 = vector.broadcast %187 : vector<1x48xf32> to vector<8x48xf32>
      %189 = arith.addf %186, %188 : vector<8x48xf32>
      %190 = arith.truncf %189 : vector<8x48xf32> to vector<8x48xbf16>
      %c0_114 = arith.constant 0 : index
      %c0_115 = arith.constant 0 : index
      %c0_116 = arith.constant 0 : index
      %191 = vector.load %arg10[%c0_114, %c0_115, %c0_116] : memref<4x48x128xbf16, #tpu.memory_space<vmem>>, vector<1x48x128xbf16>
      %192 = vector.shape_cast %191 : vector<1x48x128xbf16> to vector<48x128xbf16>
      %cst_117 = arith.constant dense<0.000000e+00> : vector<8x128xf32>
      %193 = tpu.matmul %183, %192, %cst_117 {dimension_numbers = #tpu.dot_dimension_numbers<[1], [0], [0], [1], [0, 0, 1, 1], [], []>} : vector<8x48xbf16>, vector<48x128xbf16>, vector<8x128xf32> -> vector<8x128xf32>
      %c0_118 = arith.constant 0 : index
      %c0_119 = arith.constant 0 : index
      %c0_120 = arith.constant 0 : index
      %194 = vector.load %arg11[%c0_118, %c0_119, %c0_120] : memref<4x1x128xf32, #tpu.memory_space<vmem>>, vector<1x1x128xf32>
      %195 = vector.shape_cast %194 : vector<1x1x128xf32> to vector<1x128xf32>
      %196 = vector.broadcast %195 : vector<1x128xf32> to vector<8x128xf32>
      %197 = arith.addf %193, %196 : vector<8x128xf32>
      %198 = arith.truncf %197 : vector<8x128xf32> to vector<8x128xbf16>
      %c0_121 = arith.constant 0 : index
      %c0_122 = arith.constant 0 : index
      %c0_123 = arith.constant 0 : index
      %199 = vector.load %arg19[%c0_121, %c0_122, %c0_123] : memref<4x8x128xbf16, #tpu.memory_space<vmem>>, vector<1x8x128xbf16>
      %200 = vector.shape_cast %199 : vector<1x8x128xbf16> to vector<8x128xbf16>
      %201 = vector.shape_cast %198 : vector<8x128xbf16> to vector<1x8x128xbf16>
      tpu.vector_store %arg19[%c0_121, %c0_122, %c0_123], %201 {strides = array<i32>} : memref<4x8x128xbf16, #tpu.memory_space<vmem>>, vector<1x8x128xbf16>,
      %c0_124 = arith.constant 0 : index
      %c0_125 = arith.constant 0 : index
      %c0_126 = arith.constant 0 : index
      %202 = vector.load %arg14[%c0_124, %c0_125, %c0_126] : memref<4x48x128xbf16, #tpu.memory_space<vmem>>, vector<1x48x128xbf16>
      %203 = vector.shape_cast %202 : vector<1x48x128xbf16> to vector<48x128xbf16>
      %cst_127 = arith.constant dense<0.000000e+00> : vector<8x128xf32>
      %204 = tpu.matmul %190, %203, %cst_127 {dimension_numbers = #tpu.dot_dimension_numbers<[1], [0], [0], [1], [0, 0, 1, 1], [], []>} : vector<8x48xbf16>, vector<48x128xbf16>, vector<8x128xf32> -> vector<8x128xf32>
      %c0_128 = arith.constant 0 : index
      %c0_129 = arith.constant 0 : index
      %c0_130 = arith.constant 0 : index
      %205 = vector.load %arg15[%c0_128, %c0_129, %c0_130] : memref<4x1x128xf32, #tpu.memory_space<vmem>>, vector<1x1x128xf32>
      %206 = vector.shape_cast %205 : vector<1x1x128xf32> to vector<1x128xf32>
      %207 = vector.broadcast %206 : vector<1x128xf32> to vector<8x128xf32>
      %208 = arith.addf %204, %207 : vector<8x128xf32>
      %209 = arith.truncf %208 : vector<8x128xf32> to vector<8x128xbf16>
      %c0_131 = arith.constant 0 : index
      %c0_132 = arith.constant 0 : index
      %c0_133 = arith.constant 0 : index
      %210 = vector.load %arg20[%c0_131, %c0_132, %c0_133] : memref<4x8x128xbf16, #tpu.memory_space<vmem>>, vector<1x8x128xbf16>
      %211 = vector.shape_cast %210 : vector<1x8x128xbf16> to vector<8x128xbf16>
      %212 = vector.shape_cast %209 : vector<8x128xbf16> to vector<1x8x128xbf16>
      tpu.vector_store %arg20[%c0_131, %c0_132, %c0_133], %212 {strides = array<i32>} : memref<4x8x128xbf16, #tpu.memory_space<vmem>>, vector<1x8x128xbf16>,
      %c1_134 = arith.constant 1 : index
      %c0_135 = arith.constant 0 : index
      %c0_136 = arith.constant 0 : index
      %213 = vector.load %arg10[%c1_134, %c0_135, %c0_136] : memref<4x48x128xbf16, #tpu.memory_space<vmem>>, vector<1x48x128xbf16>
      %214 = vector.shape_cast %213 : vector<1x48x128xbf16> to vector<48x128xbf16>
      %cst_137 = arith.constant dense<0.000000e+00> : vector<8x128xf32>
      %215 = tpu.matmul %183, %214, %cst_137 {dimension_numbers = #tpu.dot_dimension_numbers<[1], [0], [0], [1], [0, 0, 1, 1], [], []>} : vector<8x48xbf16>, vector<48x128xbf16>, vector<8x128xf32> -> vector<8x128xf32>
      %c1_138 = arith.constant 1 : index
      %c0_139 = arith.constant 0 : index
      %c0_140 = arith.constant 0 : index
      %216 = vector.load %arg11[%c1_138, %c0_139, %c0_140] : memref<4x1x128xf32, #tpu.memory_space<vmem>>, vector<1x1x128xf32>
      %217 = vector.shape_cast %216 : vector<1x1x128xf32> to vector<1x128xf32>
      %218 = vector.broadcast %217 : vector<1x128xf32> to vector<8x128xf32>
      %219 = arith.addf %215, %218 : vector<8x128xf32>
      %220 = arith.truncf %219 : vector<8x128xf32> to vector<8x128xbf16>
      %c1_141 = arith.constant 1 : index
      %c0_142 = arith.constant 0 : index
      %c0_143 = arith.constant 0 : index
      %221 = vector.load %arg19[%c1_141, %c0_142, %c0_143] : memref<4x8x128xbf16, #tpu.memory_space<vmem>>, vector<1x8x128xbf16>
      %222 = vector.shape_cast %221 : vector<1x8x128xbf16> to vector<8x128xbf16>
      %223 = vector.shape_cast %220 : vector<8x128xbf16> to vector<1x8x128xbf16>
      tpu.vector_store %arg19[%c1_141, %c0_142, %c0_143], %223 {strides = array<i32>} : memref<4x8x128xbf16, #tpu.memory_space<vmem>>, vector<1x8x128xbf16>,
      %c1_144 = arith.constant 1 : index
      %c0_145 = arith.constant 0 : index
      %c0_146 = arith.constant 0 : index
      %224 = vector.load %arg14[%c1_144, %c0_145, %c0_146] : memref<4x48x128xbf16, #tpu.memory_space<vmem>>, vector<1x48x128xbf16>
      %225 = vector.shape_cast %224 : vector<1x48x128xbf16> to vector<48x128xbf16>
      %cst_147 = arith.constant dense<0.000000e+00> : vector<8x128xf32>
      %226 = tpu.matmul %190, %225, %cst_147 {dimension_numbers = #tpu.dot_dimension_numbers<[1], [0], [0], [1], [0, 0, 1, 1], [], []>} : vector<8x48xbf16>, vector<48x128xbf16>, vector<8x128xf32> -> vector<8x128xf32>
      %c1_148 = arith.constant 1 : index
      %c0_149 = arith.constant 0 : index
      %c0_150 = arith.constant 0 : index
      %227 = vector.load %arg15[%c1_148, %c0_149, %c0_150] : memref<4x1x128xf32, #tpu.memory_space<vmem>>, vector<1x1x128xf32>
      %228 = vector.shape_cast %227 : vector<1x1x128xf32> to vector<1x128xf32>
      %229 = vector.broadcast %228 : vector<1x128xf32> to vector<8x128xf32>
      %230 = arith.addf %226, %229 : vector<8x128xf32>
      %231 = arith.truncf %230 : vector<8x128xf32> to vector<8x128xbf16>
      %c1_151 = arith.constant 1 : index
      %c0_152 = arith.constant 0 : index
      %c0_153 = arith.constant 0 : index
      %232 = vector.load %arg20[%c1_151, %c0_152, %c0_153] : memref<4x8x128xbf16, #tpu.memory_space<vmem>>, vector<1x8x128xbf16>
      %233 = vector.shape_cast %232 : vector<1x8x128xbf16> to vector<8x128xbf16>
      %234 = vector.shape_cast %231 : vector<8x128xbf16> to vector<1x8x128xbf16>
      tpu.vector_store %arg20[%c1_151, %c0_152, %c0_153], %234 {strides = array<i32>} : memref<4x8x128xbf16, #tpu.memory_space<vmem>>, vector<1x8x128xbf16>,
      %c2_154 = arith.constant 2 : index
      %c0_155 = arith.constant 0 : index
      %c0_156 = arith.constant 0 : index
      %235 = vector.load %arg10[%c2_154, %c0_155, %c0_156] : memref<4x48x128xbf16, #tpu.memory_space<vmem>>, vector<1x48x128xbf16>
      %236 = vector.shape_cast %235 : vector<1x48x128xbf16> to vector<48x128xbf16>
      %cst_157 = arith.constant dense<0.000000e+00> : vector<8x128xf32>
      %237 = tpu.matmul %183, %236, %cst_157 {dimension_numbers = #tpu.dot_dimension_numbers<[1], [0], [0], [1], [0, 0, 1, 1], [], []>} : vector<8x48xbf16>, vector<48x128xbf16>, vector<8x128xf32> -> vector<8x128xf32>
      %c2_158 = arith.constant 2 : index
      %c0_159 = arith.constant 0 : index
      %c0_160 = arith.constant 0 : index
      %238 = vector.load %arg11[%c2_158, %c0_159, %c0_160] : memref<4x1x128xf32, #tpu.memory_space<vmem>>, vector<1x1x128xf32>
      %239 = vector.shape_cast %238 : vector<1x1x128xf32> to vector<1x128xf32>
      %240 = vector.broadcast %239 : vector<1x128xf32> to vector<8x128xf32>
      %241 = arith.addf %237, %240 : vector<8x128xf32>
      %242 = arith.truncf %241 : vector<8x128xf32> to vector<8x128xbf16>
      %c2_161 = arith.constant 2 : index
      %c0_162 = arith.constant 0 : index
      %c0_163 = arith.constant 0 : index
      %243 = vector.load %arg19[%c2_161, %c0_162, %c0_163] : memref<4x8x128xbf16, #tpu.memory_space<vmem>>, vector<1x8x128xbf16>
      %244 = vector.shape_cast %243 : vector<1x8x128xbf16> to vector<8x128xbf16>
      %245 = vector.shape_cast %242 : vector<8x128xbf16> to vector<1x8x128xbf16>
      tpu.vector_store %arg19[%c2_161, %c0_162, %c0_163], %245 {strides = array<i32>} : memref<4x8x128xbf16, #tpu.memory_space<vmem>>, vector<1x8x128xbf16>,
      %c2_164 = arith.constant 2 : index
      %c0_165 = arith.constant 0 : index
      %c0_166 = arith.constant 0 : index
      %246 = vector.load %arg14[%c2_164, %c0_165, %c0_166] : memref<4x48x128xbf16, #tpu.memory_space<vmem>>, vector<1x48x128xbf16>
      %247 = vector.shape_cast %246 : vector<1x48x128xbf16> to vector<48x128xbf16>
      %cst_167 = arith.constant dense<0.000000e+00> : vector<8x128xf32>
      %248 = tpu.matmul %190, %247, %cst_167 {dimension_numbers = #tpu.dot_dimension_numbers<[1], [0], [0], [1], [0, 0, 1, 1], [], []>} : vector<8x48xbf16>, vector<48x128xbf16>, vector<8x128xf32> -> vector<8x128xf32>
      %c2_168 = arith.constant 2 : index
      %c0_169 = arith.constant 0 : index
      %c0_170 = arith.constant 0 : index
      %249 = vector.load %arg15[%c2_168, %c0_169, %c0_170] : memref<4x1x128xf32, #tpu.memory_space<vmem>>, vector<1x1x128xf32>
      %250 = vector.shape_cast %249 : vector<1x1x128xf32> to vector<1x128xf32>
      %251 = vector.broadcast %250 : vector<1x128xf32> to vector<8x128xf32>
      %252 = arith.addf %248, %251 : vector<8x128xf32>
      %253 = arith.truncf %252 : vector<8x128xf32> to vector<8x128xbf16>
      %c2_171 = arith.constant 2 : index
      %c0_172 = arith.constant 0 : index
      %c0_173 = arith.constant 0 : index
      %254 = vector.load %arg20[%c2_171, %c0_172, %c0_173] : memref<4x8x128xbf16, #tpu.memory_space<vmem>>, vector<1x8x128xbf16>
      %255 = vector.shape_cast %254 : vector<1x8x128xbf16> to vector<8x128xbf16>
      %256 = vector.shape_cast %253 : vector<8x128xbf16> to vector<1x8x128xbf16>
      tpu.vector_store %arg20[%c2_171, %c0_172, %c0_173], %256 {strides = array<i32>} : memref<4x8x128xbf16, #tpu.memory_space<vmem>>, vector<1x8x128xbf16>,
      %c3_174 = arith.constant 3 : index
      %c0_175 = arith.constant 0 : index
      %c0_176 = arith.constant 0 : index
      %257 = vector.load %arg10[%c3_174, %c0_175, %c0_176] : memref<4x48x128xbf16, #tpu.memory_space<vmem>>, vector<1x48x128xbf16>
      %258 = vector.shape_cast %257 : vector<1x48x128xbf16> to vector<48x128xbf16>
      %cst_177 = arith.constant dense<0.000000e+00> : vector<8x128xf32>
      %259 = tpu.matmul %183, %258, %cst_177 {dimension_numbers = #tpu.dot_dimension_numbers<[1], [0], [0], [1], [0, 0, 1, 1], [], []>} : vector<8x48xbf16>, vector<48x128xbf16>, vector<8x128xf32> -> vector<8x128xf32>
      %c3_178 = arith.constant 3 : index
      %c0_179 = arith.constant 0 : index
      %c0_180 = arith.constant 0 : index
      %260 = vector.load %arg11[%c3_178, %c0_179, %c0_180] : memref<4x1x128xf32, #tpu.memory_space<vmem>>, vector<1x1x128xf32>
      %261 = vector.shape_cast %260 : vector<1x1x128xf32> to vector<1x128xf32>
      %262 = vector.broadcast %261 : vector<1x128xf32> to vector<8x128xf32>
      %263 = arith.addf %259, %262 : vector<8x128xf32>
      %264 = arith.truncf %263 : vector<8x128xf32> to vector<8x128xbf16>
      %c3_181 = arith.constant 3 : index
      %c0_182 = arith.constant 0 : index
      %c0_183 = arith.constant 0 : index
      %265 = vector.load %arg19[%c3_181, %c0_182, %c0_183] : memref<4x8x128xbf16, #tpu.memory_space<vmem>>, vector<1x8x128xbf16>
      %266 = vector.shape_cast %265 : vector<1x8x128xbf16> to vector<8x128xbf16>
      %267 = vector.shape_cast %264 : vector<8x128xbf16> to vector<1x8x128xbf16>
      tpu.vector_store %arg19[%c3_181, %c0_182, %c0_183], %267 {strides = array<i32>} : memref<4x8x128xbf16, #tpu.memory_space<vmem>>, vector<1x8x128xbf16>,
      %c3_184 = arith.constant 3 : index
      %c0_185 = arith.constant 0 : index
      %c0_186 = arith.constant 0 : index
      %268 = vector.load %arg14[%c3_184, %c0_185, %c0_186] : memref<4x48x128xbf16, #tpu.memory_space<vmem>>, vector<1x48x128xbf16>
      %269 = vector.shape_cast %268 : vector<1x48x128xbf16> to vector<48x128xbf16>
      %cst_187 = arith.constant dense<0.000000e+00> : vector<8x128xf32>
      %270 = tpu.matmul %190, %269, %cst_187 {dimension_numbers = #tpu.dot_dimension_numbers<[1], [0], [0], [1], [0, 0, 1, 1], [], []>} : vector<8x48xbf16>, vector<48x128xbf16>, vector<8x128xf32> -> vector<8x128xf32>
      %c3_188 = arith.constant 3 : index
      %c0_189 = arith.constant 0 : index
      %c0_190 = arith.constant 0 : index
      %271 = vector.load %arg15[%c3_188, %c0_189, %c0_190] : memref<4x1x128xf32, #tpu.memory_space<vmem>>, vector<1x1x128xf32>
      %272 = vector.shape_cast %271 : vector<1x1x128xf32> to vector<1x128xf32>
      %273 = vector.broadcast %272 : vector<1x128xf32> to vector<8x128xf32>
      %274 = arith.addf %270, %273 : vector<8x128xf32>
      %275 = arith.truncf %274 : vector<8x128xf32> to vector<8x128xbf16>
      %c3_191 = arith.constant 3 : index
      %c0_192 = arith.constant 0 : index
      %c0_193 = arith.constant 0 : index
      %276 = vector.load %arg20[%c3_191, %c0_192, %c0_193] : memref<4x8x128xbf16, #tpu.memory_space<vmem>>, vector<1x8x128xbf16>
      %277 = vector.shape_cast %276 : vector<1x8x128xbf16> to vector<8x128xbf16>
      %278 = vector.shape_cast %275 : vector<8x128xbf16> to vector<1x8x128xbf16>
      tpu.vector_store %arg20[%c3_191, %c0_192, %c0_193], %278 {strides = array<i32>} : memref<4x8x128xbf16, #tpu.memory_space<vmem>>, vector<1x8x128xbf16>,
    } else {
    }
    %c0 = arith.constant 0 : index
    %c0_1 = arith.constant 0 : index
    %c0_2 = arith.constant 0 : index
    %3 = vector.load %arg2[%c0, %c0_1, %c0_2] : memref<1x8x32xf32, #tpu.memory_space<vmem>>, vector<1x8x32xf32>
    %4 = vector.shape_cast %3 : vector<1x8x32xf32> to vector<8x32xf32>
    %cst = arith.constant dense<0.000000e+00> : vector<8xf32>
    %5 = vector.multi_reduction <add>, %4, %cst [1] : vector<8x32xf32> to vector<8xf32>
    %6 = vector.shape_cast %5 : vector<8xf32> to vector<8x1xf32>
    %cst_3 = arith.constant 3.200000e+01 : f32
    %7 = vector.broadcast %cst_3 : f32 to vector<8x1xf32>
    %8 = arith.divf %6, %7 : vector<8x1xf32>
    %9 = vector.broadcast %8 : vector<8x1xf32> to vector<8x32xf32>
    %10 = arith.subf %4, %9 : vector<8x32xf32>
    %11 = arith.mulf %10, %10 : vector<8x32xf32>
    %cst_4 = arith.constant dense<0.000000e+00> : vector<8xf32>
    %12 = vector.multi_reduction <add>, %11, %cst_4 [1] : vector<8x32xf32> to vector<8xf32>
    %13 = vector.shape_cast %12 : vector<8xf32> to vector<8x1xf32>
    %cst_5 = arith.constant 3.200000e+01 : f32
    %14 = vector.broadcast %cst_5 : f32 to vector<8x1xf32>
    %15 = arith.divf %13, %14 : vector<8x1xf32>
    %16 = vector.broadcast %8 : vector<8x1xf32> to vector<8x32xf32>
    %17 = arith.subf %4, %16 : vector<8x32xf32>
    %cst_6 = arith.constant 9.99999974E-6 : f32
    %18 = vector.broadcast %cst_6 : f32 to vector<8x1xf32>
    %19 = arith.addf %15, %18 : vector<8x1xf32>
    %20 = math.rsqrt %19 : vector<8x1xf32>
    %21 = vector.broadcast %20 : vector<8x1xf32> to vector<8x32xf32>
    %22 = arith.mulf %17, %21 : vector<8x32xf32>
    %c0_7 = arith.constant 0 : index
    %c0_8 = arith.constant 0 : index
    %23 = vector.load %arg4[%c0_7, %c0_8] : memref<1x32xf32, #tpu.memory_space<vmem>>, vector<1x32xf32>
    %24 = vector.broadcast %23 : vector<1x32xf32> to vector<8x32xf32>
    %25 = arith.mulf %22, %24 : vector<8x32xf32>
    %c0_9 = arith.constant 0 : index
    %c0_10 = arith.constant 0 : index
    %26 = vector.load %arg5[%c0_9, %c0_10] : memref<1x32xf32, #tpu.memory_space<vmem>>, vector<1x32xf32>
    %27 = vector.broadcast %26 : vector<1x32xf32> to vector<8x32xf32>
    %28 = arith.addf %25, %27 : vector<8x32xf32>
    %29 = arith.truncf %28 : vector<8x32xf32> to vector<8x32xbf16>
    %cst_11 = arith.constant 0.000000e+00 : f32
    %30 = vector.broadcast %cst_11 : f32 to vector<8x128xf32>
    %c0_12 = arith.constant 0 : index
    %c0_13 = arith.constant 0 : index
    %c0_14 = arith.constant 0 : index
    %31 = vector.load %arg6[%c0_12, %c0_13, %c0_14] : memref<4x32x128xbf16, #tpu.memory_space<vmem>>, vector<1x32x128xbf16>
    %32 = vector.shape_cast %31 : vector<1x32x128xbf16> to vector<32x128xbf16>
    %cst_15 = arith.constant dense<0.000000e+00> : vector<8x128xf32>
    %33 = tpu.matmul %29, %32, %cst_15 {dimension_numbers = #tpu.dot_dimension_numbers<[1], [0], [0], [1], [0, 0, 1, 1], [], []>} : vector<8x32xbf16>, vector<32x128xbf16>, vector<8x128xf32> -> vector<8x128xf32>
    %c0_16 = arith.constant 0 : index
    %c0_17 = arith.constant 0 : index
    %c0_18 = arith.constant 0 : index
    %34 = vector.load %arg7[%c0_16, %c0_17, %c0_18] : memref<4x1x128xf32, #tpu.memory_space<vmem>>, vector<1x1x128xf32>
    %35 = vector.shape_cast %34 : vector<1x1x128xf32> to vector<1x128xf32>
    %36 = vector.broadcast %35 : vector<1x128xf32> to vector<8x128xf32>
    %37 = arith.addf %33, %36 : vector<8x128xf32>
    %38 = arith.truncf %37 : vector<8x128xf32> to vector<8x128xbf16>
    %c0_19 = arith.constant 0 : index
    %c0_20 = arith.constant 0 : index
    %c0_21 = arith.constant 0 : index
    %39 = vector.load %arg19[%c0_19, %c0_20, %c0_21] : memref<4x8x128xbf16, #tpu.memory_space<vmem>>, vector<1x8x128xbf16>
    %40 = vector.shape_cast %39 : vector<1x8x128xbf16> to vector<8x128xbf16>
    %cst_22 = arith.constant dense<0.000000e+00> : vector<8x8xf32>
    %41 = tpu.matmul %38, %40, %cst_22 {dimension_numbers = #tpu.dot_dimension_numbers<[1], [1], [0], [0], [0, 0, 1, 0], [], []>} : vector<8x128xbf16>, vector<8x128xbf16>, vector<8x8xf32> -> vector<8x8xf32>
    %cst_23 = arith.constant dense<0xFF800000> : vector<8xf32>
    %42 = vector.multi_reduction <maximumf>, %41, %cst_23 [1] : vector<8x8xf32> to vector<8xf32>
    %43 = vector.shape_cast %42 : vector<8xf32> to vector<8x1xf32>
    %44 = vector.broadcast %43 : vector<8x1xf32> to vector<8x8xf32>
    %45 = arith.subf %41, %44 : vector<8x8xf32>
    %46 = math.exp %45 : vector<8x8xf32>
    %cst_24 = arith.constant dense<0.000000e+00> : vector<8xf32>
    %47 = vector.multi_reduction <add>, %46, %cst_24 [1] : vector<8x8xf32> to vector<8xf32>
    %48 = vector.shape_cast %47 : vector<8xf32> to vector<8x1xf32>
    %49 = arith.truncf %46 : vector<8x8xf32> to vector<8x8xbf16>
    %c0_25 = arith.constant 0 : index
    %c0_26 = arith.constant 0 : index
    %c0_27 = arith.constant 0 : index
    %50 = vector.load %arg20[%c0_25, %c0_26, %c0_27] : memref<4x8x128xbf16, #tpu.memory_space<vmem>>, vector<1x8x128xbf16>
    %51 = vector.shape_cast %50 : vector<1x8x128xbf16> to vector<8x128xbf16>
    %cst_28 = arith.constant dense<0.000000e+00> : vector<8x128xf32>
    %52 = tpu.matmul %49, %51, %cst_28 {dimension_numbers = #tpu.dot_dimension_numbers<[1], [0], [0], [1], [0, 0, 1, 1], [], []>} : vector<8x8xbf16>, vector<8x128xbf16>, vector<8x128xf32> -> vector<8x128xf32>
    %53 = tpu.reciprocal %48 {approx = true} : vector<8x1xf32> -> vector<8x1xf32>
    %54 = vector.broadcast %53 : vector<8x1xf32> to vector<8x128xf32>
    %55 = arith.mulf %52, %54 : vector<8x128xf32>
    %56 = arith.truncf %55 : vector<8x128xf32> to vector<8x128xbf16>
    %c0_29 = arith.constant 0 : index
    %c0_30 = arith.constant 0 : index
    %c0_31 = arith.constant 0 : index
    %57 = vector.load %arg16[%c0_29, %c0_30, %c0_31] : memref<4x128x128xbf16, #tpu.memory_space<vmem>>, vector<1x128x128xbf16>
    %58 = vector.shape_cast %57 : vector<1x128x128xbf16> to vector<128x128xbf16>
    %cst_32 = arith.constant dense<0.000000e+00> : vector<8x128xf32>
    %59 = tpu.matmul %56, %58, %cst_32 {dimension_numbers = #tpu.dot_dimension_numbers<[1], [0], [0], [1], [0, 0, 1, 1], [], []>} : vector<8x128xbf16>, vector<128x128xbf16>, vector<8x128xf32> -> vector<8x128xf32>
    %60 = arith.addf %30, %59 : vector<8x128xf32>
    %c1 = arith.constant 1 : index
    %c0_33 = arith.constant 0 : index
    %c0_34 = arith.constant 0 : index
    %61 = vector.load %arg6[%c1, %c0_33, %c0_34] : memref<4x32x128xbf16, #tpu.memory_space<vmem>>, vector<1x32x128xbf16>
    %62 = vector.shape_cast %61 : vector<1x32x128xbf16> to vector<32x128xbf16>
    %cst_35 = arith.constant dense<0.000000e+00> : vector<8x128xf32>
    %63 = tpu.matmul %29, %62, %cst_35 {dimension_numbers = #tpu.dot_dimension_numbers<[1], [0], [0], [1], [0, 0, 1, 1], [], []>} : vector<8x32xbf16>, vector<32x128xbf16>, vector<8x128xf32> -> vector<8x128xf32>
    %c1_36 = arith.constant 1 : index
    %c0_37 = arith.constant 0 : index
    %c0_38 = arith.constant 0 : index
    %64 = vector.load %arg7[%c1_36, %c0_37, %c0_38] : memref<4x1x128xf32, #tpu.memory_space<vmem>>, vector<1x1x128xf32>
    %65 = vector.shape_cast %64 : vector<1x1x128xf32> to vector<1x128xf32>
    %66 = vector.broadcast %65 : vector<1x128xf32> to vector<8x128xf32>
    %67 = arith.addf %63, %66 : vector<8x128xf32>
    %68 = arith.truncf %67 : vector<8x128xf32> to vector<8x128xbf16>
    %c1_39 = arith.constant 1 : index
    %c0_40 = arith.constant 0 : index
    %c0_41 = arith.constant 0 : index
    %69 = vector.load %arg19[%c1_39, %c0_40, %c0_41] : memref<4x8x128xbf16, #tpu.memory_space<vmem>>, vector<1x8x128xbf16>
    %70 = vector.shape_cast %69 : vector<1x8x128xbf16> to vector<8x128xbf16>
    %cst_42 = arith.constant dense<0.000000e+00> : vector<8x8xf32>
    %71 = tpu.matmul %68, %70, %cst_42 {dimension_numbers = #tpu.dot_dimension_numbers<[1], [1], [0], [0], [0, 0, 1, 0], [], []>} : vector<8x128xbf16>, vector<8x128xbf16>, vector<8x8xf32> -> vector<8x8xf32>
    %cst_43 = arith.constant dense<0xFF800000> : vector<8xf32>
    %72 = vector.multi_reduction <maximumf>, %71, %cst_43 [1] : vector<8x8xf32> to vector<8xf32>
    %73 = vector.shape_cast %72 : vector<8xf32> to vector<8x1xf32>
    %74 = vector.broadcast %73 : vector<8x1xf32> to vector<8x8xf32>
    %75 = arith.subf %71, %74 : vector<8x8xf32>
    %76 = math.exp %75 : vector<8x8xf32>
    %cst_44 = arith.constant dense<0.000000e+00> : vector<8xf32>
    %77 = vector.multi_reduction <add>, %76, %cst_44 [1] : vector<8x8xf32> to vector<8xf32>
    %78 = vector.shape_cast %77 : vector<8xf32> to vector<8x1xf32>
    %79 = arith.truncf %76 : vector<8x8xf32> to vector<8x8xbf16>
    %c1_45 = arith.constant 1 : index
    %c0_46 = arith.constant 0 : index
    %c0_47 = arith.constant 0 : index
    %80 = vector.load %arg20[%c1_45, %c0_46, %c0_47] : memref<4x8x128xbf16, #tpu.memory_space<vmem>>, vector<1x8x128xbf16>
    %81 = vector.shape_cast %80 : vector<1x8x128xbf16> to vector<8x128xbf16>
    %cst_48 = arith.constant dense<0.000000e+00> : vector<8x128xf32>
    %82 = tpu.matmul %79, %81, %cst_48 {dimension_numbers = #tpu.dot_dimension_numbers<[1], [0], [0], [1], [0, 0, 1, 1], [], []>} : vector<8x8xbf16>, vector<8x128xbf16>, vector<8x128xf32> -> vector<8x128xf32>
    %83 = tpu.reciprocal %78 {approx = true} : vector<8x1xf32> -> vector<8x1xf32>
    %84 = vector.broadcast %83 : vector<8x1xf32> to vector<8x128xf32>
    %85 = arith.mulf %82, %84 : vector<8x128xf32>
    %86 = arith.truncf %85 : vector<8x128xf32> to vector<8x128xbf16>
    %c1_49 = arith.constant 1 : index
    %c0_50 = arith.constant 0 : index
    %c0_51 = arith.constant 0 : index
    %87 = vector.load %arg16[%c1_49, %c0_50, %c0_51] : memref<4x128x128xbf16, #tpu.memory_space<vmem>>, vector<1x128x128xbf16>
    %88 = vector.shape_cast %87 : vector<1x128x128xbf16> to vector<128x128xbf16>
    %cst_52 = arith.constant dense<0.000000e+00> : vector<8x128xf32>
    %89 = tpu.matmul %86, %88, %cst_52 {dimension_numbers = #tpu.dot_dimension_numbers<[1], [0], [0], [1], [0, 0, 1, 1], [], []>} : vector<8x128xbf16>, vector<128x128xbf16>, vector<8x128xf32> -> vector<8x128xf32>
    %90 = arith.addf %60, %89 : vector<8x128xf32>
    %c2 = arith.constant 2 : index
    %c0_53 = arith.constant 0 : index
    %c0_54 = arith.constant 0 : index
    %91 = vector.load %arg6[%c2, %c0_53, %c0_54] : memref<4x32x128xbf16, #tpu.memory_space<vmem>>, vector<1x32x128xbf16>
    %92 = vector.shape_cast %91 : vector<1x32x128xbf16> to vector<32x128xbf16>
    %cst_55 = arith.constant dense<0.000000e+00> : vector<8x128xf32>
    %93 = tpu.matmul %29, %92, %cst_55 {dimension_numbers = #tpu.dot_dimension_numbers<[1], [0], [0], [1], [0, 0, 1, 1], [], []>} : vector<8x32xbf16>, vector<32x128xbf16>, vector<8x128xf32> -> vector<8x128xf32>
    %c2_56 = arith.constant 2 : index
    %c0_57 = arith.constant 0 : index
    %c0_58 = arith.constant 0 : index
    %94 = vector.load %arg7[%c2_56, %c0_57, %c0_58] : memref<4x1x128xf32, #tpu.memory_space<vmem>>, vector<1x1x128xf32>
    %95 = vector.shape_cast %94 : vector<1x1x128xf32> to vector<1x128xf32>
    %96 = vector.broadcast %95 : vector<1x128xf32> to vector<8x128xf32>
    %97 = arith.addf %93, %96 : vector<8x128xf32>
    %98 = arith.truncf %97 : vector<8x128xf32> to vector<8x128xbf16>
    %c2_59 = arith.constant 2 : index
    %c0_60 = arith.constant 0 : index
    %c0_61 = arith.constant 0 : index
    %99 = vector.load %arg19[%c2_59, %c0_60, %c0_61] : memref<4x8x128xbf16, #tpu.memory_space<vmem>>, vector<1x8x128xbf16>
    %100 = vector.shape_cast %99 : vector<1x8x128xbf16> to vector<8x128xbf16>
    %cst_62 = arith.constant dense<0.000000e+00> : vector<8x8xf32>
    %101 = tpu.matmul %98, %100, %cst_62 {dimension_numbers = #tpu.dot_dimension_numbers<[1], [1], [0], [0], [0, 0, 1, 0], [], []>} : vector<8x128xbf16>, vector<8x128xbf16>, vector<8x8xf32> -> vector<8x8xf32>
    %cst_63 = arith.constant dense<0xFF800000> : vector<8xf32>
    %102 = vector.multi_reduction <maximumf>, %101, %cst_63 [1] : vector<8x8xf32> to vector<8xf32>
    %103 = vector.shape_cast %102 : vector<8xf32> to vector<8x1xf32>
    %104 = vector.broadcast %103 : vector<8x1xf32> to vector<8x8xf32>
    %105 = arith.subf %101, %104 : vector<8x8xf32>
    %106 = math.exp %105 : vector<8x8xf32>
    %cst_64 = arith.constant dense<0.000000e+00> : vector<8xf32>
    %107 = vector.multi_reduction <add>, %106, %cst_64 [1] : vector<8x8xf32> to vector<8xf32>
    %108 = vector.shape_cast %107 : vector<8xf32> to vector<8x1xf32>
    %109 = arith.truncf %106 : vector<8x8xf32> to vector<8x8xbf16>
    %c2_65 = arith.constant 2 : index
    %c0_66 = arith.constant 0 : index
    %c0_67 = arith.constant 0 : index
    %110 = vector.load %arg20[%c2_65, %c0_66, %c0_67] : memref<4x8x128xbf16, #tpu.memory_space<vmem>>, vector<1x8x128xbf16>
    %111 = vector.shape_cast %110 : vector<1x8x128xbf16> to vector<8x128xbf16>
    %cst_68 = arith.constant dense<0.000000e+00> : vector<8x128xf32>
    %112 = tpu.matmul %109, %111, %cst_68 {dimension_numbers = #tpu.dot_dimension_numbers<[1], [0], [0], [1], [0, 0, 1, 1], [], []>} : vector<8x8xbf16>, vector<8x128xbf16>, vector<8x128xf32> -> vector<8x128xf32>
    %113 = tpu.reciprocal %108 {approx = true} : vector<8x1xf32> -> vector<8x1xf32>
    %114 = vector.broadcast %113 : vector<8x1xf32> to vector<8x128xf32>
    %115 = arith.mulf %112, %114 : vector<8x128xf32>
    %116 = arith.truncf %115 : vector<8x128xf32> to vector<8x128xbf16>
    %c2_69 = arith.constant 2 : index
    %c0_70 = arith.constant 0 : index
    %c0_71 = arith.constant 0 : index
    %117 = vector.load %arg16[%c2_69, %c0_70, %c0_71] : memref<4x128x128xbf16, #tpu.memory_space<vmem>>, vector<1x128x128xbf16>
    %118 = vector.shape_cast %117 : vector<1x128x128xbf16> to vector<128x128xbf16>
    %cst_72 = arith.constant dense<0.000000e+00> : vector<8x128xf32>
    %119 = tpu.matmul %116, %118, %cst_72 {dimension_numbers = #tpu.dot_dimension_numbers<[1], [0], [0], [1], [0, 0, 1, 1], [], []>} : vector<8x128xbf16>, vector<128x128xbf16>, vector<8x128xf32> -> vector<8x128xf32>
    %120 = arith.addf %90, %119 : vector<8x128xf32>
    %c3 = arith.constant 3 : index
    %c0_73 = arith.constant 0 : index
    %c0_74 = arith.constant 0 : index
    %121 = vector.load %arg6[%c3, %c0_73, %c0_74] : memref<4x32x128xbf16, #tpu.memory_space<vmem>>, vector<1x32x128xbf16>
    %122 = vector.shape_cast %121 : vector<1x32x128xbf16> to vector<32x128xbf16>
    %cst_75 = arith.constant dense<0.000000e+00> : vector<8x128xf32>
    %123 = tpu.matmul %29, %122, %cst_75 {dimension_numbers = #tpu.dot_dimension_numbers<[1], [0], [0], [1], [0, 0, 1, 1], [], []>} : vector<8x32xbf16>, vector<32x128xbf16>, vector<8x128xf32> -> vector<8x128xf32>
    %c3_76 = arith.constant 3 : index
    %c0_77 = arith.constant 0 : index
    %c0_78 = arith.constant 0 : index
    %124 = vector.load %arg7[%c3_76, %c0_77, %c0_78] : memref<4x1x128xf32, #tpu.memory_space<vmem>>, vector<1x1x128xf32>
    %125 = vector.shape_cast %124 : vector<1x1x128xf32> to vector<1x128xf32>
    %126 = vector.broadcast %125 : vector<1x128xf32> to vector<8x128xf32>
    %127 = arith.addf %123, %126 : vector<8x128xf32>
    %128 = arith.truncf %127 : vector<8x128xf32> to vector<8x128xbf16>
    %c3_79 = arith.constant 3 : index
    %c0_80 = arith.constant 0 : index
    %c0_81 = arith.constant 0 : index
    %129 = vector.load %arg19[%c3_79, %c0_80, %c0_81] : memref<4x8x128xbf16, #tpu.memory_space<vmem>>, vector<1x8x128xbf16>
    %130 = vector.shape_cast %129 : vector<1x8x128xbf16> to vector<8x128xbf16>
    %cst_82 = arith.constant dense<0.000000e+00> : vector<8x8xf32>
    %131 = tpu.matmul %128, %130, %cst_82 {dimension_numbers = #tpu.dot_dimension_numbers<[1], [1], [0], [0], [0, 0, 1, 0], [], []>} : vector<8x128xbf16>, vector<8x128xbf16>, vector<8x8xf32> -> vector<8x8xf32>
    %cst_83 = arith.constant dense<0xFF800000> : vector<8xf32>
    %132 = vector.multi_reduction <maximumf>, %131, %cst_83 [1] : vector<8x8xf32> to vector<8xf32>
    %133 = vector.shape_cast %132 : vector<8xf32> to vector<8x1xf32>
    %134 = vector.broadcast %133 : vector<8x1xf32> to vector<8x8xf32>
    %135 = arith.subf %131, %134 : vector<8x8xf32>
    %136 = math.exp %135 : vector<8x8xf32>
    %cst_84 = arith.constant dense<0.000000e+00> : vector<8xf32>
    %137 = vector.multi_reduction <add>, %136, %cst_84 [1] : vector<8x8xf32> to vector<8xf32>
    %138 = vector.shape_cast %137 : vector<8xf32> to vector<8x1xf32>
    %139 = arith.truncf %136 : vector<8x8xf32> to vector<8x8xbf16>
    %c3_85 = arith.constant 3 : index
    %c0_86 = arith.constant 0 : index
    %c0_87 = arith.constant 0 : index
    %140 = vector.load %arg20[%c3_85, %c0_86, %c0_87] : memref<4x8x128xbf16, #tpu.memory_space<vmem>>, vector<1x8x128xbf16>
    %141 = vector.shape_cast %140 : vector<1x8x128xbf16> to vector<8x128xbf16>
    %cst_88 = arith.constant dense<0.000000e+00> : vector<8x128xf32>
    %142 = tpu.matmul %139, %141, %cst_88 {dimension_numbers = #tpu.dot_dimension_numbers<[1], [0], [0], [1], [0, 0, 1, 1], [], []>} : vector<8x8xbf16>, vector<8x128xbf16>, vector<8x128xf32> -> vector<8x128xf32>
    %143 = tpu.reciprocal %138 {approx = true} : vector<8x1xf32> -> vector<8x1xf32>
    %144 = vector.broadcast %143 : vector<8x1xf32> to vector<8x128xf32>
    %145 = arith.mulf %142, %144 : vector<8x128xf32>
    %146 = arith.truncf %145 : vector<8x128xf32> to vector<8x128xbf16>
    %c3_89 = arith.constant 3 : index
    %c0_90 = arith.constant 0 : index
    %c0_91 = arith.constant 0 : index
    %147 = vector.load %arg16[%c3_89, %c0_90, %c0_91] : memref<4x128x128xbf16, #tpu.memory_space<vmem>>, vector<1x128x128xbf16>
    %148 = vector.shape_cast %147 : vector<1x128x128xbf16> to vector<128x128xbf16>
    %cst_92 = arith.constant dense<0.000000e+00> : vector<8x128xf32>
    %149 = tpu.matmul %146, %148, %cst_92 {dimension_numbers = #tpu.dot_dimension_numbers<[1], [0], [0], [1], [0, 0, 1, 1], [], []>} : vector<8x128xbf16>, vector<128x128xbf16>, vector<8x128xf32> -> vector<8x128xf32>
    %150 = arith.addf %120, %149 : vector<8x128xf32>
    %c0_93 = arith.constant 0 : index
    %c0_94 = arith.constant 0 : index
    %151 = vector.load %arg17[%c0_93, %c0_94] : memref<1x128xf32, #tpu.memory_space<vmem>>, vector<1x128xf32>
    %152 = vector.broadcast %151 : vector<1x128xf32> to vector<8x128xf32>
    %153 = arith.addf %150, %152 : vector<8x128xf32>
    %c0_95 = arith.constant 0 : index
    %c0_96 = arith.constant 0 : index
    %c0_97 = arith.constant 0 : index
    %154 = vector.load %arg18[%c0_95, %c0_96, %c0_97] : memref<1x8x128xf32, #tpu.memory_space<vmem>>, vector<1x8x128xf32>
    %155 = vector.shape_cast %154 : vector<1x8x128xf32> to vector<8x128xf32>
    %156 = vector.shape_cast %153 : vector<8x128xf32> to vector<1x8x128xf32>
    tpu.vector_store %arg18[%c0_95, %c0_96, %c0_97], %156 {strides = array<i32>} : memref<1x8x128xf32, #tpu.memory_space<vmem>>, vector<1x8x128xf32>,
    return
  }
  func.func @transform_0(%arg0: i32, %arg1: i32) -> (i32, i32, i32) {
    %c0_i32 = arith.constant 0 : i32
    %c0_i32_0 = arith.constant 0 : i32
    return %arg0, %arg1, %c0_i32 : i32, i32, i32
  }
  func.func @transform_1(%arg0: i32, %arg1: i32) -> (i32, i32, i32) {
    %c0_i32 = arith.constant 0 : i32
    %c0_i32_0 = arith.constant 0 : i32
    %c0_i32_1 = arith.constant 0 : i32
    return %arg0, %c0_i32, %c0_i32_0 : i32, i32, i32
  }
  func.func @transform_2(%arg0: i32, %arg1: i32) -> (i32, i32) {
    %c0_i32 = arith.constant 0 : i32
    %c0_i32_0 = arith.constant 0 : i32
    %c0_i32_1 = arith.constant 0 : i32
    return %c0_i32, %c0_i32_0 : i32, i32
  }
  func.func @transform_3(%arg0: i32, %arg1: i32) -> (i32, i32) {
    %c0_i32 = arith.constant 0 : i32
    %c0_i32_0 = arith.constant 0 : i32
    %c0_i32_1 = arith.constant 0 : i32
    return %c0_i32, %c0_i32_0 : i32, i32
  }
  func.func @transform_4(%arg0: i32, %arg1: i32) -> (i32, i32, i32) {
    %c0_i32 = arith.constant 0 : i32
    %c0_i32_0 = arith.constant 0 : i32
    %c0_i32_1 = arith.constant 0 : i32
    %c0_i32_2 = arith.constant 0 : i32
    return %c0_i32, %c0_i32_0, %c0_i32_1 : i32, i32, i32
  }
  func.func @transform_5(%arg0: i32, %arg1: i32) -> (i32, i32, i32) {
    %c0_i32 = arith.constant 0 : i32
    %c0_i32_0 = arith.constant 0 : i32
    %c0_i32_1 = arith.constant 0 : i32
    %c0_i32_2 = arith.constant 0 : i32
    return %c0_i32, %c0_i32_0, %c0_i32_1 : i32, i32, i32
  }
  func.func @transform_6(%arg0: i32, %arg1: i32) -> (i32, i32) {
    %c0_i32 = arith.constant 0 : i32
    %c0_i32_0 = arith.constant 0 : i32
    %c0_i32_1 = arith.constant 0 : i32
    return %c0_i32, %c0_i32_0 : i32, i32
  }
  func.func @transform_7(%arg0: i32, %arg1: i32) -> (i32, i32) {
    %c0_i32 = arith.constant 0 : i32
    %c0_i32_0 = arith.constant 0 : i32
    %c0_i32_1 = arith.constant 0 : i32
    return %c0_i32, %c0_i32_0 : i32, i32
  }
  func.func @transform_8(%arg0: i32, %arg1: i32) -> (i32, i32, i32) {
    %c0_i32 = arith.constant 0 : i32
    %c0_i32_0 = arith.constant 0 : i32
    %c0_i32_1 = arith.constant 0 : i32
    %c0_i32_2 = arith.constant 0 : i32
    return %c0_i32, %c0_i32_0, %c0_i32_1 : i32, i32, i32
  }
  func.func @transform_9(%arg0: i32, %arg1: i32) -> (i32, i32, i32) {
    %c0_i32 = arith.constant 0 : i32
    %c0_i32_0 = arith.constant 0 : i32
    %c0_i32_1 = arith.constant 0 : i32
    %c0_i32_2 = arith.constant 0 : i32
    return %c0_i32, %c0_i32_0, %c0_i32_1 : i32, i32, i32
  }
  func.func @transform_10(%arg0: i32, %arg1: i32) -> (i32, i32) {
    %c0_i32 = arith.constant 0 : i32
    %c0_i32_0 = arith.constant 0 : i32
    %c0_i32_1 = arith.constant 0 : i32
    return %c0_i32, %c0_i32_0 : i32, i32
  }
  func.func @transform_11(%arg0: i32, %arg1: i32) -> (i32, i32) {
    %c0_i32 = arith.constant 0 : i32
    %c0_i32_0 = arith.constant 0 : i32
    %c0_i32_1 = arith.constant 0 : i32
    return %c0_i32, %c0_i32_0 : i32, i32
  }
  func.func @transform_12(%arg0: i32, %arg1: i32) -> (i32, i32, i32) {
    %c0_i32 = arith.constant 0 : i32
    %c0_i32_0 = arith.constant 0 : i32
    %c0_i32_1 = arith.constant 0 : i32
    %c0_i32_2 = arith.constant 0 : i32
    return %c0_i32, %c0_i32_0, %c0_i32_1 : i32, i32, i32
  }
  func.func @transform_13(%arg0: i32, %arg1: i32) -> (i32, i32, i32) {
    %c0_i32 = arith.constant 0 : i32
    %c0_i32_0 = arith.constant 0 : i32
    %c0_i32_1 = arith.constant 0 : i32
    %c0_i32_2 = arith.constant 0 : i32
    return %c0_i32, %c0_i32_0, %c0_i32_1 : i32, i32, i32
  }
  func.func @transform_14(%arg0: i32, %arg1: i32) -> (i32, i32, i32) {
    %c0_i32 = arith.constant 0 : i32
    %c0_i32_0 = arith.constant 0 : i32
    %c0_i32_1 = arith.constant 0 : i32
    %c0_i32_2 = arith.constant 0 : i32
    return %c0_i32, %c0_i32_0, %c0_i32_1 : i32, i32, i32
  }
  func.func @transform_15(%arg0: i32, %arg1: i32) -> (i32, i32) {
    %c0_i32 = arith.constant 0 : i32
    %c0_i32_0 = arith.constant 0 : i32
    %c0_i32_1 = arith.constant 0 : i32
    return %c0_i32, %c0_i32_0 : i32, i32
  }
  func.func @transform_16(%arg0: i32, %arg1: i32) -> (i32, i32, i32) {
    %c0_i32 = arith.constant 0 : i32
    %c0_i32_0 = arith.constant 0 : i32
    return %arg0, %arg1, %c0_i32 : i32, i32, i32
  }
}

</mosaic_0001>

<llo_original>
// kernel: tpu_custom_call.1
$region0: #{tpu_custom_call.1}
  #allocation0 [shape = 'u32[]', space=smem, size = 0x4, offset = 0x4, fixed_abs, tag = 'smem constant byte address 0x4 - core index']
  #allocation1 [shape = 'u32[72,128]{1,0:T(1,128)}', space=vmem, size = 0x9000, scoped, tag = 'internal scratch']
  #allocation2 [shape = 'bf16[4,8,128]{2,1,0:T(8,128)(2,1)}', space=vmem, size = 0x2000, scoped, tag = 'scratch operand']
  #allocation3 [shape = 'bf16[4,8,128]{2,1,0:T(8,128)(2,1)}', space=vmem, size = 0x2000, scoped, tag = 'scratch operand']
  %s0 = inlined_call_operand.hbm [shape: f32[2,8,32], index: 0, kind: input, shape index: {}]
  %s1 = inlined_call_operand.hbm [shape: f32[2,8,48], index: 1, kind: input, shape index: {}]
  %s2 = inlined_call_operand.hbm [shape: f32[1,32], index: 2, kind: input, shape index: {}]
  %s3 = inlined_call_operand.hbm [shape: f32[1,32], index: 3, kind: input, shape index: {}]
  %s4 = inlined_call_operand.hbm [shape: bf16[4,32,128], index: 4, kind: input, shape index: {}]
  %s5 = inlined_call_operand.vmem [shape: f32[4,1,128], index: 5, kind: input, shape index: {}]
  %s6 = inlined_call_operand.hbm [shape: f32[1,48], index: 6, kind: input, shape index: {}]
  %s7 = inlined_call_operand.hbm [shape: f32[1,48], index: 7, kind: input, shape index: {}]
  %s8 = inlined_call_operand.hbm [shape: bf16[4,48,128], index: 8, kind: input, shape index: {}]
  %s9 = inlined_call_operand.vmem [shape: f32[4,1,128], index: 9, kind: input, shape index: {}]
  %s10 = inlined_call_operand.hbm [shape: f32[1,48], index: 10, kind: input, shape index: {}]
  %s11 = inlined_call_operand.hbm [shape: f32[1,48], index: 11, kind: input, shape index: {}]
  %s12 = inlined_call_operand.hbm [shape: bf16[4,48,128], index: 12, kind: input, shape index: {}]
  %s13 = inlined_call_operand.vmem [shape: f32[4,1,128], index: 13, kind: input, shape index: {}]
  %s14 = inlined_call_operand.hbm [shape: bf16[4,128,128], index: 14, kind: input, shape index: {}]
  %s15 = inlined_call_operand.vmem [shape: f32[1,128], index: 15, kind: input, shape index: {}]
  %s16 = inlined_call_operand.hbm [shape: f32[2,8,128], index: 16, kind: output, shape index: {}]
  %s17 = sld [smem:[#allocation0]]
  $region149: #{tpu_custom_call.1} parent=0
    _
  %s19 = ssub.s32 1, %s17
  %s20 = scalar_select 0, %s19, %s17
  $region1: #{tpu_custom_call.1} parent=0
    #allocation4 [shape = 'u8[8192]{0}', space=vmem, size = 0x2000, scoped, tag = 'input window, operand 0']
    #allocation5 [shape = 's32[2]{0}', space=sflag, size = 0x8, scoped, tag = 'scoped memory for tpu_custom_call.1']
    #allocation6 [shape = 's32[2]{0}', space=sflag, size = 0x8, scoped, tag = 'scoped memory for tpu_custom_call.1']
    #allocation7 [shape = 'u8[8192]{0}', space=vmem, size = 0x2000, scoped, tag = 'input window, operand 1']
    #allocation8 [shape = 's32[2]{0}', space=sflag, size = 0x8, scoped, tag = 'scoped memory for tpu_custom_call.1']
    #allocation9 [shape = 'u8[512]{0}', space=vmem, size = 0x400, scoped, tag = 'input window, operand 2, single buffered']
    #allocation10 [shape = 'u8[512]{0}', space=vmem, size = 0x400, scoped, tag = 'input window, operand 3, single buffered']
    #allocation11 [shape = 's32[1]{0}', space=sflag, size = 0x4, scoped, tag = 'scoped memory for tpu_custom_call.1']
    #allocation12 [shape = 'u8[32768]{0}', space=vmem, size = 0x8000, scoped, tag = 'input window, operand 4, single buffered']
    #allocation13 [shape = 'u8[512]{0}', space=vmem, size = 0x400, scoped, tag = 'input window, operand 6, single buffered']
    #allocation14 [shape = 's32[1]{0}', space=sflag, size = 0x4, scoped, tag = 'scoped memory for tpu_custom_call.1']
    #allocation15 [shape = 'u8[512]{0}', space=vmem, size = 0x400, scoped, tag = 'input window, operand 7, single buffered']
    #allocation16 [shape = 'u8[49152]{0}', space=vmem, size = 0xc000, scoped, tag = 'input window, operand 8, single buffered']
    #allocation17 [shape = 's32[1]{0}', space=sflag, size = 0x4, scoped, tag = 'scoped memory for tpu_custom_call.1']
    #allocation18 [shape = 'u8[512]{0}', space=vmem, size = 0x400, scoped, tag = 'input window, operand 10, single buffered']
    #allocation19 [shape = 'u8[512]{0}', space=vmem, size = 0x400, scoped, tag = 'input window, operand 11, single buffered']
    #allocation20 [shape = 's32[1]{0}', space=sflag, size = 0x4, scoped, tag = 'scoped memory for tpu_custom_call.1']
    #allocation21 [shape = 'u8[49152]{0}', space=vmem, size = 0xc000, scoped, tag = 'input window, operand 12, single buffered']
    #allocation22 [shape = 'u8[131072]{0}', space=vmem, size = 0x20000, scoped, tag = 'input window, operand 14, single buffered']
    #allocation23 [shape = 's32[1]{0}', space=sflag, size = 0x4, scoped, tag = 'scoped memory for tpu_custom_call.1']
    #allocation24 [shape = 'u8[8192]{0}', space=vmem, size = 0x2000, scoped, tag = 'output window, operand 0']
    %21 = vsyncpa [#allocation5], 0
    %s22 = scalar_lea.sflag [#allocation5], 1
    %23 = vsyncpa %s22, 0
    %24 = vsyncpa [#allocation8], 0
    %s25 = scalar_lea.sflag [#allocation8], 1
    %26 = vsyncpa %s25, 0
    %27 = vsyncpa [#allocation11], 0
    %28 = vsyncpa [#allocation14], 0
    %29 = vsyncpa [#allocation17], 0
    %30 = vsyncpa [#allocation20], 0
    %31 = vsyncpa [#allocation23], 0
    %32 = vsyncpa [#allocation6], 0
    %s33 = scalar_lea.sflag [#allocation6], 1
    %34 = vsyncpa %s33, 0
    loop: start=0, step=1, limit=4
    $region2: #{tpu_custom_call.1} parent=1 // loop_pre_header
      _
    $region3: #{tpu_custom_call.1} parent=1 // loop_header
      %s36 = sphi 0, %s40
      %p37 = scmp.ge.s32.totalorder %s36, 4
      %s43 = sphi 0, %s55
      %s44 = sphi 0, %s51
      %s45 = sphi 0, %s43
      %s46 = sphi 0, %s44
      %s47 = sphi 0, %s45
      %s48 = sphi 0, %s46
      %s60 = sphi 0, %s62
      %s63 = sphi 0, %s60
      %s64 = sphi 0, %s63
      %s80 = sphi 0, %s64
      %s86 = sphi 0, %s88
      %s89 = sphi 0, %s86
      %s90 = sphi 0, %s89
      %s106 = sphi 0, %s90
      %s110 = sphi 0, %s110
      %s112 = sphi 0, %s110
      %s113 = sphi 0, %s112
      %s127 = sphi 0, %s113
      %s131 = sphi 0, %s131
      %s133 = sphi 0, %s131
      %s134 = sphi 0, %s133
      %s148 = sphi 0, %s134
      %s152 = sphi 0, %s152
      %s154 = sphi 0, %s152
      %s155 = sphi 0, %s154
      %s169 = sphi 0, %s155
      %s173 = sphi 0, %s173
      %s175 = sphi 0, %s173
      %s176 = sphi 0, %s175
      %s190 = sphi 0, %s176
      %s194 = sphi 0, %s194
      %s196 = sphi 0, %s194
      %s197 = sphi 0, %s196
      %s211 = sphi 0, %s197
      %s215 = sphi 0, %s215
      %s217 = sphi 0, %s215
      %s218 = sphi 0, %s217
      %s232 = sphi 0, %s218
      %s236 = sphi 0, %s236
      %s238 = sphi 0, %s236
      %s239 = sphi 0, %s238
      %s253 = sphi 0, %s239
      %s257 = sphi 0, %s257
      %s259 = sphi 0, %s257
      %s260 = sphi 0, %s259
      %s274 = sphi 0, %s260
      %s278 = sphi 0, %s278
      %s280 = sphi 0, %s278
      %s281 = sphi 0, %s280
      %s295 = sphi 0, %s281
      %s299 = sphi 0, %s299
      %s301 = sphi 0, %s299
      %s302 = sphi 0, %s301
      %s316 = sphi 0, %s302
      %s320 = sphi 0, %s320
      %s322 = sphi 0, %s320
      %s323 = sphi 0, %s322
      %s337 = sphi 0, %s323
      %s341 = sphi 0, %s341
      %s343 = sphi 0, %s341
      %s344 = sphi 0, %s343
      %s358 = sphi 0, %s344
      %s362 = sphi 0, %s362
      %s364 = sphi 0, %s362
      %s365 = sphi 0, %s364
      %s379 = sphi 0, %s365
      %s383 = sphi 0, %s383
      %s385 = sphi 0, %s383
      %s386 = sphi 0, %s385
      %s400 = sphi 0, %s386
      %s408 = sphi 0, %s410
      %s411 = sphi 0, %s408
      %s412 = sphi 0, %s411
      %s428 = sphi 0, %s412
    $region4: #{tpu_custom_call.1} parent=1 // loop_header_branch
      %39 = sbr.rel (%p37) target = $region8
    $region5: #{tpu_custom_call.1} parent=1 // loop_body
      %s41 = ssub.s32 %s36, 1
      %s42 = ssub.s32 %s36, 2
      %s49 = sadd.s32 1, %s44
      %p50 = scmp.ge.s32.totalorder %s49, 1
      %s51 = scalar_select %p50, 0, %s49
      %s52 = sadd.s32 1, %s43
      %s53 = scalar_select %p50, %s52, %s43
      %p54 = scmp.ge.s32.totalorder %s53, 2
      %s55 = scalar_select %p54, 0, %s53
      %s56 = ssub.s32 %s43, %s55
      %s57 = ssub.s32 %s44, %s51
      %s58 = sor.u32 %s56, %s57
      %p59 = scmp.eq.s32.totalorder %s58, 0
      %s61 = sadd.s32 %s60, 1
      %s62 = scalar_select %p59, %s60, %s61
      %p65 = pneg %p59
      %p66 = scmp.eq.s32.totalorder %s36, 1
      %p67 = por %p65, %p66
      %p68 = scmp.ne.s32.totalorder %s60, %s63
      %p69 = scmp.eq.s32.totalorder %s36, 0
      %p70 = por %p68, %p69
      %p71 = scmp.ne.s32.totalorder %s60, %s63
      %p72 = scmp.eq.s32.totalorder %s41, 1
      %p73 = por %p71, %p72
      %p74 = scmp.ne.s32.totalorder %s63, %s64
      %p75 = scmp.eq.s32.totalorder %s41, 0
      %p76 = por %p74, %p75
      %p77 = scmp.ne.s32.totalorder %s63, %s64
      %p78 = scmp.eq.s32.totalorder %s42, 1
      %p79 = por %p77, %p78
      %p81 = scmp.ne.s32.totalorder %s64, %s80
      %p82 = scmp.eq.s32.totalorder %s42, 0
      %p83 = por %p81, %p82
      %s84 = ssub.s32 %s43, %s55
      %p85 = scmp.eq.s32.totalorder %s84, 0
      %s87 = sadd.s32 %s86, 1
      %s88 = scalar_select %p85, %s86, %s87
      %p91 = pneg %p85
      %p92 = scmp.eq.s32.totalorder %s36, 1
      %p93 = por %p91, %p92
      %p94 = scmp.ne.s32.totalorder %s86, %s89
      %p95 = scmp.eq.s32.totalorder %s36, 0
      %p96 = por %p94, %p95
      %p97 = scmp.ne.s32.totalorder %s86, %s89
      %p98 = scmp.eq.s32.totalorder %s41, 1
      %p99 = por %p97, %p98
      %p100 = scmp.ne.s32.totalorder %s89, %s90
      %p101 = scmp.eq.s32.totalorder %s41, 0
      %p102 = por %p100, %p101
      %p103 = scmp.ne.s32.totalorder %s89, %s90
      %p104 = scmp.eq.s32.totalorder %s42, 1
      %p105 = por %p103, %p104
      %p107 = scmp.ne.s32.totalorder %s90, %s106
      %p108 = scmp.eq.s32.totalorder %s42, 0
      %p109 = por %p107, %p108
      %s111 = sadd.s32 %s110, 1
      %p114 = scmp.eq.s32.totalorder %s36, 1
      %p115 = scmp.ne.s32.totalorder %s110, %s112
      %p116 = scmp.eq.s32.totalorder %s36, 0
      %p117 = por %p115, %p116
      %p118 = scmp.ne.s32.totalorder %s110, %s112
      %p119 = scmp.eq.s32.totalorder %s41, 1
      %p120 = por %p118, %p119
      %p121 = scmp.ne.s32.totalorder %s112, %s113
      %p122 = scmp.eq.s32.totalorder %s41, 0
      %p123 = por %p121, %p122
      %p124 = scmp.ne.s32.totalorder %s112, %s113
      %p125 = scmp.eq.s32.totalorder %s42, 1
      %p126 = por %p124, %p125
      %p128 = scmp.ne.s32.totalorder %s113, %s127
      %p129 = scmp.eq.s32.totalorder %s42, 0
      %p130 = por %p128, %p129
      %s132 = sadd.s32 %s131, 1
      %p135 = scmp.eq.s32.totalorder %s36, 1
      %p136 = scmp.ne.s32.totalorder %s131, %s133
      %p137 = scmp.eq.s32.totalorder %s36, 0
      %p138 = por %p136, %p137
      %p139 = scmp.ne.s32.totalorder %s131, %s133
      %p140 = scmp.eq.s32.totalorder %s41, 1
      %p141 = por %p139, %p140
      %p142 = scmp.ne.s32.totalorder %s133, %s134
      %p143 = scmp.eq.s32.totalorder %s41, 0
      %p144 = por %p142, %p143
      %p145 = scmp.ne.s32.totalorder %s133, %s134
      %p146 = scmp.eq.s32.totalorder %s42, 1
      %p147 = por %p145, %p146
      %p149 = scmp.ne.s32.totalorder %s134, %s148
      %p150 = scmp.eq.s32.totalorder %s42, 0
      %p151 = por %p149, %p150
      %s153 = sadd.s32 %s152, 1
      %p156 = scmp.eq.s32.totalorder %s36, 1
      %p157 = scmp.ne.s32.totalorder %s152, %s154
      %p158 = scmp.eq.s32.totalorder %s36, 0
      %p159 = por %p157, %p158
      %p160 = scmp.ne.s32.totalorder %s152, %s154
      %p161 = scmp.eq.s32.totalorder %s41, 1
      %p162 = por %p160, %p161
      %p163 = scmp.ne.s32.totalorder %s154, %s155
      %p164 = scmp.eq.s32.totalorder %s41, 0
      %p165 = por %p163, %p164
      %p166 = scmp.ne.s32.totalorder %s154, %s155
      %p167 = scmp.eq.s32.totalorder %s42, 1
      %p168 = por %p166, %p167
      %p170 = scmp.ne.s32.totalorder %s155, %s169
      %p171 = scmp.eq.s32.totalorder %s42, 0
      %p172 = por %p170, %p171
      %s174 = sadd.s32 %s173, 1
      %p177 = scmp.eq.s32.totalorder %s36, 1
      %p178 = scmp.ne.s32.totalorder %s173, %s175
      %p179 = scmp.eq.s32.totalorder %s36, 0
      %p180 = por %p178, %p179
      %p181 = scmp.ne.s32.totalorder %s173, %s175
      %p182 = scmp.eq.s32.totalorder %s41, 1
      %p183 = por %p181, %p182
      %p184 = scmp.ne.s32.totalorder %s175, %s176
      %p185 = scmp.eq.s32.totalorder %s41, 0
      %p186 = por %p184, %p185
      %p187 = scmp.ne.s32.totalorder %s175, %s176
      %p188 = scmp.eq.s32.totalorder %s42, 1
      %p189 = por %p187, %p188
      %p191 = scmp.ne.s32.totalorder %s176, %s190
      %p192 = scmp.eq.s32.totalorder %s42, 0
      %p193 = por %p191, %p192
      %s195 = sadd.s32 %s194, 1
      %p198 = scmp.eq.s32.totalorder %s36, 1
      %p199 = scmp.ne.s32.totalorder %s194, %s196
      %p200 = scmp.eq.s32.totalorder %s36, 0
      %p201 = por %p199, %p200
      %p202 = scmp.ne.s32.totalorder %s194, %s196
      %p203 = scmp.eq.s32.totalorder %s41, 1
      %p204 = por %p202, %p203
      %p205 = scmp.ne.s32.totalorder %s196, %s197
      %p206 = scmp.eq.s32.totalorder %s41, 0
      %p207 = por %p205, %p206
      %p208 = scmp.ne.s32.totalorder %s196, %s197
      %p209 = scmp.eq.s32.totalorder %s42, 1
      %p210 = por %p208, %p209
      %p212 = scmp.ne.s32.totalorder %s197, %s211
      %p213 = scmp.eq.s32.totalorder %s42, 0
      %p214 = por %p212, %p213
      %s216 = sadd.s32 %s215, 1
      %p219 = scmp.eq.s32.totalorder %s36, 1
      %p220 = scmp.ne.s32.totalorder %s215, %s217
      %p221 = scmp.eq.s32.totalorder %s36, 0
      %p222 = por %p220, %p221
      %p223 = scmp.ne.s32.totalorder %s215, %s217
      %p224 = scmp.eq.s32.totalorder %s41, 1
      %p225 = por %p223, %p224
      %p226 = scmp.ne.s32.totalorder %s217, %s218
      %p227 = scmp.eq.s32.totalorder %s41, 0
      %p228 = por %p226, %p227
      %p229 = scmp.ne.s32.totalorder %s217, %s218
      %p230 = scmp.eq.s32.totalorder %s42, 1
      %p231 = por %p229, %p230
      %p233 = scmp.ne.s32.totalorder %s218, %s232
      %p234 = scmp.eq.s32.totalorder %s42, 0
      %p235 = por %p233, %p234
      %s237 = sadd.s32 %s236, 1
      %p240 = scmp.eq.s32.totalorder %s36, 1
      %p241 = scmp.ne.s32.totalorder %s236, %s238
      %p242 = scmp.eq.s32.totalorder %s36, 0
      %p243 = por %p241, %p242
      %p244 = scmp.ne.s32.totalorder %s236, %s238
      %p245 = scmp.eq.s32.totalorder %s41, 1
      %p246 = por %p244, %p245
      %p247 = scmp.ne.s32.totalorder %s238, %s239
      %p248 = scmp.eq.s32.totalorder %s41, 0
      %p249 = por %p247, %p248
      %p250 = scmp.ne.s32.totalorder %s238, %s239
      %p251 = scmp.eq.s32.totalorder %s42, 1
      %p252 = por %p250, %p251
      %p254 = scmp.ne.s32.totalorder %s239, %s253
      %p255 = scmp.eq.s32.totalorder %s42, 0
      %p256 = por %p254, %p255
      %s258 = sadd.s32 %s257, 1
      %p261 = scmp.eq.s32.totalorder %s36, 1
      %p262 = scmp.ne.s32.totalorder %s257, %s259
      %p263 = scmp.eq.s32.totalorder %s36, 0
      %p264 = por %p262, %p263
      %p265 = scmp.ne.s32.totalorder %s257, %s259
      %p266 = scmp.eq.s32.totalorder %s41, 1
      %p267 = por %p265, %p266
      %p268 = scmp.ne.s32.totalorder %s259, %s260
      %p269 = scmp.eq.s32.totalorder %s41, 0
      %p270 = por %p268, %p269
      %p271 = scmp.ne.s32.totalorder %s259, %s260
      %p272 = scmp.eq.s32.totalorder %s42, 1
      %p273 = por %p271, %p272
      %p275 = scmp.ne.s32.totalorder %s260, %s274
      %p276 = scmp.eq.s32.totalorder %s42, 0
      %p277 = por %p275, %p276
      %s279 = sadd.s32 %s278, 1
      %p282 = scmp.eq.s32.totalorder %s36, 1
      %p283 = scmp.ne.s32.totalorder %s278, %s280
      %p284 = scmp.eq.s32.totalorder %s36, 0
      %p285 = por %p283, %p284
      %p286 = scmp.ne.s32.totalorder %s278, %s280
      %p287 = scmp.eq.s32.totalorder %s41, 1
      %p288 = por %p286, %p287
      %p289 = scmp.ne.s32.totalorder %s280, %s281
      %p290 = scmp.eq.s32.totalorder %s41, 0
      %p291 = por %p289, %p290
      %p292 = scmp.ne.s32.totalorder %s280, %s281
      %p293 = scmp.eq.s32.totalorder %s42, 1
      %p294 = por %p292, %p293
      %p296 = scmp.ne.s32.totalorder %s281, %s295
      %p297 = scmp.eq.s32.totalorder %s42, 0
      %p298 = por %p296, %p297
      %s300 = sadd.s32 %s299, 1
      %p303 = scmp.eq.s32.totalorder %s36, 1
      %p304 = scmp.ne.s32.totalorder %s299, %s301
      %p305 = scmp.eq.s32.totalorder %s36, 0
      %p306 = por %p304, %p305
      %p307 = scmp.ne.s32.totalorder %s299, %s301
      %p308 = scmp.eq.s32.totalorder %s41, 1
      %p309 = por %p307, %p308
      %p310 = scmp.ne.s32.totalorder %s301, %s302
      %p311 = scmp.eq.s32.totalorder %s41, 0
      %p312 = por %p310, %p311
      %p313 = scmp.ne.s32.totalorder %s301, %s302
      %p314 = scmp.eq.s32.totalorder %s42, 1
      %p315 = por %p313, %p314
      %p317 = scmp.ne.s32.totalorder %s302, %s316
      %p318 = scmp.eq.s32.totalorder %s42, 0
      %p319 = por %p317, %p318
      %s321 = sadd.s32 %s320, 1
      %p324 = scmp.eq.s32.totalorder %s36, 1
      %p325 = scmp.ne.s32.totalorder %s320, %s322
      %p326 = scmp.eq.s32.totalorder %s36, 0
      %p327 = por %p325, %p326
      %p328 = scmp.ne.s32.totalorder %s320, %s322
      %p329 = scmp.eq.s32.totalorder %s41, 1
      %p330 = por %p328, %p329
      %p331 = scmp.ne.s32.totalorder %s322, %s323
      %p332 = scmp.eq.s32.totalorder %s41, 0
      %p333 = por %p331, %p332
      %p334 = scmp.ne.s32.totalorder %s322, %s323
      %p335 = scmp.eq.s32.totalorder %s42, 1
      %p336 = por %p334, %p335
      %p338 = scmp.ne.s32.totalorder %s323, %s337
      %p339 = scmp.eq.s32.totalorder %s42, 0
      %p340 = por %p338, %p339
      %s342 = sadd.s32 %s341, 1
      %p345 = scmp.eq.s32.totalorder %s36, 1
      %p346 = scmp.ne.s32.totalorder %s341, %s343
      %p347 = scmp.eq.s32.totalorder %s36, 0
      %p348 = por %p346, %p347
      %p349 = scmp.ne.s32.totalorder %s341, %s343
      %p350 = scmp.eq.s32.totalorder %s41, 1
      %p351 = por %p349, %p350
      %p352 = scmp.ne.s32.totalorder %s343, %s344
      %p353 = scmp.eq.s32.totalorder %s41, 0
      %p354 = por %p352, %p353
      %p355 = scmp.ne.s32.totalorder %s343, %s344
      %p356 = scmp.eq.s32.totalorder %s42, 1
      %p357 = por %p355, %p356
      %p359 = scmp.ne.s32.totalorder %s344, %s358
      %p360 = scmp.eq.s32.totalorder %s42, 0
      %p361 = por %p359, %p360
      %s363 = sadd.s32 %s362, 1
      %p366 = scmp.eq.s32.totalorder %s36, 1
      %p367 = scmp.ne.s32.totalorder %s362, %s364
      %p368 = scmp.eq.s32.totalorder %s36, 0
      %p369 = por %p367, %p368
      %p370 = scmp.ne.s32.totalorder %s362, %s364
      %p371 = scmp.eq.s32.totalorder %s41, 1
      %p372 = por %p370, %p371
      %p373 = scmp.ne.s32.totalorder %s364, %s365
      %p374 = scmp.eq.s32.totalorder %s41, 0
      %p375 = por %p373, %p374
      %p376 = scmp.ne.s32.totalorder %s364, %s365
      %p377 = scmp.eq.s32.totalorder %s42, 1
      %p378 = por %p376, %p377
      %p380 = scmp.ne.s32.totalorder %s365, %s379
      %p381 = scmp.eq.s32.totalorder %s42, 0
      %p382 = por %p380, %p381
      %s384 = sadd.s32 %s383, 1
      %p387 = scmp.eq.s32.totalorder %s36, 1
      %p388 = scmp.ne.s32.totalorder %s383, %s385
      %p389 = scmp.eq.s32.totalorder %s36, 0
      %p390 = por %p388, %p389
      %p391 = scmp.ne.s32.totalorder %s383, %s385
      %p392 = scmp.eq.s32.totalorder %s41, 1
      %p393 = por %p391, %p392
      %p394 = scmp.ne.s32.totalorder %s385, %s386
      %p395 = scmp.eq.s32.totalorder %s41, 0
      %p396 = por %p394, %p395
      %p397 = scmp.ne.s32.totalorder %s385, %s386
      %p398 = scmp.eq.s32.totalorder %s42, 1
      %p399 = por %p397, %p398
      %p401 = scmp.ne.s32.totalorder %s386, %s400
      %p402 = scmp.eq.s32.totalorder %s42, 0
      %p403 = por %p401, %p402
      %s404 = ssub.s32 %s43, %s55
      %s405 = ssub.s32 %s44, %s51
      %s406 = sor.u32 %s404, %s405
      %p407 = scmp.eq.s32.totalorder %s406, 0
      %s409 = sadd.s32 %s408, 1
      %s410 = scalar_select %p407, %s408, %s409
      %p413 = pneg %p407
      %p414 = scmp.eq.s32.totalorder %s36, 1
      %p415 = por %p413, %p414
      %p416 = scmp.ne.s32.totalorder %s408, %s411
      %p417 = scmp.eq.s32.totalorder %s36, 0
      %p418 = por %p416, %p417
      %p419 = scmp.ne.s32.totalorder %s408, %s411
      %p420 = scmp.eq.s32.totalorder %s41, 1
      %p421 = por %p419, %p420
      %p422 = scmp.ne.s32.totalorder %s411, %s412
      %p423 = scmp.eq.s32.totalorder %s41, 0
      %p424 = por %p422, %p423
      %p425 = scmp.ne.s32.totalorder %s411, %s412
      %p426 = scmp.eq.s32.totalorder %s42, 1
      %p427 = por %p425, %p426
      %p429 = scmp.ne.s32.totalorder %s412, %s428
      %p430 = scmp.eq.s32.totalorder %s42, 0
      %p431 = por %p429, %p430
      %p432 = scmp.le.s32.totalorder 1, %s36
      %p433 = scmp.lt.s32.totalorder %s36, 3
      %p434 = pnand %p432, %p433
      %p435 = pneg %p434
      // Predicated region
      $region9: #{tpu_custom_call.1} parent=5 // pred_check
        _
      $region10: #{tpu_custom_call.1} parent=5 // pred_check_branch
        %437 = sbr.rel (%p434) target = $region12
      $region11: #{tpu_custom_call.1} parent=5 // pred_region
        %s438 = ssub.s32 %s36, 1
        // Predicated region
        $region13: #{tpu_custom_call.1} parent=11 // pred_check
          %p439 = pneg %p123
        $region14: #{tpu_custom_call.1} parent=11 // pred_check_branch
          %441 = sbr.rel (%p439) target = $region16
        $region15: #{tpu_custom_call.1} parent=11 // pred_region
          %443 = vsyncadd [#allocation8], 0
          %s445 = sshll.u32 %s2, 4
          %s446 = int_to_ptr.hbm [resolvable:$true] %s445
          %s447 = sshll.u32 [#allocation9], 4
          %s448 = int_to_ptr.vmem [resolvable:$true] %s447
          %450 = dma.hbm_to_vmem [thread:$0]  %s446, 16, %s448, [#allocation8]
        $region16: #{tpu_custom_call.1} parent=11 // pred_fallthru
          _
        // Predicated region
        $region17: #{tpu_custom_call.1} parent=11 // pred_check
          %p451 = pneg %p144
        $region18: #{tpu_custom_call.1} parent=11 // pred_check_branch
          %453 = sbr.rel (%p451) target = $region20
        $region19: #{tpu_custom_call.1} parent=11 // pred_region
          %455 = vsyncadd [#allocation11], 0
          %s457 = sshll.u32 %s3, 4
          %s458 = int_to_ptr.hbm [resolvable:$true] %s457
          %s459 = sshll.u32 [#allocation10], 4
          %s460 = int_to_ptr.vmem [resolvable:$true] %s459
          %462 = dma.hbm_to_vmem [thread:$0]  %s458, 16, %s460, [#allocation11]
        $region20: #{tpu_custom_call.1} parent=11 // pred_fallthru
          _
        // Predicated region
        $region21: #{tpu_custom_call.1} parent=11 // pred_check
          %p463 = pneg %p165
        $region22: #{tpu_custom_call.1} parent=11 // pred_check_branch
          %465 = sbr.rel (%p463) target = $region24
        $region23: #{tpu_custom_call.1} parent=11 // pred_region
          %467 = vsyncadd [#allocation11], 0
          %s468 = sshll.u32 %s4, 4
          %s469 = int_to_ptr.hbm [resolvable:$true] %s468
          %s470 = sshll.u32 [#allocation12], 4
          %s471 = int_to_ptr.vmem [resolvable:$true] %s470
          %476 = dma.hbm_to_vmem [thread:$0]  %s469, 1024, %s471, [#allocation11], 64, 64, 4
        $region24: #{tpu_custom_call.1} parent=11 // pred_fallthru
          _
        // Predicated region
        $region25: #{tpu_custom_call.1} parent=11 // pred_check
          %p477 = pneg %p186
        $region26: #{tpu_custom_call.1} parent=11 // pred_check_branch
          %479 = sbr.rel (%p477) target = $region28
        $region27: #{tpu_custom_call.1} parent=11 // pred_region
          _
        $region28: #{tpu_custom_call.1} parent=11 // pred_fallthru
          _
        // Predicated region
        $region29: #{tpu_custom_call.1} parent=11 // pred_check
          %p480 = pneg %p207
        $region30: #{tpu_custom_call.1} parent=11 // pred_check_branch
          %482 = sbr.rel (%p480) target = $region32
        $region31: #{tpu_custom_call.1} parent=11 // pred_region
          %484 = vsyncadd [#allocation14], 0
          %s486 = sshll.u32 %s6, 4
          %s487 = int_to_ptr.hbm [resolvable:$true] %s486
          %s488 = sshll.u32 [#allocation13], 4
          %s489 = int_to_ptr.vmem [resolvable:$true] %s488
          %491 = dma.hbm_to_vmem [thread:$0]  %s487, 16, %s489, [#allocation14]
        $region32: #{tpu_custom_call.1} parent=11 // pred_fallthru
          _
        // Predicated region
        $region33: #{tpu_custom_call.1} parent=11 // pred_check
          %p492 = pneg %p228
        $region34: #{tpu_custom_call.1} parent=11 // pred_check_branch
          %494 = sbr.rel (%p492) target = $region36
        $region35: #{tpu_custom_call.1} parent=11 // pred_region
          %496 = vsyncadd [#allocation14], 0
          %s498 = sshll.u32 %s7, 4
          %s499 = int_to_ptr.hbm [resolvable:$true] %s498
          %s500 = sshll.u32 [#allocation15], 4
          %s501 = int_to_ptr.vmem [resolvable:$true] %s500
          %503 = dma.hbm_to_vmem [thread:$0]  %s499, 16, %s501, [#allocation14]
        $region36: #{tpu_custom_call.1} parent=11 // pred_fallthru
          _
        // Predicated region
        $region37: #{tpu_custom_call.1} parent=11 // pred_check
          %p504 = pneg %p249
        $region38: #{tpu_custom_call.1} parent=11 // pred_check_branch
          %506 = sbr.rel (%p504) target = $region40
        $region39: #{tpu_custom_call.1} parent=11 // pred_region
          %508 = vsyncadd [#allocation17], 0
          %s509 = sshll.u32 %s8, 4
          %s510 = int_to_ptr.hbm [resolvable:$true] %s509
          %s511 = sshll.u32 [#allocation16], 4
          %s512 = int_to_ptr.vmem [resolvable:$true] %s511
          %517 = dma.hbm_to_vmem [thread:$0]  %s510, 1536, %s512, [#allocation17], 64, 64, 4
        $region40: #{tpu_custom_call.1} parent=11 // pred_fallthru
          _
        // Predicated region
        $region41: #{tpu_custom_call.1} parent=11 // pred_check
          %p518 = pneg %p270
        $region42: #{tpu_custom_call.1} parent=11 // pred_check_branch
          %520 = sbr.rel (%p518) target = $region44
        $region43: #{tpu_custom_call.1} parent=11 // pred_region
          _
        $region44: #{tpu_custom_call.1} parent=11 // pred_fallthru
          _
        // Predicated region
        $region45: #{tpu_custom_call.1} parent=11 // pred_check
          %p521 = pneg %p291
        $region46: #{tpu_custom_call.1} parent=11 // pred_check_branch
          %523 = sbr.rel (%p521) target = $region48
        $region47: #{tpu_custom_call.1} parent=11 // pred_region
          %525 = vsyncadd [#allocation17], 0
          %s527 = sshll.u32 %s10, 4
          %s528 = int_to_ptr.hbm [resolvable:$true] %s527
          %s529 = sshll.u32 [#allocation18], 4
          %s530 = int_to_ptr.vmem [resolvable:$true] %s529
          %532 = dma.hbm_to_vmem [thread:$0]  %s528, 16, %s530, [#allocation17]
        $region48: #{tpu_custom_call.1} parent=11 // pred_fallthru
          _
        // Predicated region
        $region49: #{tpu_custom_call.1} parent=11 // pred_check
          %p533 = pneg %p312
        $region50: #{tpu_custom_call.1} parent=11 // pred_check_branch
          %535 = sbr.rel (%p533) target = $region52
        $region51: #{tpu_custom_call.1} parent=11 // pred_region
          %537 = vsyncadd [#allocation20], 0
          %s539 = sshll.u32 %s11, 4
          %s540 = int_to_ptr.hbm [resolvable:$true] %s539
          %s541 = sshll.u32 [#allocation19], 4
          %s542 = int_to_ptr.vmem [resolvable:$true] %s541
          %544 = dma.hbm_to_vmem [thread:$0]  %s540, 16, %s542, [#allocation20]
        $region52: #{tpu_custom_call.1} parent=11 // pred_fallthru
          _
        // Predicated region
        $region53: #{tpu_custom_call.1} parent=11 // pred_check
          %p545 = pneg %p333
        $region54: #{tpu_custom_call.1} parent=11 // pred_check_branch
          %547 = sbr.rel (%p545) target = $region56
        $region55: #{tpu_custom_call.1} parent=11 // pred_region
          %549 = vsyncadd [#allocation20], 0
          %s550 = sshll.u32 %s12, 4
          %s551 = int_to_ptr.hbm [resolvable:$true] %s550
          %s552 = sshll.u32 [#allocation21], 4
          %s553 = int_to_ptr.vmem [resolvable:$true] %s552
          %558 = dma.hbm_to_vmem [thread:$0]  %s551, 1536, %s553, [#allocation20], 64, 64, 4
        $region56: #{tpu_custom_call.1} parent=11 // pred_fallthru
          _
        // Predicated region
        $region57: #{tpu_custom_call.1} parent=11 // pred_check
          %p559 = pneg %p354
        $region58: #{tpu_custom_call.1} parent=11 // pred_check_branch
          %561 = sbr.rel (%p559) target = $region60
        $region59: #{tpu_custom_call.1} parent=11 // pred_region
          _
        $region60: #{tpu_custom_call.1} parent=11 // pred_fallthru
          _
        // Predicated region
        $region61: #{tpu_custom_call.1} parent=11 // pred_check
          %p562 = pneg %p375
        $region62: #{tpu_custom_call.1} parent=11 // pred_check_branch
          %564 = sbr.rel (%p562) target = $region64
        $region63: #{tpu_custom_call.1} parent=11 // pred_region
          %566 = vsyncadd [#allocation23], 0
          %s567 = sshll.u32 %s14, 4
          %s568 = int_to_ptr.hbm [resolvable:$true] %s567
          %s569 = sshll.u32 [#allocation22], 4
          %s570 = int_to_ptr.vmem [resolvable:$true] %s569
          %575 = dma.hbm_to_vmem [thread:$0]  %s568, 4096, %s570, [#allocation23], 64, 64, 4
        $region64: #{tpu_custom_call.1} parent=11 // pred_fallthru
          _
        // Predicated region
        $region65: #{tpu_custom_call.1} parent=11 // pred_check
          %p576 = pneg %p396
        $region66: #{tpu_custom_call.1} parent=11 // pred_check_branch
          %578 = sbr.rel (%p576) target = $region68
        $region67: #{tpu_custom_call.1} parent=11 // pred_region
          _
        $region68: #{tpu_custom_call.1} parent=11 // pred_fallthru
          _
      $region12: #{tpu_custom_call.1} parent=5 // pred_fallthru
        _
      %p579 = scmp.lt.s32.totalorder %s36, 2
      // Predicated region
      $region69: #{tpu_custom_call.1} parent=5 // pred_check
        %p580 = pneg %p579
      $region70: #{tpu_custom_call.1} parent=5 // pred_check_branch
        %582 = sbr.rel (%p580) target = $region72
      $region71: #{tpu_custom_call.1} parent=5 // pred_region
        // Predicated region
        $region73: #{tpu_custom_call.1} parent=71 // pred_check
          %p583 = pneg %p70
        $region74: #{tpu_custom_call.1} parent=71 // pred_check_branch
          %585 = sbr.rel (%p583) target = $region76
        $region75: #{tpu_custom_call.1} parent=71 // pred_region
          %s586 = sand.u32 %s60, 1
          %s587 = scalar_lea.sflag [#allocation5], %s586
          %s588 = sand.u32 %s60, 1
          %s589 = smul.addr %s588, 8
          %s590 = scalar_lea.vmem [#allocation4], %s589
          %592 = vsyncadd %s587, 0
          %s593 = sadd.s32 %s44, %s43
          %s594 = smul.addr %s593, 8
          %s595 = scalar_lea.hbm %s0, %s594
          %s597 = sshll.u32 %s595, 4
          %s598 = int_to_ptr.hbm [resolvable:$true] %s597
          %s599 = sshll.u32 %s590, 4
          %s600 = int_to_ptr.vmem [resolvable:$true] %s599
          %602 = dma.hbm_to_vmem [thread:$0]  %s598, 128, %s600, %s587
        $region76: #{tpu_custom_call.1} parent=71 // pred_fallthru
          _
        // Predicated region
        $region77: #{tpu_custom_call.1} parent=71 // pred_check
          %p603 = pneg %p96
        $region78: #{tpu_custom_call.1} parent=71 // pred_check_branch
          %605 = sbr.rel (%p603) target = $region80
        $region79: #{tpu_custom_call.1} parent=71 // pred_region
          %s606 = sand.u32 %s36, 1
          %s607 = scalar_lea.sflag [#allocation8], %s606
          %s608 = sand.u32 %s86, 1
          %s609 = smul.addr %s608, 8
          %s610 = scalar_lea.vmem [#allocation7], %s609
          %612 = vsyncadd %s607, 0
          %s613 = smul.addr %s43, 8
          %s614 = scalar_lea.hbm %s1, %s613
          %s616 = sshll.u32 %s614, 4
          %s617 = int_to_ptr.hbm [resolvable:$true] %s616
          %s618 = sshll.u32 %s610, 4
          %s619 = int_to_ptr.vmem [resolvable:$true] %s618
          %621 = dma.hbm_to_vmem [thread:$0]  %s617, 128, %s619, %s607
        $region80: #{tpu_custom_call.1} parent=71 // pred_fallthru
          _
      $region72: #{tpu_custom_call.1} parent=5 // pred_fallthru
        _
      %p622 = scmp.le.s32.totalorder 1, %s36
      %p623 = scmp.lt.s32.totalorder %s36, 3
      %p624 = pnand %p622, %p623
      %p625 = pneg %p624
      // Predicated region
      $region81: #{tpu_custom_call.1} parent=5 // pred_check
        _
      $region82: #{tpu_custom_call.1} parent=5 // pred_check_branch
        %627 = sbr.rel (%p624) target = $region84
      $region83: #{tpu_custom_call.1} parent=5 // pred_region
        %s628 = ssub.s32 %s36, 1
        %s629 = sand.u32 %s63, 1
        %s630 = scalar_lea.sflag [#allocation5], %s629
        %s631 = sand.u32 %s63, 1
        %s632 = smul.addr %s631, 8
        %s633 = scalar_lea.vmem [#allocation4], %s632
        // Predicated region
        $region85: #{tpu_custom_call.1} parent=83 // pred_check
          %p634 = pneg %p76
        $region86: #{tpu_custom_call.1} parent=83 // pred_check_branch
          %636 = sbr.rel (%p634) target = $region88
        $region87: #{tpu_custom_call.1} parent=83 // pred_region
          %638 = dma.done %s630, 128
        $region88: #{tpu_custom_call.1} parent=83 // pred_fallthru
          _
        %s639 = sand.u32 %s41, 1
        %s640 = scalar_lea.sflag [#allocation8], %s639
        %s641 = sand.u32 %s89, 1
        %s642 = smul.addr %s641, 8
        %s643 = scalar_lea.vmem [#allocation7], %s642
        // Predicated region
        $region89: #{tpu_custom_call.1} parent=83 // pred_check
          %p644 = pneg %p102
        $region90: #{tpu_custom_call.1} parent=83 // pred_check_branch
          %646 = sbr.rel (%p644) target = $region92
        $region91: #{tpu_custom_call.1} parent=83 // pred_region
          %648 = dma.done %s640, 128
        $region92: #{tpu_custom_call.1} parent=83 // pred_fallthru
          _
        // Predicated region
        $region93: #{tpu_custom_call.1} parent=83 // pred_check
          %p649 = pneg %p123
        $region94: #{tpu_custom_call.1} parent=83 // pred_check_branch
          %651 = sbr.rel (%p649) target = $region96
        $region95: #{tpu_custom_call.1} parent=83 // pred_region
          %653 = dma.done [#allocation8], 16
        $region96: #{tpu_custom_call.1} parent=83 // pred_fallthru
          _
        // Predicated region
        $region97: #{tpu_custom_call.1} parent=83 // pred_check
          %p654 = pneg %p144
        $region98: #{tpu_custom_call.1} parent=83 // pred_check_branch
          %656 = sbr.rel (%p654) target = $region100
        $region99: #{tpu_custom_call.1} parent=83 // pred_region
          %658 = dma.done [#allocation11], 16
        $region100: #{tpu_custom_call.1} parent=83 // pred_fallthru
          _
        // Predicated region
        $region101: #{tpu_custom_call.1} parent=83 // pred_check
          %p659 = pneg %p165
        $region102: #{tpu_custom_call.1} parent=83 // pred_check_branch
          %661 = sbr.rel (%p659) target = $region104
        $region103: #{tpu_custom_call.1} parent=83 // pred_region
          %663 = dma.done [#allocation11], 1024
        $region104: #{tpu_custom_call.1} parent=83 // pred_fallthru
          _
        // Predicated region
        $region105: #{tpu_custom_call.1} parent=83 // pred_check
          %p664 = pneg %p207
        $region106: #{tpu_custom_call.1} parent=83 // pred_check_branch
          %666 = sbr.rel (%p664) target = $region108
        $region107: #{tpu_custom_call.1} parent=83 // pred_region
          %668 = dma.done [#allocation14], 16
        $region108: #{tpu_custom_call.1} parent=83 // pred_fallthru
          _
        // Predicated region
        $region109: #{tpu_custom_call.1} parent=83 // pred_check
          %p669 = pneg %p228
        $region110: #{tpu_custom_call.1} parent=83 // pred_check_branch
          %671 = sbr.rel (%p669) target = $region112
        $region111: #{tpu_custom_call.1} parent=83 // pred_region
          %673 = dma.done [#allocation14], 16
        $region112: #{tpu_custom_call.1} parent=83 // pred_fallthru
          _
        // Predicated region
        $region113: #{tpu_custom_call.1} parent=83 // pred_check
          %p674 = pneg %p249
        $region114: #{tpu_custom_call.1} parent=83 // pred_check_branch
          %676 = sbr.rel (%p674) target = $region116
        $region115: #{tpu_custom_call.1} parent=83 // pred_region
          %678 = dma.done [#allocation17], 1536
        $region116: #{tpu_custom_call.1} parent=83 // pred_fallthru
          _
        // Predicated region
        $region117: #{tpu_custom_call.1} parent=83 // pred_check
          %p679 = pneg %p291
        $region118: #{tpu_custom_call.1} parent=83 // pred_check_branch
          %681 = sbr.rel (%p679) target = $region120
        $region119: #{tpu_custom_call.1} parent=83 // pred_region
          %683 = dma.done [#allocation17], 16
        $region120: #{tpu_custom_call.1} parent=83 // pred_fallthru
          _
        // Predicated region
        $region121: #{tpu_custom_call.1} parent=83 // pred_check
          %p684 = pneg %p312
        $region122: #{tpu_custom_call.1} parent=83 // pred_check_branch
          %686 = sbr.rel (%p684) target = $region124
        $region123: #{tpu_custom_call.1} parent=83 // pred_region
          %688 = dma.done [#allocation20], 16
        $region124: #{tpu_custom_call.1} parent=83 // pred_fallthru
          _
        // Predicated region
        $region125: #{tpu_custom_call.1} parent=83 // pred_check
          %p689 = pneg %p333
        $region126: #{tpu_custom_call.1} parent=83 // pred_check_branch
          %691 = sbr.rel (%p689) target = $region128
        $region127: #{tpu_custom_call.1} parent=83 // pred_region
          %693 = dma.done [#allocation20], 1536
        $region128: #{tpu_custom_call.1} parent=83 // pred_fallthru
          _
        // Predicated region
        $region129: #{tpu_custom_call.1} parent=83 // pred_check
          %p694 = pneg %p375
        $region130: #{tpu_custom_call.1} parent=83 // pred_check_branch
          %696 = sbr.rel (%p694) target = $region132
        $region131: #{tpu_custom_call.1} parent=83 // pred_region
          %698 = dma.done [#allocation23], 4096
        $region132: #{tpu_custom_call.1} parent=83 // pred_fallthru
          _
        %s699 = sand.u32 %s63, 1
        %s700 = scalar_lea.sflag [#allocation5], %s699
        %s701 = sand.u32 %s63, 1
        %s702 = smul.addr %s701, 8
        %s703 = scalar_lea.vmem [#allocation4], %s702
        %p704 = pneg %p76
        %p705 = pneg %p73
        %s706 = sand.u32 %s41, 1
        %s707 = scalar_lea.sflag [#allocation8], %s706
        %s708 = sand.u32 %s89, 1
        %s709 = smul.addr %s708, 8
        %s710 = scalar_lea.vmem [#allocation7], %s709
        %p711 = pneg %p102
        %p712 = pneg %p99
        %p713 = pneg %p123
        %p714 = pneg %p120
        %p715 = pneg %p144
        %p716 = pneg %p141
        %p717 = pneg %p165
        %p718 = pneg %p162
        %p719 = pneg %p186
        %p720 = pneg %p183
        %p721 = pneg %p207
        %p722 = pneg %p204
        %p723 = pneg %p228
        %p724 = pneg %p225
        %p725 = pneg %p249
        %p726 = pneg %p246
        %p727 = pneg %p270
        %p728 = pneg %p267
        %p729 = pneg %p291
        %p730 = pneg %p288
        %p731 = pneg %p312
        %p732 = pneg %p309
        %p733 = pneg %p333
        %p734 = pneg %p330
        %p735 = pneg %p354
        %p736 = pneg %p351
        %p737 = pneg %p375
        %p738 = pneg %p372
        %p739 = pneg %p396
        %p740 = pneg %p393
        %p741 = pneg %p424
        %p742 = pneg %p421
        %s743 = sand.u32 %s411, 1
        %s744 = scalar_lea.sflag [#allocation6], %s743
        %s745 = sand.u32 %s411, 1
        %s746 = smul.addr %s745, 8
        %s747 = scalar_lea.vmem [#allocation24], %s746
        %p749 = scmp.eq.s32.totalorder %s46, 0
        // Predicated region
        $region133: #{tpu_custom_call.1} parent=83 // pred_check
          %p750 = pneg %p749
        $region134: #{tpu_custom_call.1} parent=83 // pred_check_branch
          %752 = sbr.rel (%p750) target = $region136
        $region135: #{tpu_custom_call.1} parent=83 // pred_region
          %v753 = vld [vmem:[%s643] sm:$0xff]
          %vm754 = vcmask 392192
          %v755 = vsel %vm754, %v753, 0.0
          %756 = vadd.xlane.f32.xlu0 %v755
          %v757 = vpop.xlane.xlu0 %756
          %v758 = vrcp.pop 48.0
          %v759 = vmul.f32 48.0, %v758
          %v760 = vsub.f32 1.0, %v759
          %v761 = vmul.f32 %v758, %v760
          %v762 = vadd.f32 %v758, %v761
          %vm763 = vweird.f32 %v758
          %v764 = vsel %vm763, %v758, %v762
          %v765 = vmul.f32 %v757, %v764
          %v766 = vsub.f32 %v753, %v765
          %v767 = vmul.f32 %v766, %v766
          %v768 = vsel %vm754, %v767, 0.0
          %769 = vadd.xlane.f32.xlu0 %v768
          %v770 = vpop.xlane.xlu0 %769
          %v771 = vmul.f32 %v770, %v764
          %v772 = vadd.f32 %v771, 1e-05
          %v773 = vrsqrt.pop %v772
          %v774 = vmul.f32 %v773, %v772
          %v775 = vmul.f32 %v774, %v773
          %v776 = vmul.f32 0.5, %v775
          %v777 = vsub.f32 1.5, %v776
          %v778 = vmul.f32 %v773, %v777
          %vm779 = vweird.f32 %v772
          %vm780 = vweird.f32 %v773
          %vm781 = vmor %vm779, %vm780
          %v782 = vsel %vm781, %v773, %v778
          %v783 = vmul.f32 %v766, %v782
          %v784 = vld [vmem:[#allocation13] sm:$0x1]
          %v786 = vperm.slane %v784, 0
          %v788 = vmul.f32 %v783, %v786
          %v789 = vld [vmem:[#allocation15] sm:$0x1]
          %v791 = vperm.slane %v789, 0
          %v793 = vadd.f32 %v788, %v791
          %v794 = vpack.c.bf16 %v793, %v793
          %v795 = vld [vmem:[#allocation18] sm:$0x1]
          %v797 = vperm.slane %v795, 0
          %v799 = vmul.f32 %v783, %v797
          %v800 = vld [vmem:[#allocation19] sm:$0x1]
          %v802 = vperm.slane %v800, 0
          %v804 = vadd.f32 %v799, %v802
          %v805 = vpack.c.bf16 %v804, %v804
          %v806 = vld [vmem:[#allocation16] sm:$0xf]
          %v807 = vld [vmem:[#allocation16 + $0x4] sm:$0xf]
          %v808 = vld [vmem:[#allocation16 + $0x8] sm:$0xf]
          %v809 = vld [vmem:[#allocation16 + $0xc] sm:$0xf]
          %v810 = vld [vmem:[#allocation16 + $0x10] sm:$0xf]
          %v811 = vld [vmem:[#allocation16 + $0x14] sm:$0xf]
          %v812 = vld [vmem:[%s9] sm:$0x1]
          %v814 = vperm.slane %v812, 0
          %v822 = vunpack.c.l.b16 %v806
          %v823 = vunpack.c.l.b16 %v807
          %v824 = vunpack.c.l.b16 %v808
          %v825 = vunpack.c.l.b16 %v809
          %v826 = vunpack.c.l.b16 %v810
          %v827 = vunpack.c.l.b16 %v811
          %v828 = vpack.c.b16 %v823, %v822
          %v829 = vpack.c.b16 %v825, %v824
          %v830 = vpack.c.b16 %v827, %v826
          %v835 = vsel %vm754, %v794, 0
          %837 = vmatpush.bf16.msra.mxu0 0
          %838 = vmatpush.bf16.msra.mxu0 0
          %839 = vmatpush.bf16.msra.mxu0 0
          %840 = vmatpush.bf16.msra.mxu0 0
          %841 = vmatpush.bf16.msra.mxu0 0
          %842 = vmatpush.bf16.msra.mxu0 %v830
          %843 = vmatpush.bf16.msra.mxu0 %v829
          %844 = vmatpush.bf16.msra.mxu0 %v828
          %845 = vmatmul.bf16.gmra.mxu0 %v835
          %v846 = vpop.f32.mrf.mxu0
          %v847 = vadd.f32 %v814, %v846
          %v848 = vpop.f32.mrf.mxu0
          %849 = vdwg.mxu0
          %v850 = vpack.c.bf16 %v847, %v847
          %851 = vst [vmem:[#allocation2] sm:$0xf] %v850
          %v852 = vld [vmem:[#allocation21] sm:$0xf]
          %v853 = vld [vmem:[#allocation21 + $0x4] sm:$0xf]
          %v854 = vld [vmem:[#allocation21 + $0x8] sm:$0xf]
          %v855 = vld [vmem:[#allocation21 + $0xc] sm:$0xf]
          %v856 = vld [vmem:[#allocation21 + $0x10] sm:$0xf]
          %v857 = vld [vmem:[#allocation21 + $0x14] sm:$0xf]
          %v858 = vld [vmem:[%s13] sm:$0x1]
          %v860 = vperm.slane %v858, 0
          %v868 = vunpack.c.l.b16 %v852
          %v869 = vunpack.c.l.b16 %v853
          %v870 = vunpack.c.l.b16 %v854
          %v871 = vunpack.c.l.b16 %v855
          %v872 = vunpack.c.l.b16 %v856
          %v873 = vunpack.c.l.b16 %v857
          %v874 = vpack.c.b16 %v869, %v868
          %v875 = vpack.c.b16 %v871, %v870
          %v876 = vpack.c.b16 %v873, %v872
          %v881 = vsel %vm754, %v805, 0
          %883 = vmatpush.bf16.msra.mxu0 0
          %884 = vmatpush.bf16.msra.mxu0 0
          %885 = vmatpush.bf16.msra.mxu0 0
          %886 = vmatpush.bf16.msra.mxu0 0
          %887 = vmatpush.bf16.msra.mxu0 0
          %888 = vmatpush.bf16.msra.mxu0 %v876
          %889 = vmatpush.bf16.msra.mxu0 %v875
          %890 = vmatpush.bf16.msra.mxu0 %v874
          %891 = vmatmul.bf16.gmra.mxu0 %v881
          %v892 = vpop.f32.mrf.mxu0
          %v893 = vadd.f32 %v860, %v892
          %v894 = vpop.f32.mrf.mxu0
          %895 = vdwg.mxu0
          %v896 = vpack.c.bf16 %v893, %v893
          %897 = vst [vmem:[#allocation3] sm:$0xf] %v896
          %s898 = scalar_lea.vmem [#allocation16], 24
          %v899 = vld [vmem:[%s898] sm:$0xf]
          %v900 = vld [vmem:[%s898 + $0x4] sm:$0xf]
          %v901 = vld [vmem:[%s898 + $0x8] sm:$0xf]
          %v902 = vld [vmem:[%s898 + $0xc] sm:$0xf]
          %v903 = vld [vmem:[%s898 + $0x10] sm:$0xf]
          %v904 = vld [vmem:[%s898 + $0x14] sm:$0xf]
          %s905 = scalar_lea.vmem %s9, 1
          %v906 = vld [vmem:[%s905] sm:$0x1]
          %v908 = vperm.slane %v906, 0
          %v916 = vunpack.c.l.b16 %v899
          %v917 = vunpack.c.l.b16 %v900
          %v918 = vunpack.c.l.b16 %v901
          %v919 = vunpack.c.l.b16 %v902
          %v920 = vunpack.c.l.b16 %v903
          %v921 = vunpack.c.l.b16 %v904
          %v922 = vpack.c.b16 %v917, %v916
          %v923 = vpack.c.b16 %v919, %v918
          %v924 = vpack.c.b16 %v921, %v920
          %928 = vmatpush.bf16.msra.mxu0 0
          %929 = vmatpush.bf16.msra.mxu0 0
          %930 = vmatpush.bf16.msra.mxu0 0
          %931 = vmatpush.bf16.msra.mxu0 0
          %932 = vmatpush.bf16.msra.mxu0 0
          %933 = vmatpush.bf16.msra.mxu0 %v924
          %934 = vmatpush.bf16.msra.mxu0 %v923
          %935 = vmatpush.bf16.msra.mxu0 %v922
          %936 = vmatmul.bf16.gmra.mxu0 %v835
          %v937 = vpop.f32.mrf.mxu0
          %v938 = vadd.f32 %v908, %v937
          %v939 = vpop.f32.mrf.mxu0
          %940 = vdwg.mxu0
          %v941 = vpack.c.bf16 %v938, %v938
          %s942 = scalar_lea.vmem [#allocation2], 4
          %943 = vst [vmem:[%s942] sm:$0xf] %v941
          %s944 = scalar_lea.vmem [#allocation21], 24
          %v945 = vld [vmem:[%s944] sm:$0xf]
          %v946 = vld [vmem:[%s944 + $0x4] sm:$0xf]
          %v947 = vld [vmem:[%s944 + $0x8] sm:$0xf]
          %v948 = vld [vmem:[%s944 + $0xc] sm:$0xf]
          %v949 = vld [vmem:[%s944 + $0x10] sm:$0xf]
          %v950 = vld [vmem:[%s944 + $0x14] sm:$0xf]
          %s951 = scalar_lea.vmem %s13, 1
          %v952 = vld [vmem:[%s951] sm:$0x1]
          %v954 = vperm.slane %v952, 0
          %v962 = vunpack.c.l.b16 %v945
          %v963 = vunpack.c.l.b16 %v946
          %v964 = vunpack.c.l.b16 %v947
          %v965 = vunpack.c.l.b16 %v948
          %v966 = vunpack.c.l.b16 %v949
          %v967 = vunpack.c.l.b16 %v950
          %v968 = vpack.c.b16 %v963, %v962
          %v969 = vpack.c.b16 %v965, %v964
          %v970 = vpack.c.b16 %v967, %v966
          %974 = vmatpush.bf16.msra.mxu0 0
          %975 = vmatpush.bf16.msra.mxu0 0
          %976 = vmatpush.bf16.msra.mxu0 0
          %977 = vmatpush.bf16.msra.mxu0 0
          %978 = vmatpush.bf16.msra.mxu0 0
          %979 = vmatpush.bf16.msra.mxu0 %v970
          %980 = vmatpush.bf16.msra.mxu0 %v969
          %981 = vmatpush.bf16.msra.mxu0 %v968
          %982 = vmatmul.bf16.gmra.mxu0 %v881
          %v983 = vpop.f32.mrf.mxu0
          %v984 = vadd.f32 %v954, %v983
          %v985 = vpop.f32.mrf.mxu0
          %986 = vdwg.mxu0
          %v987 = vpack.c.bf16 %v984, %v984
          %s988 = scalar_lea.vmem [#allocation3], 4
          %989 = vst [vmem:[%s988] sm:$0xf] %v987
          %s990 = scalar_lea.vmem [#allocation16], 48
          %v991 = vld [vmem:[%s990] sm:$0xf]
          %v992 = vld [vmem:[%s990 + $0x4] sm:$0xf]
          %v993 = vld [vmem:[%s990 + $0x8] sm:$0xf]
          %v994 = vld [vmem:[%s990 + $0xc] sm:$0xf]
          %v995 = vld [vmem:[%s990 + $0x10] sm:$0xf]
          %v996 = vld [vmem:[%s990 + $0x14] sm:$0xf]
          %s997 = scalar_lea.vmem %s9, 2
          %v998 = vld [vmem:[%s997] sm:$0x1]
          %v1000 = vperm.slane %v998, 0
          %v1008 = vunpack.c.l.b16 %v991
          %v1009 = vunpack.c.l.b16 %v992
          %v1010 = vunpack.c.l.b16 %v993
          %v1011 = vunpack.c.l.b16 %v994
          %v1012 = vunpack.c.l.b16 %v995
          %v1013 = vunpack.c.l.b16 %v996
          %v1014 = vpack.c.b16 %v1009, %v1008
          %v1015 = vpack.c.b16 %v1011, %v1010
          %v1016 = vpack.c.b16 %v1013, %v1012
          %1020 = vmatpush.bf16.msra.mxu0 0
          %1021 = vmatpush.bf16.msra.mxu0 0
          %1022 = vmatpush.bf16.msra.mxu0 0
          %1023 = vmatpush.bf16.msra.mxu0 0
          %1024 = vmatpush.bf16.msra.mxu0 0
          %1025 = vmatpush.bf16.msra.mxu0 %v1016
          %1026 = vmatpush.bf16.msra.mxu0 %v1015
          %1027 = vmatpush.bf16.msra.mxu0 %v1014
          %1028 = vmatmul.bf16.gmra.mxu0 %v835
          %v1029 = vpop.f32.mrf.mxu0
          %v1030 = vadd.f32 %v1000, %v1029
          %v1031 = vpop.f32.mrf.mxu0
          %1032 = vdwg.mxu0
          %v1033 = vpack.c.bf16 %v1030, %v1030
          %s1034 = scalar_lea.vmem [#allocation2], 8
          %1035 = vst [vmem:[%s1034] sm:$0xf] %v1033
          %s1036 = scalar_lea.vmem [#allocation21], 48
          %v1037 = vld [vmem:[%s1036] sm:$0xf]
          %v1038 = vld [vmem:[%s1036 + $0x4] sm:$0xf]
          %v1039 = vld [vmem:[%s1036 + $0x8] sm:$0xf]
          %v1040 = vld [vmem:[%s1036 + $0xc] sm:$0xf]
          %v1041 = vld [vmem:[%s1036 + $0x10] sm:$0xf]
          %v1042 = vld [vmem:[%s1036 + $0x14] sm:$0xf]
          %s1043 = scalar_lea.vmem %s13, 2
          %v1044 = vld [vmem:[%s1043] sm:$0x1]
          %v1046 = vperm.slane %v1044, 0
          %v1054 = vunpack.c.l.b16 %v1037
          %v1055 = vunpack.c.l.b16 %v1038
          %v1056 = vunpack.c.l.b16 %v1039
          %v1057 = vunpack.c.l.b16 %v1040
          %v1058 = vunpack.c.l.b16 %v1041
          %v1059 = vunpack.c.l.b16 %v1042
          %v1060 = vpack.c.b16 %v1055, %v1054
          %v1061 = vpack.c.b16 %v1057, %v1056
          %v1062 = vpack.c.b16 %v1059, %v1058
          %1066 = vmatpush.bf16.msra.mxu0 0
          %1067 = vmatpush.bf16.msra.mxu0 0
          %1068 = vmatpush.bf16.msra.mxu0 0
          %1069 = vmatpush.bf16.msra.mxu0 0
          %1070 = vmatpush.bf16.msra.mxu0 0
          %1071 = vmatpush.bf16.msra.mxu0 %v1062
          %1072 = vmatpush.bf16.msra.mxu0 %v1061
          %1073 = vmatpush.bf16.msra.mxu0 %v1060
          %1074 = vmatmul.bf16.gmra.mxu0 %v881
          %v1075 = vpop.f32.mrf.mxu0
          %v1076 = vadd.f32 %v1046, %v1075
          %v1077 = vpop.f32.mrf.mxu0
          %1078 = vdwg.mxu0
          %v1079 = vpack.c.bf16 %v1076, %v1076
          %s1080 = scalar_lea.vmem [#allocation3], 8
          %1081 = vst [vmem:[%s1080] sm:$0xf] %v1079
          %s1082 = scalar_lea.vmem [#allocation16], 72
          %v1083 = vld [vmem:[%s1082] sm:$0xf]
          %v1084 = vld [vmem:[%s1082 + $0x4] sm:$0xf]
          %v1085 = vld [vmem:[%s1082 + $0x8] sm:$0xf]
          %v1086 = vld [vmem:[%s1082 + $0xc] sm:$0xf]
          %v1087 = vld [vmem:[%s1082 + $0x10] sm:$0xf]
          %v1088 = vld [vmem:[%s1082 + $0x14] sm:$0xf]
          %s1089 = scalar_lea.vmem %s9, 3
          %v1090 = vld [vmem:[%s1089] sm:$0x1]
          %v1092 = vperm.slane %v1090, 0
          %v1100 = vunpack.c.l.b16 %v1083
          %v1101 = vunpack.c.l.b16 %v1084
          %v1102 = vunpack.c.l.b16 %v1085
          %v1103 = vunpack.c.l.b16 %v1086
          %v1104 = vunpack.c.l.b16 %v1087
          %v1105 = vunpack.c.l.b16 %v1088
          %v1106 = vpack.c.b16 %v1101, %v1100
          %v1107 = vpack.c.b16 %v1103, %v1102
          %v1108 = vpack.c.b16 %v1105, %v1104
          %1112 = vmatpush.bf16.msra.mxu0 0
          %1113 = vmatpush.bf16.msra.mxu0 0
          %1114 = vmatpush.bf16.msra.mxu0 0
          %1115 = vmatpush.bf16.msra.mxu0 0
          %1116 = vmatpush.bf16.msra.mxu0 0
          %1117 = vmatpush.bf16.msra.mxu0 %v1108
          %1118 = vmatpush.bf16.msra.mxu0 %v1107
          %1119 = vmatpush.bf16.msra.mxu0 %v1106
          %1120 = vmatmul.bf16.gmra.mxu0 %v835
          %v1121 = vpop.f32.mrf.mxu0
          %v1122 = vadd.f32 %v1092, %v1121
          %v1123 = vpop.f32.mrf.mxu0
          %1124 = vdwg.mxu0
          %v1125 = vpack.c.bf16 %v1122, %v1122
          %s1126 = scalar_lea.vmem [#allocation2], 12
          %1127 = vst [vmem:[%s1126] sm:$0xf] %v1125
          %s1128 = scalar_lea.vmem [#allocation21], 72
          %v1129 = vld [vmem:[%s1128] sm:$0xf]
          %v1130 = vld [vmem:[%s1128 + $0x4] sm:$0xf]
          %v1131 = vld [vmem:[%s1128 + $0x8] sm:$0xf]
          %v1132 = vld [vmem:[%s1128 + $0xc] sm:$0xf]
          %v1133 = vld [vmem:[%s1128 + $0x10] sm:$0xf]
          %v1134 = vld [vmem:[%s1128 + $0x14] sm:$0xf]
          %s1135 = scalar_lea.vmem %s13, 3
          %v1136 = vld [vmem:[%s1135] sm:$0x1]
          %v1138 = vperm.slane %v1136, 0
          %v1146 = vunpack.c.l.b16 %v1129
          %v1147 = vunpack.c.l.b16 %v1130
          %v1148 = vunpack.c.l.b16 %v1131
          %v1149 = vunpack.c.l.b16 %v1132
          %v1150 = vunpack.c.l.b16 %v1133
          %v1151 = vunpack.c.l.b16 %v1134
          %v1152 = vpack.c.b16 %v1147, %v1146
          %v1153 = vpack.c.b16 %v1149, %v1148
          %v1154 = vpack.c.b16 %v1151, %v1150
          %1158 = vmatpush.bf16.msra.mxu0 0
          %1159 = vmatpush.bf16.msra.mxu0 0
          %1160 = vmatpush.bf16.msra.mxu0 0
          %1161 = vmatpush.bf16.msra.mxu0 0
          %1162 = vmatpush.bf16.msra.mxu0 0
          %1163 = vmatpush.bf16.msra.mxu0 %v1154
          %1164 = vmatpush.bf16.msra.mxu0 %v1153
          %1165 = vmatpush.bf16.msra.mxu0 %v1152
          %1166 = vmatmul.bf16.gmra.mxu0 %v881
          %v1167 = vpop.f32.mrf.mxu0
          %v1168 = vadd.f32 %v1138, %v1167
          %v1169 = vpop.f32.mrf.mxu0
          %1170 = vdwg.mxu0
          %v1171 = vpack.c.bf16 %v1168, %v1168
          %s1172 = scalar_lea.vmem [#allocation3], 12
          %1173 = vst [vmem:[%s1172] sm:$0xf] %v1171
        $region136: #{tpu_custom_call.1} parent=83 // pred_fallthru
          _
        %v1174 = vld [vmem:[%s633] sm:$0xff]
        %vm1175 = vcmask 261120
        %v1176 = vsel %vm1175, %v1174, 0.0
        %1177 = vadd.xlane.f32.xlu0 %v1176
        %v1178 = vpop.xlane.xlu0 %1177
        %v1179 = vrcp.pop 32.0
        %v1180 = vmul.f32 32.0, %v1179
        %v1181 = vsub.f32 1.0, %v1180
        %v1182 = vmul.f32 %v1179, %v1181
        %v1183 = vadd.f32 %v1179, %v1182
        %vm1184 = vweird.f32 %v1179
        %v1185 = vsel %vm1184, %v1179, %v1183
        %v1186 = vmul.f32 %v1178, %v1185
        %v1187 = vsub.f32 %v1174, %v1186
        %v1188 = vmul.f32 %v1187, %v1187
        %v1189 = vsel %vm1175, %v1188, 0.0
        %1190 = vadd.xlane.f32.xlu0 %v1189
        %v1191 = vpop.xlane.xlu0 %1190
        %v1192 = vmul.f32 %v1191, %v1185
        %v1193 = vadd.f32 %v1192, 1e-05
        %v1194 = vrsqrt.pop %v1193
        %v1195 = vmul.f32 %v1194, %v1193
        %v1196 = vmul.f32 %v1195, %v1194
        %v1197 = vmul.f32 0.5, %v1196
        %v1198 = vsub.f32 1.5, %v1197
        %v1199 = vmul.f32 %v1194, %v1198
        %vm1200 = vweird.f32 %v1193
        %vm1201 = vweird.f32 %v1194
        %vm1202 = vmor %vm1200, %vm1201
        %v1203 = vsel %vm1202, %v1194, %v1199
        %v1204 = vmul.f32 %v1187, %v1203
        %v1205 = vld [vmem:[#allocation9] sm:$0x1]
        %v1207 = vperm.slane %v1205, 0
        %v1209 = vmul.f32 %v1204, %v1207
        %v1210 = vld [vmem:[#allocation10] sm:$0x1]
        %v1212 = vperm.slane %v1210, 0
        %v1214 = vadd.f32 %v1209, %v1212
        %v1215 = vpack.c.bf16 %v1214, %v1214
        %v1216 = vld [vmem:[#allocation12] sm:$0xf]
        %v1217 = vld [vmem:[#allocation12 + $0x4] sm:$0xf]
        %v1218 = vld [vmem:[#allocation12 + $0x8] sm:$0xf]
        %v1219 = vld [vmem:[#allocation12 + $0xc] sm:$0xf]
        %v1220 = vld [vmem:[%s5] sm:$0x1]
        %v1222 = vperm.slane %v1220, 0
        %v1228 = vunpack.c.l.b16 %v1216
        %v1229 = vunpack.c.l.b16 %v1217
        %v1230 = vunpack.c.l.b16 %v1218
        %v1231 = vunpack.c.l.b16 %v1219
        %v1232 = vpack.c.b16 %v1229, %v1228
        %v1233 = vpack.c.b16 %v1231, %v1230
        %v1237 = vsel %vm1175, %v1215, 0
        %1239 = vmatpush.bf16.msra.mxu0 0
        %1240 = vmatpush.bf16.msra.mxu0 0
        %1241 = vmatpush.bf16.msra.mxu0 0
        %1242 = vmatpush.bf16.msra.mxu0 0
        %1243 = vmatpush.bf16.msra.mxu0 0
        %1244 = vmatpush.bf16.msra.mxu0 0
        %1245 = vmatpush.bf16.msra.mxu0 %v1233
        %1246 = vmatpush.bf16.msra.mxu0 %v1232
        %1247 = vmatmul.bf16.gmra.mxu0 %v1237
        %v1248 = vpop.f32.mrf.mxu0
        %v1249 = vadd.f32 %v1222, %v1248
        %v1250 = vpop.f32.mrf.mxu0
        %1251 = vdwg.mxu0
        %v1252 = vpack.c.bf16 %v1249, %v1249
        %v1253 = vld [vmem:[#allocation2] sm:$0xf]
        %1254 = vmatpush.bf16.xpose.msra.mxu0 0
        %1255 = vmatpush.bf16.xpose.msra.mxu0 0
        %1256 = vmatpush.bf16.xpose.msra.mxu0 0
        %1257 = vmatpush.bf16.xpose.msra.mxu0 0
        %1258 = vmatpush.bf16.xpose.msra.mxu0 0
        %1259 = vmatpush.bf16.xpose.msra.mxu0 0
        %1260 = vmatpush.bf16.xpose.msra.mxu0 0
        %1261 = vmatpush.bf16.xpose.msra.mxu0 %v1253
        %1262 = vmatmul.bf16.gmra.mxu0 %v1252
        %v1263 = vpop.f32.mrf.mxu0
        %v1264 = vadd.f32 0.0, %v1263
        %v1265 = vpop.f32.mrf.mxu0
        %1266 = vdwg.mxu0
        %vm1267 = vcmask 64512
        %v1268 = vsel %vm1267, %v1264, -inf
        %1269 = vmax.xlane.f32.xlu0 %v1268
        %v1270 = vpop.xlane.xlu0 %1269
        %v1271 = vsub.f32 %v1264, %v1270
        %v1272 = vpack.c.bf16 %v1271, %v1271
        %v1273 = vunpack.c.l.bf16 %v1272
        %v1274 = vmul.f32 %v1273, 1.442695
        %v1275 = vpow.pop %v1274
        %v1276 = vpack.c.bf16 %v1275, %v1275
        %v1277 = vunpack.c.l.bf16 %v1276
        %v1278 = vsel %vm1267, %v1277, 0.0
        %1279 = vadd.xlane.f32.xlu0 %v1278
        %v1280 = vpop.xlane.xlu0 %1279
        %v1281 = vld [vmem:[#allocation3] sm:$0xf]
        %v1283 = vsel %vm1267, %v1276, 0
        %vm1285 = vcmask 1043456
        %v1287 = vsel %vm1285, %v1281, 0
        %1289 = vmatpush.bf16.msra.mxu0 0
        %1290 = vmatpush.bf16.msra.mxu0 0
        %1291 = vmatpush.bf16.msra.mxu0 0
        %1292 = vmatpush.bf16.msra.mxu0 0
        %1293 = vmatpush.bf16.msra.mxu0 0
        %1294 = vmatpush.bf16.msra.mxu0 0
        %1295 = vmatpush.bf16.msra.mxu0 0
        %1296 = vmatpush.bf16.msra.mxu0 %v1287
        %1297 = vmatmul.bf16.gmra.mxu0 %v1283
        %v1298 = vpop.f32.mrf.mxu0
        %v1299 = vadd.f32 0.0, %v1298
        %v1300 = vpop.f32.mrf.mxu0
        %1301 = vdwg.mxu0
        %v1302 = vrcp.pop %v1280
        %v1303 = vmul.f32 %v1299, %v1302
        %v1304 = vpack.c.bf16 %v1303, %v1303
        %v1305 = vld [vmem:[#allocation22] sm:$0xf]
        %v1306 = vld [vmem:[#allocation22 + $0x4] sm:$0xf]
        %v1307 = vld [vmem:[#allocation22 + $0x8] sm:$0xf]
        %v1308 = vld [vmem:[#allocation22 + $0xc] sm:$0xf]
        %v1309 = vld [vmem:[#allocation22 + $0x10] sm:$0xf]
        %v1310 = vld [vmem:[#allocation22 + $0x14] sm:$0xf]
        %v1311 = vld [vmem:[#allocation22 + $0x18] sm:$0xf]
        %v1312 = vld [vmem:[#allocation22 + $0x1c] sm:$0xf]
        %v1313 = vld [vmem:[#allocation22 + $0x20] sm:$0xf]
        %v1314 = vld [vmem:[#allocation22 + $0x24] sm:$0xf]
        %v1315 = vld [vmem:[#allocation22 + $0x28] sm:$0xf]
        %v1316 = vld [vmem:[#allocation22 + $0x2c] sm:$0xf]
        %v1317 = vld [vmem:[#allocation22 + $0x30] sm:$0xf]
        %v1318 = vld [vmem:[#allocation22 + $0x34] sm:$0xf]
        %v1319 = vld [vmem:[#allocation22 + $0x38] sm:$0xf]
        %v1320 = vld [vmem:[#allocation22 + $0x3c] sm:$0xf]
        %s1321 = scalar_lea.vmem [#allocation12], 16
        %v1322 = vld [vmem:[%s1321] sm:$0xf]
        %v1323 = vld [vmem:[%s1321 + $0x4] sm:$0xf]
        %v1324 = vld [vmem:[%s1321 + $0x8] sm:$0xf]
        %v1325 = vld [vmem:[%s1321 + $0xc] sm:$0xf]
        %s1326 = scalar_lea.vmem %s5, 1
        %v1327 = vld [vmem:[%s1326] sm:$0x1]
        %v1329 = vperm.slane %v1327, 0
        %v1335 = vunpack.c.l.b16 %v1322
        %v1336 = vunpack.c.l.b16 %v1323
        %v1337 = vunpack.c.l.b16 %v1324
        %v1338 = vunpack.c.l.b16 %v1325
        %v1339 = vpack.c.b16 %v1336, %v1335
        %v1340 = vpack.c.b16 %v1338, %v1337
        %1343 = vmatpush.bf16.msra.mxu0 0
        %1344 = vmatpush.bf16.msra.mxu0 0
        %1345 = vmatpush.bf16.msra.mxu0 0
        %1346 = vmatpush.bf16.msra.mxu0 0
        %1347 = vmatpush.bf16.msra.mxu0 0
        %1348 = vmatpush.bf16.msra.mxu0 0
        %1349 = vmatpush.bf16.msra.mxu0 %v1340
        %1350 = vmatpush.bf16.msra.mxu0 %v1339
        %1351 = vmatmul.bf16.gmra.mxu0 %v1237
        %v1352 = vpop.f32.mrf.mxu0
        %v1353 = vadd.f32 %v1329, %v1352
        %v1354 = vpop.f32.mrf.mxu0
        %1355 = vdwg.mxu0
        %v1356 = vpack.c.bf16 %v1353, %v1353
        %s1357 = scalar_lea.vmem [#allocation2], 4
        %v1358 = vld [vmem:[%s1357] sm:$0xf]
        %1359 = vmatpush.bf16.xpose.msra.mxu0 0
        %1360 = vmatpush.bf16.xpose.msra.mxu0 0
        %1361 = vmatpush.bf16.xpose.msra.mxu0 0
        %1362 = vmatpush.bf16.xpose.msra.mxu0 0
        %1363 = vmatpush.bf16.xpose.msra.mxu0 0
        %1364 = vmatpush.bf16.xpose.msra.mxu0 0
        %1365 = vmatpush.bf16.xpose.msra.mxu0 0
        %1366 = vmatpush.bf16.xpose.msra.mxu0 %v1358
        %1367 = vmatmul.bf16.gmra.mxu0 %v1356
        %v1368 = vpop.f32.mrf.mxu0
        %v1369 = vadd.f32 0.0, %v1368
        %v1370 = vpop.f32.mrf.mxu0
        %1371 = vdwg.mxu0
        %v1372 = vsel %vm1267, %v1369, -inf
        %1373 = vmax.xlane.f32.xlu0 %v1372
        %v1374 = vpop.xlane.xlu0 %1373
        %v1375 = vsub.f32 %v1369, %v1374
        %v1376 = vpack.c.bf16 %v1375, %v1375
        %v1377 = vunpack.c.l.bf16 %v1376
        %v1378 = vmul.f32 %v1377, 1.442695
        %v1379 = vpow.pop %v1378
        %v1380 = vpack.c.bf16 %v1379, %v1379
        %v1381 = vunpack.c.l.bf16 %v1380
        %v1382 = vsel %vm1267, %v1381, 0.0
        %1383 = vadd.xlane.f32.xlu0 %v1382
        %v1384 = vpop.xlane.xlu0 %1383
        %s1385 = scalar_lea.vmem [#allocation3], 4
        %v1386 = vld [vmem:[%s1385] sm:$0xf]
        %v1388 = vsel %vm1267, %v1380, 0
        %v1391 = vsel %vm1285, %v1386, 0
        %1393 = vmatpush.bf16.msra.mxu0 0
        %1394 = vmatpush.bf16.msra.mxu0 0
        %1395 = vmatpush.bf16.msra.mxu0 0
        %1396 = vmatpush.bf16.msra.mxu0 0
        %1397 = vmatpush.bf16.msra.mxu0 0
        %1398 = vmatpush.bf16.msra.mxu0 0
        %1399 = vmatpush.bf16.msra.mxu0 0
        %1400 = vmatpush.bf16.msra.mxu0 %v1391
        %1401 = vmatmul.bf16.gmra.mxu0 %v1388
        %v1402 = vpop.f32.mrf.mxu0
        %v1403 = vadd.f32 0.0, %v1402
        %v1404 = vpop.f32.mrf.mxu0
        %1405 = vdwg.mxu0
        %v1406 = vrcp.pop %v1384
        %v1407 = vmul.f32 %v1403, %v1406
        %v1408 = vpack.c.bf16 %v1407, %v1407
        %s1409 = scalar_lea.vmem [#allocation22], 64
        %v1410 = vld [vmem:[%s1409] sm:$0xf]
        %v1411 = vld [vmem:[%s1409 + $0x4] sm:$0xf]
        %v1412 = vld [vmem:[%s1409 + $0x8] sm:$0xf]
        %v1413 = vld [vmem:[%s1409 + $0xc] sm:$0xf]
        %v1414 = vld [vmem:[%s1409 + $0x10] sm:$0xf]
        %v1415 = vld [vmem:[%s1409 + $0x14] sm:$0xf]
        %v1416 = vld [vmem:[%s1409 + $0x18] sm:$0xf]
        %v1417 = vld [vmem:[%s1409 + $0x1c] sm:$0xf]
        %v1418 = vld [vmem:[%s1409 + $0x20] sm:$0xf]
        %v1419 = vld [vmem:[%s1409 + $0x24] sm:$0xf]
        %v1420 = vld [vmem:[%s1409 + $0x28] sm:$0xf]
        %v1421 = vld [vmem:[%s1409 + $0x2c] sm:$0xf]
        %v1422 = vld [vmem:[%s1409 + $0x30] sm:$0xf]
        %v1423 = vld [vmem:[%s1409 + $0x34] sm:$0xf]
        %v1424 = vld [vmem:[%s1409 + $0x38] sm:$0xf]
        %v1425 = vld [vmem:[%s1409 + $0x3c] sm:$0xf]
        %v1442 = vunpack.c.l.b16 %v1410
        %v1443 = vunpack.c.l.b16 %v1411
        %v1444 = vunpack.c.l.b16 %v1412
        %v1445 = vunpack.c.l.b16 %v1413
        %v1446 = vunpack.c.l.b16 %v1414
        %v1447 = vunpack.c.l.b16 %v1415
        %v1448 = vunpack.c.l.b16 %v1416
        %v1449 = vunpack.c.l.b16 %v1417
        %v1450 = vunpack.c.l.b16 %v1418
        %v1451 = vunpack.c.l.b16 %v1419
        %v1452 = vunpack.c.l.b16 %v1420
        %v1453 = vunpack.c.l.b16 %v1421
        %v1454 = vunpack.c.l.b16 %v1422
        %v1455 = vunpack.c.l.b16 %v1423
        %v1456 = vunpack.c.l.b16 %v1424
        %v1457 = vunpack.c.l.b16 %v1425
        %v1458 = vpack.c.b16 %v1443, %v1442
        %v1459 = vpack.c.b16 %v1445, %v1444
        %v1460 = vpack.c.b16 %v1447, %v1446
        %v1461 = vpack.c.b16 %v1449, %v1448
        %v1462 = vpack.c.b16 %v1451, %v1450
        %v1463 = vpack.c.b16 %v1453, %v1452
        %v1464 = vpack.c.b16 %v1455, %v1454
        %v1465 = vpack.c.b16 %v1457, %v1456
        %1474 = vmatpush.bf16.msra.mxu0 %v1465
        %1475 = vmatpush.bf16.msra.mxu0 %v1464
        %1476 = vmatpush.bf16.msra.mxu0 %v1463
        %1477 = vmatpush.bf16.msra.mxu0 %v1462
        %1478 = vmatpush.bf16.msra.mxu0 %v1461
        %1479 = vmatpush.bf16.msra.mxu0 %v1460
        %1480 = vmatpush.bf16.msra.mxu0 %v1459
        %1481 = vmatpush.bf16.msra.mxu0 %v1458
        %1482 = vmatmul.bf16.gmra.mxu0 %v1408
        %v1483 = vpop.f32.mrf.mxu0
        %v1484 = vadd.f32 0.0, %v1483
        %v1485 = vpop.f32.mrf.mxu0
        %1486 = vdwg.mxu0
        %v1503 = vunpack.c.l.b16 %v1305
        %v1504 = vunpack.c.l.b16 %v1306
        %v1505 = vunpack.c.l.b16 %v1307
        %v1506 = vunpack.c.l.b16 %v1308
        %v1507 = vunpack.c.l.b16 %v1309
        %v1508 = vunpack.c.l.b16 %v1310
        %v1509 = vunpack.c.l.b16 %v1311
        %v1510 = vunpack.c.l.b16 %v1312
        %v1511 = vunpack.c.l.b16 %v1313
        %v1512 = vunpack.c.l.b16 %v1314
        %v1513 = vunpack.c.l.b16 %v1315
        %v1514 = vunpack.c.l.b16 %v1316
        %v1515 = vunpack.c.l.b16 %v1317
        %v1516 = vunpack.c.l.b16 %v1318
        %v1517 = vunpack.c.l.b16 %v1319
        %v1518 = vunpack.c.l.b16 %v1320
        %v1519 = vpack.c.b16 %v1504, %v1503
        %v1520 = vpack.c.b16 %v1506, %v1505
        %v1521 = vpack.c.b16 %v1508, %v1507
        %v1522 = vpack.c.b16 %v1510, %v1509
        %v1523 = vpack.c.b16 %v1512, %v1511
        %v1524 = vpack.c.b16 %v1514, %v1513
        %v1525 = vpack.c.b16 %v1516, %v1515
        %v1526 = vpack.c.b16 %v1518, %v1517
        %1535 = vmatpush.bf16.msra.mxu0 %v1526
        %1536 = vmatpush.bf16.msra.mxu0 %v1525
        %1537 = vmatpush.bf16.msra.mxu0 %v1524
        %1538 = vmatpush.bf16.msra.mxu0 %v1523
        %1539 = vmatpush.bf16.msra.mxu0 %v1522
        %1540 = vmatpush.bf16.msra.mxu0 %v1521
        %1541 = vmatpush.bf16.msra.mxu0 %v1520
        %1542 = vmatpush.bf16.msra.mxu0 %v1519
        %1543 = vmatmul.bf16.gmra.mxu0 %v1304
        %v1544 = vpop.f32.mrf.mxu0
        %v1545 = vadd.f32 %v1484, %v1544
        %v1546 = vpop.f32.mrf.mxu0
        %1547 = vdwg.mxu0
        %s1548 = scalar_lea.vmem [#allocation12], 32
        %v1549 = vld [vmem:[%s1548] sm:$0xf]
        %v1550 = vld [vmem:[%s1548 + $0x4] sm:$0xf]
        %v1551 = vld [vmem:[%s1548 + $0x8] sm:$0xf]
        %v1552 = vld [vmem:[%s1548 + $0xc] sm:$0xf]
        %s1553 = scalar_lea.vmem %s5, 2
        %v1554 = vld [vmem:[%s1553] sm:$0x1]
        %v1556 = vperm.slane %v1554, 0
        %v1562 = vunpack.c.l.b16 %v1549
        %v1563 = vunpack.c.l.b16 %v1550
        %v1564 = vunpack.c.l.b16 %v1551
        %v1565 = vunpack.c.l.b16 %v1552
        %v1566 = vpack.c.b16 %v1563, %v1562
        %v1567 = vpack.c.b16 %v1565, %v1564
        %1570 = vmatpush.bf16.msra.mxu0 0
        %1571 = vmatpush.bf16.msra.mxu0 0
        %1572 = vmatpush.bf16.msra.mxu0 0
        %1573 = vmatpush.bf16.msra.mxu0 0
        %1574 = vmatpush.bf16.msra.mxu0 0
        %1575 = vmatpush.bf16.msra.mxu0 0
        %1576 = vmatpush.bf16.msra.mxu0 %v1567
        %1577 = vmatpush.bf16.msra.mxu0 %v1566
        %1578 = vmatmul.bf16.gmra.mxu0 %v1237
        %v1579 = vpop.f32.mrf.mxu0
        %v1580 = vadd.f32 %v1556, %v1579
        %v1581 = vpop.f32.mrf.mxu0
        %1582 = vdwg.mxu0
        %v1583 = vpack.c.bf16 %v1580, %v1580
        %s1584 = scalar_lea.vmem [#allocation2], 8
        %v1585 = vld [vmem:[%s1584] sm:$0xf]
        %1586 = vmatpush.bf16.xpose.msra.mxu0 0
        %1587 = vmatpush.bf16.xpose.msra.mxu0 0
        %1588 = vmatpush.bf16.xpose.msra.mxu0 0
        %1589 = vmatpush.bf16.xpose.msra.mxu0 0
        %1590 = vmatpush.bf16.xpose.msra.mxu0 0
        %1591 = vmatpush.bf16.xpose.msra.mxu0 0
        %1592 = vmatpush.bf16.xpose.msra.mxu0 0
        %1593 = vmatpush.bf16.xpose.msra.mxu0 %v1585
        %1594 = vmatmul.bf16.gmra.mxu0 %v1583
        %v1595 = vpop.f32.mrf.mxu0
        %v1596 = vadd.f32 0.0, %v1595
        %v1597 = vpop.f32.mrf.mxu0
        %1598 = vdwg.mxu0
        %v1599 = vsel %vm1267, %v1596, -inf
        %1600 = vmax.xlane.f32.xlu0 %v1599
        %v1601 = vpop.xlane.xlu0 %1600
        %v1602 = vsub.f32 %v1596, %v1601
        %v1603 = vpack.c.bf16 %v1602, %v1602
        %v1604 = vunpack.c.l.bf16 %v1603
        %v1605 = vmul.f32 %v1604, 1.442695
        %v1606 = vpow.pop %v1605
        %v1607 = vpack.c.bf16 %v1606, %v1606
        %v1608 = vunpack.c.l.bf16 %v1607
        %v1609 = vsel %vm1267, %v1608, 0.0
        %1610 = vadd.xlane.f32.xlu0 %v1609
        %v1611 = vpop.xlane.xlu0 %1610
        %s1612 = scalar_lea.vmem [#allocation3], 8
        %v1613 = vld [vmem:[%s1612] sm:$0xf]
        %v1615 = vsel %vm1267, %v1607, 0
        %v1618 = vsel %vm1285, %v1613, 0
        %1620 = vmatpush.bf16.msra.mxu0 0
        %1621 = vmatpush.bf16.msra.mxu0 0
        %1622 = vmatpush.bf16.msra.mxu0 0
        %1623 = vmatpush.bf16.msra.mxu0 0
        %1624 = vmatpush.bf16.msra.mxu0 0
        %1625 = vmatpush.bf16.msra.mxu0 0
        %1626 = vmatpush.bf16.msra.mxu0 0
        %1627 = vmatpush.bf16.msra.mxu0 %v1618
        %1628 = vmatmul.bf16.gmra.mxu0 %v1615
        %v1629 = vpop.f32.mrf.mxu0
        %v1630 = vadd.f32 0.0, %v1629
        %v1631 = vpop.f32.mrf.mxu0
        %1632 = vdwg.mxu0
        %v1633 = vrcp.pop %v1611
        %v1634 = vmul.f32 %v1630, %v1633
        %v1635 = vpack.c.bf16 %v1634, %v1634
        %s1636 = scalar_lea.vmem [#allocation22], 128
        %v1637 = vld [vmem:[%s1636] sm:$0xf]
        %v1638 = vld [vmem:[%s1636 + $0x4] sm:$0xf]
        %v1639 = vld [vmem:[%s1636 + $0x8] sm:$0xf]
        %v1640 = vld [vmem:[%s1636 + $0xc] sm:$0xf]
        %v1641 = vld [vmem:[%s1636 + $0x10] sm:$0xf]
        %v1642 = vld [vmem:[%s1636 + $0x14] sm:$0xf]
        %v1643 = vld [vmem:[%s1636 + $0x18] sm:$0xf]
        %v1644 = vld [vmem:[%s1636 + $0x1c] sm:$0xf]
        %v1645 = vld [vmem:[%s1636 + $0x20] sm:$0xf]
        %v1646 = vld [vmem:[%s1636 + $0x24] sm:$0xf]
        %v1647 = vld [vmem:[%s1636 + $0x28] sm:$0xf]
        %v1648 = vld [vmem:[%s1636 + $0x2c] sm:$0xf]
        %v1649 = vld [vmem:[%s1636 + $0x30] sm:$0xf]
        %v1650 = vld [vmem:[%s1636 + $0x34] sm:$0xf]
        %v1651 = vld [vmem:[%s1636 + $0x38] sm:$0xf]
        %v1652 = vld [vmem:[%s1636 + $0x3c] sm:$0xf]
        %v1669 = vunpack.c.l.b16 %v1637
        %v1670 = vunpack.c.l.b16 %v1638
        %v1671 = vunpack.c.l.b16 %v1639
        %v1672 = vunpack.c.l.b16 %v1640
        %v1673 = vunpack.c.l.b16 %v1641
        %v1674 = vunpack.c.l.b16 %v1642
        %v1675 = vunpack.c.l.b16 %v1643
        %v1676 = vunpack.c.l.b16 %v1644
        %v1677 = vunpack.c.l.b16 %v1645
        %v1678 = vunpack.c.l.b16 %v1646
        %v1679 = vunpack.c.l.b16 %v1647
        %v1680 = vunpack.c.l.b16 %v1648
        %v1681 = vunpack.c.l.b16 %v1649
        %v1682 = vunpack.c.l.b16 %v1650
        %v1683 = vunpack.c.l.b16 %v1651
        %v1684 = vunpack.c.l.b16 %v1652
        %v1685 = vpack.c.b16 %v1670, %v1669
        %v1686 = vpack.c.b16 %v1672, %v1671
        %v1687 = vpack.c.b16 %v1674, %v1673
        %v1688 = vpack.c.b16 %v1676, %v1675
        %v1689 = vpack.c.b16 %v1678, %v1677
        %v1690 = vpack.c.b16 %v1680, %v1679
        %v1691 = vpack.c.b16 %v1682, %v1681
        %v1692 = vpack.c.b16 %v1684, %v1683
        %1701 = vmatpush.bf16.msra.mxu0 %v1692
        %1702 = vmatpush.bf16.msra.mxu0 %v1691
        %1703 = vmatpush.bf16.msra.mxu0 %v1690
        %1704 = vmatpush.bf16.msra.mxu0 %v1689
        %1705 = vmatpush.bf16.msra.mxu0 %v1688
        %1706 = vmatpush.bf16.msra.mxu0 %v1687
        %1707 = vmatpush.bf16.msra.mxu0 %v1686
        %1708 = vmatpush.bf16.msra.mxu0 %v1685
        %1709 = vmatmul.bf16.gmra.mxu0 %v1635
        %v1710 = vpop.f32.mrf.mxu0
        %v1711 = vadd.f32 0.0, %v1710
        %v1712 = vpop.f32.mrf.mxu0
        %1713 = vdwg.mxu0
        %v1714 = vadd.f32 %v1545, %v1711
        %s1715 = scalar_lea.vmem [#allocation12], 48
        %v1716 = vld [vmem:[%s1715] sm:$0xf]
        %v1717 = vld [vmem:[%s1715 + $0x4] sm:$0xf]
        %v1718 = vld [vmem:[%s1715 + $0x8] sm:$0xf]
        %v1719 = vld [vmem:[%s1715 + $0xc] sm:$0xf]
        %s1720 = scalar_lea.vmem %s5, 3
        %v1721 = vld [vmem:[%s1720] sm:$0x1]
        %v1723 = vperm.slane %v1721, 0
        %v1729 = vunpack.c.l.b16 %v1716
        %v1730 = vunpack.c.l.b16 %v1717
        %v1731 = vunpack.c.l.b16 %v1718
        %v1732 = vunpack.c.l.b16 %v1719
        %v1733 = vpack.c.b16 %v1730, %v1729
        %v1734 = vpack.c.b16 %v1732, %v1731
        %1737 = vmatpush.bf16.msra.mxu0 0
        %1738 = vmatpush.bf16.msra.mxu0 0
        %1739 = vmatpush.bf16.msra.mxu0 0
        %1740 = vmatpush.bf16.msra.mxu0 0
        %1741 = vmatpush.bf16.msra.mxu0 0
        %1742 = vmatpush.bf16.msra.mxu0 0
        %1743 = vmatpush.bf16.msra.mxu0 %v1734
        %1744 = vmatpush.bf16.msra.mxu0 %v1733
        %1745 = vmatmul.bf16.gmra.mxu0 %v1237
        %v1746 = vpop.f32.mrf.mxu0
        %v1747 = vadd.f32 %v1723, %v1746
        %v1748 = vpop.f32.mrf.mxu0
        %1749 = vdwg.mxu0
        %v1750 = vpack.c.bf16 %v1747, %v1747
        %s1751 = scalar_lea.vmem [#allocation2], 12
        %v1752 = vld [vmem:[%s1751] sm:$0xf]
        %1753 = vmatpush.bf16.xpose.msra.mxu0 0
        %1754 = vmatpush.bf16.xpose.msra.mxu0 0
        %1755 = vmatpush.bf16.xpose.msra.mxu0 0
        %1756 = vmatpush.bf16.xpose.msra.mxu0 0
        %1757 = vmatpush.bf16.xpose.msra.mxu0 0
        %1758 = vmatpush.bf16.xpose.msra.mxu0 0
        %1759 = vmatpush.bf16.xpose.msra.mxu0 0
        %1760 = vmatpush.bf16.xpose.msra.mxu0 %v1752
        %1761 = vmatmul.bf16.gmra.mxu0 %v1750
        %v1762 = vpop.f32.mrf.mxu0
        %v1763 = vadd.f32 0.0, %v1762
        %v1764 = vpop.f32.mrf.mxu0
        %1765 = vdwg.mxu0
        %v1766 = vsel %vm1267, %v1763, -inf
        %1767 = vmax.xlane.f32.xlu0 %v1766
        %v1768 = vpop.xlane.xlu0 %1767
        %v1769 = vsub.f32 %v1763, %v1768
        %v1770 = vpack.c.bf16 %v1769, %v1769
        %v1771 = vunpack.c.l.bf16 %v1770
        %v1772 = vmul.f32 %v1771, 1.442695
        %v1773 = vpow.pop %v1772
        %v1774 = vpack.c.bf16 %v1773, %v1773
        %v1775 = vunpack.c.l.bf16 %v1774
        %v1776 = vsel %vm1267, %v1775, 0.0
        %1777 = vadd.xlane.f32.xlu0 %v1776
        %v1778 = vpop.xlane.xlu0 %1777
        %s1779 = scalar_lea.vmem [#allocation3], 12
        %v1780 = vld [vmem:[%s1779] sm:$0xf]
        %v1782 = vsel %vm1267, %v1774, 0
        %v1785 = vsel %vm1285, %v1780, 0
        %1787 = vmatpush.bf16.msra.mxu0 0
        %1788 = vmatpush.bf16.msra.mxu0 0
        %1789 = vmatpush.bf16.msra.mxu0 0
        %1790 = vmatpush.bf16.msra.mxu0 0
        %1791 = vmatpush.bf16.msra.mxu0 0
        %1792 = vmatpush.bf16.msra.mxu0 0
        %1793 = vmatpush.bf16.msra.mxu0 0
        %1794 = vmatpush.bf16.msra.mxu0 %v1785
        %1795 = vmatmul.bf16.gmra.mxu0 %v1782
        %v1796 = vpop.f32.mrf.mxu0
        %v1797 = vadd.f32 0.0, %v1796
        %v1798 = vpop.f32.mrf.mxu0
        %1799 = vdwg.mxu0
        %v1800 = vrcp.pop %v1778
        %v1801 = vmul.f32 %v1797, %v1800
        %v1802 = vpack.c.bf16 %v1801, %v1801
        %s1803 = scalar_lea.vmem [#allocation22], 192
        %v1804 = vld [vmem:[%s1803] sm:$0xf]
        %v1805 = vld [vmem:[%s1803 + $0x4] sm:$0xf]
        %v1806 = vld [vmem:[%s1803 + $0x8] sm:$0xf]
        %v1807 = vld [vmem:[%s1803 + $0xc] sm:$0xf]
        %v1808 = vld [vmem:[%s1803 + $0x10] sm:$0xf]
        %v1809 = vld [vmem:[%s1803 + $0x14] sm:$0xf]
        %v1810 = vld [vmem:[%s1803 + $0x18] sm:$0xf]
        %v1811 = vld [vmem:[%s1803 + $0x1c] sm:$0xf]
        %v1812 = vld [vmem:[%s1803 + $0x20] sm:$0xf]
        %v1813 = vld [vmem:[%s1803 + $0x24] sm:$0xf]
        %v1814 = vld [vmem:[%s1803 + $0x28] sm:$0xf]
        %v1815 = vld [vmem:[%s1803 + $0x2c] sm:$0xf]
        %v1816 = vld [vmem:[%s1803 + $0x30] sm:$0xf]
        %v1817 = vld [vmem:[%s1803 + $0x34] sm:$0xf]
        %v1818 = vld [vmem:[%s1803 + $0x38] sm:$0xf]
        %v1819 = vld [vmem:[%s1803 + $0x3c] sm:$0xf]
        %v1836 = vunpack.c.l.b16 %v1804
        %v1837 = vunpack.c.l.b16 %v1805
        %v1838 = vunpack.c.l.b16 %v1806
        %v1839 = vunpack.c.l.b16 %v1807
        %v1840 = vunpack.c.l.b16 %v1808
        %v1841 = vunpack.c.l.b16 %v1809
        %v1842 = vunpack.c.l.b16 %v1810
        %v1843 = vunpack.c.l.b16 %v1811
        %v1844 = vunpack.c.l.b16 %v1812
        %v1845 = vunpack.c.l.b16 %v1813
        %v1846 = vunpack.c.l.b16 %v1814
        %v1847 = vunpack.c.l.b16 %v1815
        %v1848 = vunpack.c.l.b16 %v1816
        %v1849 = vunpack.c.l.b16 %v1817
        %v1850 = vunpack.c.l.b16 %v1818
        %v1851 = vunpack.c.l.b16 %v1819
        %v1852 = vpack.c.b16 %v1837, %v1836
        %v1853 = vpack.c.b16 %v1839, %v1838
        %v1854 = vpack.c.b16 %v1841, %v1840
        %v1855 = vpack.c.b16 %v1843, %v1842
        %v1856 = vpack.c.b16 %v1845, %v1844
        %v1857 = vpack.c.b16 %v1847, %v1846
        %v1858 = vpack.c.b16 %v1849, %v1848
        %v1859 = vpack.c.b16 %v1851, %v1850
        %1868 = vmatpush.bf16.msra.mxu0 %v1859
        %1869 = vmatpush.bf16.msra.mxu0 %v1858
        %1870 = vmatpush.bf16.msra.mxu0 %v1857
        %1871 = vmatpush.bf16.msra.mxu0 %v1856
        %1872 = vmatpush.bf16.msra.mxu0 %v1855
        %1873 = vmatpush.bf16.msra.mxu0 %v1854
        %1874 = vmatpush.bf16.msra.mxu0 %v1853
        %1875 = vmatpush.bf16.msra.mxu0 %v1852
        %1876 = vmatmul.bf16.gmra.mxu0 %v1802
        %v1877 = vpop.f32.mrf.mxu0
        %v1878 = vadd.f32 0.0, %v1877
        %v1879 = vpop.f32.mrf.mxu0
        %1880 = vdwg.mxu0
        %v1881 = vadd.f32 %v1714, %v1878
        %v1882 = vld [vmem:[%s15] sm:$0x1]
        %v1884 = vperm.slane %v1882, 0
        %v1886 = vadd.f32 %v1881, %v1884
        %1887 = vst [vmem:[%s747] sm:$0xff] %v1886
        %s1888 = sand.u32 %s411, 1
        %s1889 = scalar_lea.sflag [#allocation6], %s1888
        %s1890 = sand.u32 %s411, 1
        %s1891 = smul.addr %s1890, 8
        %s1892 = scalar_lea.vmem [#allocation24], %s1891
        // Predicated region
        $region137: #{tpu_custom_call.1} parent=83 // pred_check
          %p1893 = pneg %p421
        $region138: #{tpu_custom_call.1} parent=83 // pred_check_branch
          %1895 = sbr.rel (%p1893) target = $region140
        $region139: #{tpu_custom_call.1} parent=83 // pred_region
          %1897 = vsyncadd %s1889, 0
          %s1898 = sadd.s32 %s46, %s45
          %s1899 = smul.addr %s1898, 8
          %s1900 = scalar_lea.hbm %s16, %s1899
          %s1902 = sshll.u32 %s1892, 4
          %s1903 = int_to_ptr.vmem [resolvable:$true] %s1902
          %s1904 = sshll.u32 %s1900, 4
          %s1905 = int_to_ptr.hbm [resolvable:$true] %s1904
          %1907 = dma.vmem_to_hbm [thread:$0]  %s1903, 128, %s1905, %s1889
        $region140: #{tpu_custom_call.1} parent=83 // pred_fallthru
          _
      $region84: #{tpu_custom_call.1} parent=5 // pred_fallthru
        _
      %p1908 = scmp.le.s32.totalorder 2, %s36
      // Predicated region
      $region141: #{tpu_custom_call.1} parent=5 // pred_check
        %p1909 = pneg %p1908
      $region142: #{tpu_custom_call.1} parent=5 // pred_check_branch
        %1911 = sbr.rel (%p1909) target = $region144
      $region143: #{tpu_custom_call.1} parent=5 // pred_region
        %s1912 = ssub.s32 %s36, 2
        // Predicated region
        $region145: #{tpu_custom_call.1} parent=143 // pred_check
          %p1913 = pneg %p427
        $region146: #{tpu_custom_call.1} parent=143 // pred_check_branch
          %1915 = sbr.rel (%p1913) target = $region148
        $region147: #{tpu_custom_call.1} parent=143 // pred_region
          %s1916 = sand.u32 %s412, 1
          %s1917 = scalar_lea.sflag [#allocation6], %s1916
          %s1918 = sand.u32 %s412, 1
          %s1919 = smul.addr %s1918, 8
          %s1920 = scalar_lea.vmem [#allocation24], %s1919
          %1922 = dma.done %s1917, 128
        $region148: #{tpu_custom_call.1} parent=143 // pred_fallthru
          _
      $region144: #{tpu_custom_call.1} parent=5 // pred_fallthru
        _
    $region6: #{tpu_custom_call.1} parent=1 // loop_footer
      %s40 = sadd.s32 1, %s36
    $region7: #{tpu_custom_call.1} parent=1 // loop_footer_branch
      %35 = sbr.rel target = $region3
    $region8: #{tpu_custom_call.1} parent=1 // loop_exit
      _
    %1923 = vsyncpa [#allocation5], 1
    %s1924 = scalar_lea.sflag [#allocation5], 1
    %1925 = vsyncpa %s1924, 1
    %1926 = vsyncpa [#allocation8], 1
    %s1927 = scalar_lea.sflag [#allocation8], 1
    %1928 = vsyncpa %s1927, 1
    %1929 = vsyncpa [#allocation11], 1
    %1930 = vsyncpa [#allocation14], 1
    %1931 = vsyncpa [#allocation17], 1
    %1932 = vsyncpa [#allocation20], 1
    %1933 = vsyncpa [#allocation23], 1
    %1934 = vsyncpa [#allocation6], 1
    %s1935 = scalar_lea.sflag [#allocation6], 1
    %1936 = vsyncpa %s1935, 1

// kernel: tpu_custom_call.1
$region0: #{tpu_custom_call.1}
  #allocation0 [shape = 'u32[]', space=smem, size = 0x4, offset = 0x4, fixed_abs, tag = 'smem constant byte address 0x4 - core index']
  #allocation1 [shape = 'u32[72,128]{1,0:T(1,128)}', space=vmem, size = 0x9000, scoped, tag = 'internal scratch']
  #allocation2 [shape = 'bf16[4,8,128]{2,1,0:T(8,128)(2,1)}', space=vmem, size = 0x2000, scoped, tag = 'scratch operand']
  #allocation3 [shape = 'bf16[4,8,128]{2,1,0:T(8,128)(2,1)}', space=vmem, size = 0x2000, scoped, tag = 'scratch operand']
  %s0 = inlined_call_operand.hbm [shape: f32[2,8,32], index: 0, kind: input, shape index: {}]
  %s1 = inlined_call_operand.hbm [shape: f32[2,8,48], index: 1, kind: input, shape index: {}]
  %s2 = inlined_call_operand.hbm [shape: f32[1,32], index: 2, kind: input, shape index: {}]
  %s3 = inlined_call_operand.hbm [shape: f32[1,32], index: 3, kind: input, shape index: {}]
  %s4 = inlined_call_operand.hbm [shape: bf16[4,32,128], index: 4, kind: input, shape index: {}]
  %s5 = inlined_call_operand.vmem [shape: f32[4,1,128], index: 5, kind: input, shape index: {}]
  %s6 = inlined_call_operand.hbm [shape: f32[1,48], index: 6, kind: input, shape index: {}]
  %s7 = inlined_call_operand.hbm [shape: f32[1,48], index: 7, kind: input, shape index: {}]
  %s8 = inlined_call_operand.hbm [shape: bf16[4,48,128], index: 8, kind: input, shape index: {}]
  %s9 = inlined_call_operand.vmem [shape: f32[4,1,128], index: 9, kind: input, shape index: {}]
  %s10 = inlined_call_operand.hbm [shape: f32[1,48], index: 10, kind: input, shape index: {}]
  %s11 = inlined_call_operand.hbm [shape: f32[1,48], index: 11, kind: input, shape index: {}]
  %s12 = inlined_call_operand.hbm [shape: bf16[4,48,128], index: 12, kind: input, shape index: {}]
  %s13 = inlined_call_operand.vmem [shape: f32[4,1,128], index: 13, kind: input, shape index: {}]
  %s14 = inlined_call_operand.hbm [shape: bf16[4,128,128], index: 14, kind: input, shape index: {}]
  %s15 = inlined_call_operand.vmem [shape: f32[1,128], index: 15, kind: input, shape index: {}]
  %s16 = inlined_call_operand.hbm [shape: f32[2,8,128], index: 16, kind: output, shape index: {}]
  %s17 = sld [smem:[#allocation0]]
  $region149: #{tpu_custom_call.1} parent=0
    _
  %s19 = ssub.s32 1, %s17
  %s20 = scalar_select 0, %s19, %s17
  $region1: #{tpu_custom_call.1} parent=0
    #allocation4 [shape = 'u8[8192]{0}', space=vmem, size = 0x2000, scoped, tag = 'input window, operand 0']
    #allocation5 [shape = 's32[2]{0}', space=sflag, size = 0x8, scoped, tag = 'scoped memory for tpu_custom_call.1']
    #allocation6 [shape = 's32[2]{0}', space=sflag, size = 0x8, scoped, tag = 'scoped memory for tpu_custom_call.1']
    #allocation7 [shape = 'u8[8192]{0}', space=vmem, size = 0x2000, scoped, tag = 'input window, operand 1']
    #allocation8 [shape = 's32[2]{0}', space=sflag, size = 0x8, scoped, tag = 'scoped memory for tpu_custom_call.1']
    #allocation9 [shape = 'u8[512]{0}', space=vmem, size = 0x400, scoped, tag = 'input window, operand 2, single buffered']
    #allocation10 [shape = 'u8[512]{0}', space=vmem, size = 0x400, scoped, tag = 'input window, operand 3, single buffered']
    #allocation11 [shape = 's32[1]{0}', space=sflag, size = 0x4, scoped, tag = 'scoped memory for tpu_custom_call.1']
    #allocation12 [shape = 'u8[32768]{0}', space=vmem, size = 0x8000, scoped, tag = 'input window, operand 4, single buffered']
    #allocation13 [shape = 'u8[512]{0}', space=vmem, size = 0x400, scoped, tag = 'input window, operand 6, single buffered']
    #allocation14 [shape = 's32[1]{0}', space=sflag, size = 0x4, scoped, tag = 'scoped memory for tpu_custom_call.1']
    #allocation15 [shape = 'u8[512]{0}', space=vmem, size = 0x400, scoped, tag = 'input window, operand 7, single buffered']
    #allocation16 [shape = 'u8[49152]{0}', space=vmem, size = 0xc000, scoped, tag = 'input window, operand 8, single buffered']
    #allocation17 [shape = 's32[1]{0}', space=sflag, size = 0x4, scoped, tag = 'scoped memory for tpu_custom_call.1']
    #allocation18 [shape = 'u8[512]{0}', space=vmem, size = 0x400, scoped, tag = 'input window, operand 10, single buffered']
    #allocation19 [shape = 'u8[512]{0}', space=vmem, size = 0x400, scoped, tag = 'input window, operand 11, single buffered']
    #allocation20 [shape = 's32[1]{0}', space=sflag, size = 0x4, scoped, tag = 'scoped memory for tpu_custom_call.1']
    #allocation21 [shape = 'u8[49152]{0}', space=vmem, size = 0xc000, scoped, tag = 'input window, operand 12, single buffered']
    #allocation22 [shape = 'u8[131072]{0}', space=vmem, size = 0x20000, scoped, tag = 'input window, operand 14, single buffered']
    #allocation23 [shape = 's32[1]{0}', space=sflag, size = 0x4, scoped, tag = 'scoped memory for tpu_custom_call.1']
    #allocation24 [shape = 'u8[8192]{0}', space=vmem, size = 0x2000, scoped, tag = 'output window, operand 0']
    %21 = vsyncpa [#allocation5], 0
    %s22 = scalar_lea.sflag [#allocation5], 1
    %23 = vsyncpa %s22, 0
    %24 = vsyncpa [#allocation8], 0
    %s25 = scalar_lea.sflag [#allocation8], 1
    %26 = vsyncpa %s25, 0
    %27 = vsyncpa [#allocation11], 0
    %28 = vsyncpa [#allocation14], 0
    %29 = vsyncpa [#allocation17], 0
    %30 = vsyncpa [#allocation20], 0
    %31 = vsyncpa [#allocation23], 0
    %32 = vsyncpa [#allocation6], 0
    %s33 = scalar_lea.sflag [#allocation6], 1
    %34 = vsyncpa %s33, 0
    loop: start=0, step=1, limit=4
    $region2: #{tpu_custom_call.1} parent=1 // loop_pre_header
      _
    $region3: #{tpu_custom_call.1} parent=1 // loop_header
      %s36 = sphi 0, %s40
      %p37 = scmp.ge.s32.totalorder %s36, 4
      %s43 = sphi 0, %s55
      %s44 = sphi 0, %s51
      %s45 = sphi 0, %s43
      %s46 = sphi 0, %s44
      %s47 = sphi 0, %s45
      %s48 = sphi 0, %s46
      %s60 = sphi 0, %s62
      %s63 = sphi 0, %s60
      %s64 = sphi 0, %s63
      %s80 = sphi 0, %s64
      %s86 = sphi 0, %s88
      %s89 = sphi 0, %s86
      %s90 = sphi 0, %s89
      %s106 = sphi 0, %s90
      %s110 = sphi 0, %s110
      %s112 = sphi 0, %s110
      %s113 = sphi 0, %s112
      %s127 = sphi 0, %s113
      %s131 = sphi 0, %s131
      %s133 = sphi 0, %s131
      %s134 = sphi 0, %s133
      %s148 = sphi 0, %s134
      %s152 = sphi 0, %s152
      %s154 = sphi 0, %s152
      %s155 = sphi 0, %s154
      %s169 = sphi 0, %s155
      %s173 = sphi 0, %s173
      %s175 = sphi 0, %s173
      %s176 = sphi 0, %s175
      %s190 = sphi 0, %s176
      %s194 = sphi 0, %s194
      %s196 = sphi 0, %s194
      %s197 = sphi 0, %s196
      %s211 = sphi 0, %s197
      %s215 = sphi 0, %s215
      %s217 = sphi 0, %s215
      %s218 = sphi 0, %s217
      %s232 = sphi 0, %s218
      %s236 = sphi 0, %s236
      %s238 = sphi 0, %s236
      %s239 = sphi 0, %s238
      %s253 = sphi 0, %s239
      %s257 = sphi 0, %s257
      %s259 = sphi 0, %s257
      %s260 = sphi 0, %s259
      %s274 = sphi 0, %s260
      %s278 = sphi 0, %s278
      %s280 = sphi 0, %s278
      %s281 = sphi 0, %s280
      %s295 = sphi 0, %s281
      %s299 = sphi 0, %s299
      %s301 = sphi 0, %s299
      %s302 = sphi 0, %s301
      %s316 = sphi 0, %s302
      %s320 = sphi 0, %s320
      %s322 = sphi 0, %s320
      %s323 = sphi 0, %s322
      %s337 = sphi 0, %s323
      %s341 = sphi 0, %s341
      %s343 = sphi 0, %s341
      %s344 = sphi 0, %s343
      %s358 = sphi 0, %s344
      %s362 = sphi 0, %s362
      %s364 = sphi 0, %s362
      %s365 = sphi 0, %s364
      %s379 = sphi 0, %s365
      %s383 = sphi 0, %s383
      %s385 = sphi 0, %s383
      %s386 = sphi 0, %s385
      %s400 = sphi 0, %s386
      %s408 = sphi 0, %s410
      %s411 = sphi 0, %s408
      %s412 = sphi 0, %s411
      %s428 = sphi 0, %s412
    $region4: #{tpu_custom_call.1} parent=1 // loop_header_branch
      %39 = sbr.rel (%p37) target = $region8
    $region5: #{tpu_custom_call.1} parent=1 // loop_body
      %s41 = ssub.s32 %s36, 1
      %s42 = ssub.s32 %s36, 2
      %s49 = sadd.s32 1, %s44
      %p50 = scmp.ge.s32.totalorder %s49, 1
      %s51 = scalar_select %p50, 0, %s49
      %s52 = sadd.s32 1, %s43
      %s53 = scalar_select %p50, %s52, %s43
      %p54 = scmp.ge.s32.totalorder %s53, 2
      %s55 = scalar_select %p54, 0, %s53
      %s56 = ssub.s32 %s43, %s55
      %s57 = ssub.s32 %s44, %s51
      %s58 = sor.u32 %s56, %s57
      %p59 = scmp.eq.s32.totalorder %s58, 0
      %s61 = sadd.s32 %s60, 1
      %s62 = scalar_select %p59, %s60, %s61
      %p65 = pneg %p59
      %p66 = scmp.eq.s32.totalorder %s36, 1
      %p67 = por %p65, %p66
      %p68 = scmp.ne.s32.totalorder %s60, %s63
      %p69 = scmp.eq.s32.totalorder %s36, 0
      %p70 = por %p68, %p69
      %p71 = scmp.ne.s32.totalorder %s60, %s63
      %p72 = scmp.eq.s32.totalorder %s41, 1
      %p73 = por %p71, %p72
      %p74 = scmp.ne.s32.totalorder %s63, %s64
      %p75 = scmp.eq.s32.totalorder %s41, 0
      %p76 = por %p74, %p75
      %p77 = scmp.ne.s32.totalorder %s63, %s64
      %p78 = scmp.eq.s32.totalorder %s42, 1
      %p79 = por %p77, %p78
      %p81 = scmp.ne.s32.totalorder %s64, %s80
      %p82 = scmp.eq.s32.totalorder %s42, 0
      %p83 = por %p81, %p82
      %s84 = ssub.s32 %s43, %s55
      %p85 = scmp.eq.s32.totalorder %s84, 0
      %s87 = sadd.s32 %s86, 1
      %s88 = scalar_select %p85, %s86, %s87
      %p91 = pneg %p85
      %p92 = scmp.eq.s32.totalorder %s36, 1
      %p93 = por %p91, %p92
      %p94 = scmp.ne.s32.totalorder %s86, %s89
      %p95 = scmp.eq.s32.totalorder %s36, 0
      %p96 = por %p94, %p95
      %p97 = scmp.ne.s32.totalorder %s86, %s89
      %p98 = scmp.eq.s32.totalorder %s41, 1
      %p99 = por %p97, %p98
      %p100 = scmp.ne.s32.totalorder %s89, %s90
      %p101 = scmp.eq.s32.totalorder %s41, 0
      %p102 = por %p100, %p101
      %p103 = scmp.ne.s32.totalorder %s89, %s90
      %p104 = scmp.eq.s32.totalorder %s42, 1
      %p105 = por %p103, %p104
      %p107 = scmp.ne.s32.totalorder %s90, %s106
      %p108 = scmp.eq.s32.totalorder %s42, 0
      %p109 = por %p107, %p108
      %s111 = sadd.s32 %s110, 1
      %p114 = scmp.eq.s32.totalorder %s36, 1
      %p115 = scmp.ne.s32.totalorder %s110, %s112
      %p116 = scmp.eq.s32.totalorder %s36, 0
      %p117 = por %p115, %p116
      %p118 = scmp.ne.s32.totalorder %s110, %s112
      %p119 = scmp.eq.s32.totalorder %s41, 1
      %p120 = por %p118, %p119
      %p121 = scmp.ne.s32.totalorder %s112, %s113
      %p122 = scmp.eq.s32.totalorder %s41, 0
      %p123 = por %p121, %p122
      %p124 = scmp.ne.s32.totalorder %s112, %s113
      %p125 = scmp.eq.s32.totalorder %s42, 1
      %p126 = por %p124, %p125
      %p128 = scmp.ne.s32.totalorder %s113, %s127
      %p129 = scmp.eq.s32.totalorder %s42, 0
      %p130 = por %p128, %p129
      %s132 = sadd.s32 %s131, 1
      %p135 = scmp.eq.s32.totalorder %s36, 1
      %p136 = scmp.ne.s32.totalorder %s131, %s133
      %p137 = scmp.eq.s32.totalorder %s36, 0
      %p138 = por %p136, %p137
      %p139 = scmp.ne.s32.totalorder %s131, %s133
      %p140 = scmp.eq.s32.totalorder %s41, 1
      %p141 = por %p139, %p140
      %p142 = scmp.ne.s32.totalorder %s133, %s134
      %p143 = scmp.eq.s32.totalorder %s41, 0
      %p144 = por %p142, %p143
      %p145 = scmp.ne.s32.totalorder %s133, %s134
      %p146 = scmp.eq.s32.totalorder %s42, 1
      %p147 = por %p145, %p146
      %p149 = scmp.ne.s32.totalorder %s134, %s148
      %p150 = scmp.eq.s32.totalorder %s42, 0
      %p151 = por %p149, %p150
      %s153 = sadd.s32 %s152, 1
      %p156 = scmp.eq.s32.totalorder %s36, 1
      %p157 = scmp.ne.s32.totalorder %s152, %s154
      %p158 = scmp.eq.s32.totalorder %s36, 0
      %p159 = por %p157, %p158
      %p160 = scmp.ne.s32.totalorder %s152, %s154
      %p161 = scmp.eq.s32.totalorder %s41, 1
      %p162 = por %p160, %p161
      %p163 = scmp.ne.s32.totalorder %s154, %s155
      %p164 = scmp.eq.s32.totalorder %s41, 0
      %p165 = por %p163, %p164
      %p166 = scmp.ne.s32.totalorder %s154, %s155
      %p167 = scmp.eq.s32.totalorder %s42, 1
      %p168 = por %p166, %p167
      %p170 = scmp.ne.s32.totalorder %s155, %s169
      %p171 = scmp.eq.s32.totalorder %s42, 0
      %p172 = por %p170, %p171
      %s174 = sadd.s32 %s173, 1
      %p177 = scmp.eq.s32.totalorder %s36, 1
      %p178 = scmp.ne.s32.totalorder %s173, %s175
      %p179 = scmp.eq.s32.totalorder %s36, 0
      %p180 = por %p178, %p179
      %p181 = scmp.ne.s32.totalorder %s173, %s175
      %p182 = scmp.eq.s32.totalorder %s41, 1
      %p183 = por %p181, %p182
      %p184 = scmp.ne.s32.totalorder %s175, %s176
      %p185 = scmp.eq.s32.totalorder %s41, 0
      %p186 = por %p184, %p185
      %p187 = scmp.ne.s32.totalorder %s175, %s176
      %p188 = scmp.eq.s32.totalorder %s42, 1
      %p189 = por %p187, %p188
      %p191 = scmp.ne.s32.totalorder %s176, %s190
      %p192 = scmp.eq.s32.totalorder %s42, 0
      %p193 = por %p191, %p192
      %s195 = sadd.s32 %s194, 1
      %p198 = scmp.eq.s32.totalorder %s36, 1
      %p199 = scmp.ne.s32.totalorder %s194, %s196
      %p200 = scmp.eq.s32.totalorder %s36, 0
      %p201 = por %p199, %p200
      %p202 = scmp.ne.s32.totalorder %s194, %s196
      %p203 = scmp.eq.s32.totalorder %s41, 1
      %p204 = por %p202, %p203
      %p205 = scmp.ne.s32.totalorder %s196, %s197
      %p206 = scmp.eq.s32.totalorder %s41, 0
      %p207 = por %p205, %p206
      %p208 = scmp.ne.s32.totalorder %s196, %s197
      %p209 = scmp.eq.s32.totalorder %s42, 1
      %p210 = por %p208, %p209
      %p212 = scmp.ne.s32.totalorder %s197, %s211
      %p213 = scmp.eq.s32.totalorder %s42, 0
      %p214 = por %p212, %p213
      %s216 = sadd.s32 %s215, 1
      %p219 = scmp.eq.s32.totalorder %s36, 1
      %p220 = scmp.ne.s32.totalorder %s215, %s217
      %p221 = scmp.eq.s32.totalorder %s36, 0
      %p222 = por %p220, %p221
      %p223 = scmp.ne.s32.totalorder %s215, %s217
      %p224 = scmp.eq.s32.totalorder %s41, 1
      %p225 = por %p223, %p224
      %p226 = scmp.ne.s32.totalorder %s217, %s218
      %p227 = scmp.eq.s32.totalorder %s41, 0
      %p228 = por %p226, %p227
      %p229 = scmp.ne.s32.totalorder %s217, %s218
      %p230 = scmp.eq.s32.totalorder %s42, 1
      %p231 = por %p229, %p230
      %p233 = scmp.ne.s32.totalorder %s218, %s232
      %p234 = scmp.eq.s32.totalorder %s42, 0
      %p235 = por %p233, %p234
      %s237 = sadd.s32 %s236, 1
      %p240 = scmp.eq.s32.totalorder %s36, 1
      %p241 = scmp.ne.s32.totalorder %s236, %s238
      %p242 = scmp.eq.s32.totalorder %s36, 0
      %p243 = por %p241, %p242
      %p244 = scmp.ne.s32.totalorder %s236, %s238
      %p245 = scmp.eq.s32.totalorder %s41, 1
      %p246 = por %p244, %p245
      %p247 = scmp.ne.s32.totalorder %s238, %s239
      %p248 = scmp.eq.s32.totalorder %s41, 0
      %p249 = por %p247, %p248
      %p250 = scmp.ne.s32.totalorder %s238, %s239
      %p251 = scmp.eq.s32.totalorder %s42, 1
      %p252 = por %p250, %p251
      %p254 = scmp.ne.s32.totalorder %s239, %s253
      %p255 = scmp.eq.s32.totalorder %s42, 0
      %p256 = por %p254, %p255
      %s258 = sadd.s32 %s257, 1
      %p261 = scmp.eq.s32.totalorder %s36, 1
      %p262 = scmp.ne.s32.totalorder %s257, %s259
      %p263 = scmp.eq.s32.totalorder %s36, 0
      %p264 = por %p262, %p263
      %p265 = scmp.ne.s32.totalorder %s257, %s259
      %p266 = scmp.eq.s32.totalorder %s41, 1
      %p267 = por %p265, %p266
      %p268 = scmp.ne.s32.totalorder %s259, %s260
      %p269 = scmp.eq.s32.totalorder %s41, 0
      %p270 = por %p268, %p269
      %p271 = scmp.ne.s32.totalorder %s259, %s260
      %p272 = scmp.eq.s32.totalorder %s42, 1
      %p273 = por %p271, %p272
      %p275 = scmp.ne.s32.totalorder %s260, %s274
      %p276 = scmp.eq.s32.totalorder %s42, 0
      %p277 = por %p275, %p276
      %s279 = sadd.s32 %s278, 1
      %p282 = scmp.eq.s32.totalorder %s36, 1
      %p283 = scmp.ne.s32.totalorder %s278, %s280
      %p284 = scmp.eq.s32.totalorder %s36, 0
      %p285 = por %p283, %p284
      %p286 = scmp.ne.s32.totalorder %s278, %s280
      %p287 = scmp.eq.s32.totalorder %s41, 1
      %p288 = por %p286, %p287
      %p289 = scmp.ne.s32.totalorder %s280, %s281
      %p290 = scmp.eq.s32.totalorder %s41, 0
      %p291 = por %p289, %p290
      %p292 = scmp.ne.s32.totalorder %s280, %s281
      %p293 = scmp.eq.s32.totalorder %s42, 1
      %p294 = por %p292, %p293
      %p296 = scmp.ne.s32.totalorder %s281, %s295
      %p297 = scmp.eq.s32.totalorder %s42, 0
      %p298 = por %p296, %p297
      %s300 = sadd.s32 %s299, 1
      %p303 = scmp.eq.s32.totalorder %s36, 1
      %p304 = scmp.ne.s32.totalorder %s299, %s301
      %p305 = scmp.eq.s32.totalorder %s36, 0
      %p306 = por %p304, %p305
      %p307 = scmp.ne.s32.totalorder %s299, %s301
      %p308 = scmp.eq.s32.totalorder %s41, 1
      %p309 = por %p307, %p308
      %p310 = scmp.ne.s32.totalorder %s301, %s302
      %p311 = scmp.eq.s32.totalorder %s41, 0
      %p312 = por %p310, %p311
      %p313 = scmp.ne.s32.totalorder %s301, %s302
      %p314 = scmp.eq.s32.totalorder %s42, 1
      %p315 = por %p313, %p314
      %p317 = scmp.ne.s32.totalorder %s302, %s316
      %p318 = scmp.eq.s32.totalorder %s42, 0
      %p319 = por %p317, %p318
      %s321 = sadd.s32 %s320, 1
      %p324 = scmp.eq.s32.totalorder %s36, 1
      %p325 = scmp.ne.s32.totalorder %s320, %s322
      %p326 = scmp.eq.s32.totalorder %s36, 0
      %p327 = por %p325, %p326
      %p328 = scmp.ne.s32.totalorder %s320, %s322
      %p329 = scmp.eq.s32.totalorder %s41, 1
      %p330 = por %p328, %p329
      %p331 = scmp.ne.s32.totalorder %s322, %s323
      %p332 = scmp.eq.s32.totalorder %s41, 0
      %p333 = por %p331, %p332
      %p334 = scmp.ne.s32.totalorder %s322, %s323
      %p335 = scmp.eq.s32.totalorder %s42, 1
      %p336 = por %p334, %p335
      %p338 = scmp.ne.s32.totalorder %s323, %s337
      %p339 = scmp.eq.s32.totalorder %s42, 0
      %p340 = por %p338, %p339
      %s342 = sadd.s32 %s341, 1
      %p345 = scmp.eq.s32.totalorder %s36, 1
      %p346 = scmp.ne.s32.totalorder %s341, %s343
      %p347 = scmp.eq.s32.totalorder %s36, 0
      %p348 = por %p346, %p347
      %p349 = scmp.ne.s32.totalorder %s341, %s343
      %p350 = scmp.eq.s32.totalorder %s41, 1
      %p351 = por %p349, %p350
      %p352 = scmp.ne.s32.totalorder %s343, %s344
      %p353 = scmp.eq.s32.totalorder %s41, 0
      %p354 = por %p352, %p353
      %p355 = scmp.ne.s32.totalorder %s343, %s344
      %p356 = scmp.eq.s32.totalorder %s42, 1
      %p357 = por %p355, %p356
      %p359 = scmp.ne.s32.totalorder %s344, %s358
      %p360 = scmp.eq.s32.totalorder %s42, 0
      %p361 = por %p359, %p360
      %s363 = sadd.s32 %s362, 1
      %p366 = scmp.eq.s32.totalorder %s36, 1
      %p367 = scmp.ne.s32.totalorder %s362, %s364
      %p368 = scmp.eq.s32.totalorder %s36, 0
      %p369 = por %p367, %p368
      %p370 = scmp.ne.s32.totalorder %s362, %s364
      %p371 = scmp.eq.s32.totalorder %s41, 1
      %p372 = por %p370, %p371
      %p373 = scmp.ne.s32.totalorder %s364, %s365
      %p374 = scmp.eq.s32.totalorder %s41, 0
      %p375 = por %p373, %p374
      %p376 = scmp.ne.s32.totalorder %s364, %s365
      %p377 = scmp.eq.s32.totalorder %s42, 1
      %p378 = por %p376, %p377
      %p380 = scmp.ne.s32.totalorder %s365, %s379
      %p381 = scmp.eq.s32.totalorder %s42, 0
      %p382 = por %p380, %p381
      %s384 = sadd.s32 %s383, 1
      %p387 = scmp.eq.s32.totalorder %s36, 1
      %p388 = scmp.ne.s32.totalorder %s383, %s385
      %p389 = scmp.eq.s32.totalorder %s36, 0
      %p390 = por %p388, %p389
      %p391 = scmp.ne.s32.totalorder %s383, %s385
      %p392 = scmp.eq.s32.totalorder %s41, 1
      %p393 = por %p391, %p392
      %p394 = scmp.ne.s32.totalorder %s385, %s386
      %p395 = scmp.eq.s32.totalorder %s41, 0
      %p396 = por %p394, %p395
      %p397 = scmp.ne.s32.totalorder %s385, %s386
      %p398 = scmp.eq.s32.totalorder %s42, 1
      %p399 = por %p397, %p398
      %p401 = scmp.ne.s32.totalorder %s386, %s400
      %p402 = scmp.eq.s32.totalorder %s42, 0
      %p403 = por %p401, %p402
      %s404 = ssub.s32 %s43, %s55
      %s405 = ssub.s32 %s44, %s51
      %s406 = sor.u32 %s404, %s405
      %p407 = scmp.eq.s32.totalorder %s406, 0
      %s409 = sadd.s32 %s408, 1
      %s410 = scalar_select %p407, %s408, %s409
      %p413 = pneg %p407
      %p414 = scmp.eq.s32.totalorder %s36, 1
      %p415 = por %p413, %p414
      %p416 = scmp.ne.s32.totalorder %s408, %s411
      %p417 = scmp.eq.s32.totalorder %s36, 0
      %p418 = por %p416, %p417
      %p419 = scmp.ne.s32.totalorder %s408, %s411
      %p420 = scmp.eq.s32.totalorder %s41, 1
      %p421 = por %p419, %p420
      %p422 = scmp.ne.s32.totalorder %s411, %s412
      %p423 = scmp.eq.s32.totalorder %s41, 0
      %p424 = por %p422, %p423
      %p425 = scmp.ne.s32.totalorder %s411, %s412
      %p426 = scmp.eq.s32.totalorder %s42, 1
      %p427 = por %p425, %p426
      %p429 = scmp.ne.s32.totalorder %s412, %s428
      %p430 = scmp.eq.s32.totalorder %s42, 0
      %p431 = por %p429, %p430
      %p432 = scmp.le.s32.totalorder 1, %s36
      %p433 = scmp.lt.s32.totalorder %s36, 3
      %p434 = pnand %p432, %p433
      %p435 = pneg %p434
      // Predicated region
      $region9: #{tpu_custom_call.1} parent=5 // pred_check
        _
      $region10: #{tpu_custom_call.1} parent=5 // pred_check_branch
        %437 = sbr.rel (%p434) target = $region12
      $region11: #{tpu_custom_call.1} parent=5 // pred_region
        %s438 = ssub.s32 %s36, 1
        // Predicated region
        $region13: #{tpu_custom_call.1} parent=11 // pred_check
          %p439 = pneg %p123
        $region14: #{tpu_custom_call.1} parent=11 // pred_check_branch
          %441 = sbr.rel (%p439) target = $region16
        $region15: #{tpu_custom_call.1} parent=11 // pred_region
          %443 = vsyncadd [#allocation8], 0
          %s445 = sshll.u32 %s2, 4
          %s446 = int_to_ptr.hbm [resolvable:$true] %s445
          %s447 = sshll.u32 [#allocation9], 4
          %s448 = int_to_ptr.vmem [resolvable:$true] %s447
          %450 = dma.hbm_to_vmem [thread:$0]  %s446, 16, %s448, [#allocation8]
        $region16: #{tpu_custom_call.1} parent=11 // pred_fallthru
          _
        // Predicated region
        $region17: #{tpu_custom_call.1} parent=11 // pred_check
          %p451 = pneg %p144
        $region18: #{tpu_custom_call.1} parent=11 // pred_check_branch
          %453 = sbr.rel (%p451) target = $region20
        $region19: #{tpu_custom_call.1} parent=11 // pred_region
          %455 = vsyncadd [#allocation11], 0
          %s457 = sshll.u32 %s3, 4
          %s458 = int_to_ptr.hbm [resolvable:$true] %s457
          %s459 = sshll.u32 [#allocation10], 4
          %s460 = int_to_ptr.vmem [resolvable:$true] %s459
          %462 = dma.hbm_to_vmem [thread:$0]  %s458, 16, %s460, [#allocation11]
        $region20: #{tpu_custom_call.1} parent=11 // pred_fallthru
          _
        // Predicated region
        $region21: #{tpu_custom_call.1} parent=11 // pred_check
          %p463 = pneg %p165
        $region22: #{tpu_custom_call.1} parent=11 // pred_check_branch
          %465 = sbr.rel (%p463) target = $region24
        $region23: #{tpu_custom_call.1} parent=11 // pred_region
          %467 = vsyncadd [#allocation11], 0
          %s468 = sshll.u32 %s4, 4
          %s469 = int_to_ptr.hbm [resolvable:$true] %s468
          %s470 = sshll.u32 [#allocation12], 4
          %s471 = int_to_ptr.vmem [resolvable:$true] %s470
          %476 = dma.hbm_to_vmem [thread:$0]  %s469, 1024, %s471, [#allocation11], 64, 64, 4
        $region24: #{tpu_custom_call.1} parent=11 // pred_fallthru
          _
        // Predicated region
        $region25: #{tpu_custom_call.1} parent=11 // pred_check
          %p477 = pneg %p186
        $region26: #{tpu_custom_call.1} parent=11 // pred_check_branch
          %479 = sbr.rel (%p477) target = $region28
        $region27: #{tpu_custom_call.1} parent=11 // pred_region
          _
        $region28: #{tpu_custom_call.1} parent=11 // pred_fallthru
          _
        // Predicated region
        $region29: #{tpu_custom_call.1} parent=11 // pred_check
          %p480 = pneg %p207
        $region30: #{tpu_custom_call.1} parent=11 // pred_check_branch
          %482 = sbr.rel (%p480) target = $region32
        $region31: #{tpu_custom_call.1} parent=11 // pred_region
          %484 = vsyncadd [#allocation14], 0
          %s486 = sshll.u32 %s6, 4
          %s487 = int_to_ptr.hbm [resolvable:$true] %s486
          %s488 = sshll.u32 [#allocation13], 4
          %s489 = int_to_ptr.vmem [resolvable:$true] %s488
          %491 = dma.hbm_to_vmem [thread:$0]  %s487, 16, %s489, [#allocation14]
        $region32: #{tpu_custom_call.1} parent=11 // pred_fallthru
          _
        // Predicated region
        $region33: #{tpu_custom_call.1} parent=11 // pred_check
          %p492 = pneg %p228
        $region34: #{tpu_custom_call.1} parent=11 // pred_check_branch
          %494 = sbr.rel (%p492) target = $region36
        $region35: #{tpu_custom_call.1} parent=11 // pred_region
          %496 = vsyncadd [#allocation14], 0
          %s498 = sshll.u32 %s7, 4
          %s499 = int_to_ptr.hbm [resolvable:$true] %s498
          %s500 = sshll.u32 [#allocation15], 4
          %s501 = int_to_ptr.vmem [resolvable:$true] %s500
          %503 = dma.hbm_to_vmem [thread:$0]  %s499, 16, %s501, [#allocation14]
        $region36: #{tpu_custom_call.1} parent=11 // pred_fallthru
          _
        // Predicated region
        $region37: #{tpu_custom_call.1} parent=11 // pred_check
          %p504 = pneg %p249
        $region38: #{tpu_custom_call.1} parent=11 // pred_check_branch
          %506 = sbr.rel (%p504) target = $region40
        $region39: #{tpu_custom_call.1} parent=11 // pred_region
          %508 = vsyncadd [#allocation17], 0
          %s509 = sshll.u32 %s8, 4
          %s510 = int_to_ptr.hbm [resolvable:$true] %s509
          %s511 = sshll.u32 [#allocation16], 4
          %s512 = int_to_ptr.vmem [resolvable:$true] %s511
          %517 = dma.hbm_to_vmem [thread:$0]  %s510, 1536, %s512, [#allocation17], 64, 64, 4
        $region40: #{tpu_custom_call.1} parent=11 // pred_fallthru
          _
        // Predicated region
        $region41: #{tpu_custom_call.1} parent=11 // pred_check
          %p518 = pneg %p270
        $region42: #{tpu_custom_call.1} parent=11 // pred_check_branch
          %520 = sbr.rel (%p518) target = $region44
        $region43: #{tpu_custom_call.1} parent=11 // pred_region
          _
        $region44: #{tpu_custom_call.1} parent=11 // pred_fallthru
          _
        // Predicated region
        $region45: #{tpu_custom_call.1} parent=11 // pred_check
          %p521 = pneg %p291
        $region46: #{tpu_custom_call.1} parent=11 // pred_check_branch
          %523 = sbr.rel (%p521) target = $region48
        $region47: #{tpu_custom_call.1} parent=11 // pred_region
          %525 = vsyncadd [#allocation17], 0
          %s527 = sshll.u32 %s10, 4
          %s528 = int_to_ptr.hbm [resolvable:$true] %s527
          %s529 = sshll.u32 [#allocation18], 4
          %s530 = int_to_ptr.vmem [resolvable:$true] %s529
          %532 = dma.hbm_to_vmem [thread:$0]  %s528, 16, %s530, [#allocation17]
        $region48: #{tpu_custom_call.1} parent=11 // pred_fallthru
          _
        // Predicated region
        $region49: #{tpu_custom_call.1} parent=11 // pred_check
          %p533 = pneg %p312
        $region50: #{tpu_custom_call.1} parent=11 // pred_check_branch
          %535 = sbr.rel (%p533) target = $region52
        $region51: #{tpu_custom_call.1} parent=11 // pred_region
          %537 = vsyncadd [#allocation20], 0
          %s539 = sshll.u32 %s11, 4
          %s540 = int_to_ptr.hbm [resolvable:$true] %s539
          %s541 = sshll.u32 [#allocation19], 4
          %s542 = int_to_ptr.vmem [resolvable:$true] %s541
          %544 = dma.hbm_to_vmem [thread:$0]  %s540, 16, %s542, [#allocation20]
        $region52: #{tpu_custom_call.1} parent=11 // pred_fallthru
          _
        // Predicated region
        $region53: #{tpu_custom_call.1} parent=11 // pred_check
          %p545 = pneg %p333
        $region54: #{tpu_custom_call.1} parent=11 // pred_check_branch
          %547 = sbr.rel (%p545) target = $region56
        $region55: #{tpu_custom_call.1} parent=11 // pred_region
          %549 = vsyncadd [#allocation20], 0
          %s550 = sshll.u32 %s12, 4
          %s551 = int_to_ptr.hbm [resolvable:$true] %s550
          %s552 = sshll.u32 [#allocation21], 4
          %s553 = int_to_ptr.vmem [resolvable:$true] %s552
          %558 = dma.hbm_to_vmem [thread:$0]  %s551, 1536, %s553, [#allocation20], 64, 64, 4
        $region56: #{tpu_custom_call.1} parent=11 // pred_fallthru
          _
        // Predicated region
        $region57: #{tpu_custom_call.1} parent=11 // pred_check
          %p559 = pneg %p354
        $region58: #{tpu_custom_call.1} parent=11 // pred_check_branch
          %561 = sbr.rel (%p559) target = $region60
        $region59: #{tpu_custom_call.1} parent=11 // pred_region
          _
        $region60: #{tpu_custom_call.1} parent=11 // pred_fallthru
          _
        // Predicated region
        $region61: #{tpu_custom_call.1} parent=11 // pred_check
          %p562 = pneg %p375
        $region62: #{tpu_custom_call.1} parent=11 // pred_check_branch
          %564 = sbr.rel (%p562) target = $region64
        $region63: #{tpu_custom_call.1} parent=11 // pred_region
          %566 = vsyncadd [#allocation23], 0
          %s567 = sshll.u32 %s14, 4
          %s568 = int_to_ptr.hbm [resolvable:$true] %s567
          %s569 = sshll.u32 [#allocation22], 4
          %s570 = int_to_ptr.vmem [resolvable:$true] %s569
          %575 = dma.hbm_to_vmem [thread:$0]  %s568, 4096, %s570, [#allocation23], 64, 64, 4
        $region64: #{tpu_custom_call.1} parent=11 // pred_fallthru
          _
        // Predicated region
        $region65: #{tpu_custom_call.1} parent=11 // pred_check
          %p576 = pneg %p396
        $region66: #{tpu_custom_call.1} parent=11 // pred_check_branch
          %578 = sbr.rel (%p576) target = $region68
        $region67: #{tpu_custom_call.1} parent=11 // pred_region
          _
        $region68: #{tpu_custom_call.1} parent=11 // pred_fallthru
          _
      $region12: #{tpu_custom_call.1} parent=5 // pred_fallthru
        _
      %p579 = scmp.lt.s32.totalorder %s36, 2
      // Predicated region
      $region69: #{tpu_custom_call.1} parent=5 // pred_check
        %p580 = pneg %p579
      $region70: #{tpu_custom_call.1} parent=5 // pred_check_branch
        %582 = sbr.rel (%p580) target = $region72
      $region71: #{tpu_custom_call.1} parent=5 // pred_region
        // Predicated region
        $region73: #{tpu_custom_call.1} parent=71 // pred_check
          %p583 = pneg %p70
        $region74: #{tpu_custom_call.1} parent=71 // pred_check_branch
          %585 = sbr.rel (%p583) target = $region76
        $region75: #{tpu_custom_call.1} parent=71 // pred_region
          %s586 = sand.u32 %s60, 1
          %s587 = scalar_lea.sflag [#allocation5], %s586
          %s588 = sand.u32 %s60, 1
          %s589 = smul.addr %s588, 8
          %s590 = scalar_lea.vmem [#allocation4], %s589
          %592 = vsyncadd %s587, 0
          %s593 = sadd.s32 %s44, %s43
          %s594 = smul.addr %s593, 8
          %s595 = scalar_lea.hbm %s0, %s594
          %s597 = sshll.u32 %s595, 4
          %s598 = int_to_ptr.hbm [resolvable:$true] %s597
          %s599 = sshll.u32 %s590, 4
          %s600 = int_to_ptr.vmem [resolvable:$true] %s599
          %602 = dma.hbm_to_vmem [thread:$0]  %s598, 128, %s600, %s587
        $region76: #{tpu_custom_call.1} parent=71 // pred_fallthru
          _
        // Predicated region
        $region77: #{tpu_custom_call.1} parent=71 // pred_check
          %p603 = pneg %p96
        $region78: #{tpu_custom_call.1} parent=71 // pred_check_branch
          %605 = sbr.rel (%p603) target = $region80
        $region79: #{tpu_custom_call.1} parent=71 // pred_region
          %s606 = sand.u32 %s36, 1
          %s607 = scalar_lea.sflag [#allocation8], %s606
          %s608 = sand.u32 %s86, 1
          %s609 = smul.addr %s608, 8
          %s610 = scalar_lea.vmem [#allocation7], %s609
          %612 = vsyncadd %s607, 0
          %s613 = smul.addr %s43, 8
          %s614 = scalar_lea.hbm %s1, %s613
          %s616 = sshll.u32 %s614, 4
          %s617 = int_to_ptr.hbm [resolvable:$true] %s616
          %s618 = sshll.u32 %s610, 4
          %s619 = int_to_ptr.vmem [resolvable:$true] %s618
          %621 = dma.hbm_to_vmem [thread:$0]  %s617, 128, %s619, %s607
        $region80: #{tpu_custom_call.1} parent=71 // pred_fallthru
          _
      $region72: #{tpu_custom_call.1} parent=5 // pred_fallthru
        _
      %p622 = scmp.le.s32.totalorder 1, %s36
      %p623 = scmp.lt.s32.totalorder %s36, 3
      %p624 = pnand %p622, %p623
      %p625 = pneg %p624
      // Predicated region
      $region81: #{tpu_custom_call.1} parent=5 // pred_check
        _
      $region82: #{tpu_custom_call.1} parent=5 // pred_check_branch
        %627 = sbr.rel (%p624) target = $region84
      $region83: #{tpu_custom_call.1} parent=5 // pred_region
        %s628 = ssub.s32 %s36, 1
        %s629 = sand.u32 %s63, 1
        %s630 = scalar_lea.sflag [#allocation5], %s629
        %s631 = sand.u32 %s63, 1
        %s632 = smul.addr %s631, 8
        %s633 = scalar_lea.vmem [#allocation4], %s632
        // Predicated region
        $region85: #{tpu_custom_call.1} parent=83 // pred_check
          %p634 = pneg %p76
        $region86: #{tpu_custom_call.1} parent=83 // pred_check_branch
          %636 = sbr.rel (%p634) target = $region88
        $region87: #{tpu_custom_call.1} parent=83 // pred_region
          %638 = dma.done %s630, 128
        $region88: #{tpu_custom_call.1} parent=83 // pred_fallthru
          _
        %s639 = sand.u32 %s41, 1
        %s640 = scalar_lea.sflag [#allocation8], %s639
        %s641 = sand.u32 %s89, 1
        %s642 = smul.addr %s641, 8
        %s643 = scalar_lea.vmem [#allocation7], %s642
        // Predicated region
        $region89: #{tpu_custom_call.1} parent=83 // pred_check
          %p644 = pneg %p102
        $region90: #{tpu_custom_call.1} parent=83 // pred_check_branch
          %646 = sbr.rel (%p644) target = $region92
        $region91: #{tpu_custom_call.1} parent=83 // pred_region
          %648 = dma.done %s640, 128
        $region92: #{tpu_custom_call.1} parent=83 // pred_fallthru
          _
        // Predicated region
        $region93: #{tpu_custom_call.1} parent=83 // pred_check
          %p649 = pneg %p123
        $region94: #{tpu_custom_call.1} parent=83 // pred_check_branch
          %651 = sbr.rel (%p649) target = $region96
        $region95: #{tpu_custom_call.1} parent=83 // pred_region
          %653 = dma.done [#allocation8], 16
        $region96: #{tpu_custom_call.1} parent=83 // pred_fallthru
          _
        // Predicated region
        $region97: #{tpu_custom_call.1} parent=83 // pred_check
          %p654 = pneg %p144
        $region98: #{tpu_custom_call.1} parent=83 // pred_check_branch
          %656 = sbr.rel (%p654) target = $region100
        $region99: #{tpu_custom_call.1} parent=83 // pred_region
          %658 = dma.done [#allocation11], 16
        $region100: #{tpu_custom_call.1} parent=83 // pred_fallthru
          _
        // Predicated region
        $region101: #{tpu_custom_call.1} parent=83 // pred_check
          %p659 = pneg %p165
        $region102: #{tpu_custom_call.1} parent=83 // pred_check_branch
          %661 = sbr.rel (%p659) target = $region104
        $region103: #{tpu_custom_call.1} parent=83 // pred_region
          %663 = dma.done [#allocation11], 1024
        $region104: #{tpu_custom_call.1} parent=83 // pred_fallthru
          _
        // Predicated region
        $region105: #{tpu_custom_call.1} parent=83 // pred_check
          %p664 = pneg %p207
        $region106: #{tpu_custom_call.1} parent=83 // pred_check_branch
          %666 = sbr.rel (%p664) target = $region108
        $region107: #{tpu_custom_call.1} parent=83 // pred_region
          %668 = dma.done [#allocation14], 16
        $region108: #{tpu_custom_call.1} parent=83 // pred_fallthru
          _
        // Predicated region
        $region109: #{tpu_custom_call.1} parent=83 // pred_check
          %p669 = pneg %p228
        $region110: #{tpu_custom_call.1} parent=83 // pred_check_branch
          %671 = sbr.rel (%p669) target = $region112
        $region111: #{tpu_custom_call.1} parent=83 // pred_region
          %673 = dma.done [#allocation14], 16
        $region112: #{tpu_custom_call.1} parent=83 // pred_fallthru
          _
        // Predicated region
        $region113: #{tpu_custom_call.1} parent=83 // pred_check
          %p674 = pneg %p249
        $region114: #{tpu_custom_call.1} parent=83 // pred_check_branch
          %676 = sbr.rel (%p674) target = $region116
        $region115: #{tpu_custom_call.1} parent=83 // pred_region
          %678 = dma.done [#allocation17], 1536
        $region116: #{tpu_custom_call.1} parent=83 // pred_fallthru
          _
        // Predicated region
        $region117: #{tpu_custom_call.1} parent=83 // pred_check
          %p679 = pneg %p291
        $region118: #{tpu_custom_call.1} parent=83 // pred_check_branch
          %681 = sbr.rel (%p679) target = $region120
        $region119: #{tpu_custom_call.1} parent=83 // pred_region
          %683 = dma.done [#allocation17], 16
        $region120: #{tpu_custom_call.1} parent=83 // pred_fallthru
          _
        // Predicated region
        $region121: #{tpu_custom_call.1} parent=83 // pred_check
          %p684 = pneg %p312
        $region122: #{tpu_custom_call.1} parent=83 // pred_check_branch
          %686 = sbr.rel (%p684) target = $region124
        $region123: #{tpu_custom_call.1} parent=83 // pred_region
          %688 = dma.done [#allocation20], 16
        $region124: #{tpu_custom_call.1} parent=83 // pred_fallthru
          _
        // Predicated region
        $region125: #{tpu_custom_call.1} parent=83 // pred_check
          %p689 = pneg %p333
        $region126: #{tpu_custom_call.1} parent=83 // pred_check_branch
          %691 = sbr.rel (%p689) target = $region128
        $region127: #{tpu_custom_call.1} parent=83 // pred_region
          %693 = dma.done [#allocation20], 1536
        $region128: #{tpu_custom_call.1} parent=83 // pred_fallthru
          _
        // Predicated region
        $region129: #{tpu_custom_call.1} parent=83 // pred_check
          %p694 = pneg %p375
        $region130: #{tpu_custom_call.1} parent=83 // pred_check_branch
          %696 = sbr.rel (%p694) target = $region132
        $region131: #{tpu_custom_call.1} parent=83 // pred_region
          %698 = dma.done [#allocation23], 4096
        $region132: #{tpu_custom_call.1} parent=83 // pred_fallthru
          _
        %s699 = sand.u32 %s63, 1
        %s700 = scalar_lea.sflag [#allocation5], %s699
        %s701 = sand.u32 %s63, 1
        %s702 = smul.addr %s701, 8
        %s703 = scalar_lea.vmem [#allocation4], %s702
        %p704 = pneg %p76
        %p705 = pneg %p73
        %s706 = sand.u32 %s41, 1
        %s707 = scalar_lea.sflag [#allocation8], %s706
        %s708 = sand.u32 %s89, 1
        %s709 = smul.addr %s708, 8
        %s710 = scalar_lea.vmem [#allocation7], %s709
        %p711 = pneg %p102
        %p712 = pneg %p99
        %p713 = pneg %p123
        %p714 = pneg %p120
        %p715 = pneg %p144
        %p716 = pneg %p141
        %p717 = pneg %p165
        %p718 = pneg %p162
        %p719 = pneg %p186
        %p720 = pneg %p183
        %p721 = pneg %p207
        %p722 = pneg %p204
        %p723 = pneg %p228
        %p724 = pneg %p225
        %p725 = pneg %p249
        %p726 = pneg %p246
        %p727 = pneg %p270
        %p728 = pneg %p267
        %p729 = pneg %p291
        %p730 = pneg %p288
        %p731 = pneg %p312
        %p732 = pneg %p309
        %p733 = pneg %p333
        %p734 = pneg %p330
        %p735 = pneg %p354
        %p736 = pneg %p351
        %p737 = pneg %p375
        %p738 = pneg %p372
        %p739 = pneg %p396
        %p740 = pneg %p393
        %p741 = pneg %p424
        %p742 = pneg %p421
        %s743 = sand.u32 %s411, 1
        %s744 = scalar_lea.sflag [#allocation6], %s743
        %s745 = sand.u32 %s411, 1
        %s746 = smul.addr %s745, 8
        %s747 = scalar_lea.vmem [#allocation24], %s746
        %p749 = scmp.eq.s32.totalorder %s46, 0
        // Predicated region
        $region133: #{tpu_custom_call.1} parent=83 // pred_check
          %p750 = pneg %p749
        $region134: #{tpu_custom_call.1} parent=83 // pred_check_branch
          %752 = sbr.rel (%p750) target = $region136
        $region135: #{tpu_custom_call.1} parent=83 // pred_region
          %v753 = vld [vmem:[%s643] sm:$0xff]
          %vm754 = vcmask 392192
          %v755 = vsel %vm754, %v753, 0.0
          %756 = vadd.xlane.f32.xlu0 %v755
          %v757 = vpop.xlane.xlu0 %756
          %v758 = vrcp.pop 48.0
          %v759 = vmul.f32 48.0, %v758
          %v760 = vsub.f32 1.0, %v759
          %v761 = vmul.f32 %v758, %v760
          %v762 = vadd.f32 %v758, %v761
          %vm763 = vweird.f32 %v758
          %v764 = vsel %vm763, %v758, %v762
          %v765 = vmul.f32 %v757, %v764
          %v766 = vsub.f32 %v753, %v765
          %v767 = vmul.f32 %v766, %v766
          %v768 = vsel %vm754, %v767, 0.0
          %769 = vadd.xlane.f32.xlu0 %v768
          %v770 = vpop.xlane.xlu0 %769
          %v771 = vmul.f32 %v770, %v764
          %v772 = vadd.f32 %v771, 1e-05
          %v773 = vrsqrt.pop %v772
          %v774 = vmul.f32 %v773, %v772
          %v775 = vmul.f32 %v774, %v773
          %v776 = vmul.f32 0.5, %v775
          %v777 = vsub.f32 1.5, %v776
          %v778 = vmul.f32 %v773, %v777
          %vm779 = vweird.f32 %v772
          %vm780 = vweird.f32 %v773
          %vm781 = vmor %vm779, %vm780
          %v782 = vsel %vm781, %v773, %v778
          %v783 = vmul.f32 %v766, %v782
          %v784 = vld [vmem:[#allocation13] sm:$0x1]
          %v786 = vperm.slane %v784, 0
          %v788 = vmul.f32 %v783, %v786
          %v789 = vld [vmem:[#allocation15] sm:$0x1]
          %v791 = vperm.slane %v789, 0
          %v793 = vadd.f32 %v788, %v791
          %v794 = vpack.c.bf16 %v793, %v793
          %v795 = vld [vmem:[#allocation18] sm:$0x1]
          %v797 = vperm.slane %v795, 0
          %v799 = vmul.f32 %v783, %v797
          %v800 = vld [vmem:[#allocation19] sm:$0x1]
          %v802 = vperm.slane %v800, 0
          %v804 = vadd.f32 %v799, %v802
          %v805 = vpack.c.bf16 %v804, %v804
          %v806 = vld [vmem:[#allocation16] sm:$0xf]
          %v807 = vld [vmem:[#allocation16 + $0x4] sm:$0xf]
          %v808 = vld [vmem:[#allocation16 + $0x8] sm:$0xf]
          %v809 = vld [vmem:[#allocation16 + $0xc] sm:$0xf]
          %v810 = vld [vmem:[#allocation16 + $0x10] sm:$0xf]
          %v811 = vld [vmem:[#allocation16 + $0x14] sm:$0xf]
          %v812 = vld [vmem:[%s9] sm:$0x1]
          %v814 = vperm.slane %v812, 0
          %v822 = vunpack.c.l.b16 %v806
          %v823 = vunpack.c.l.b16 %v807
          %v824 = vunpack.c.l.b16 %v808
          %v825 = vunpack.c.l.b16 %v809
          %v826 = vunpack.c.l.b16 %v810
          %v827 = vunpack.c.l.b16 %v811
          %v828 = vpack.c.b16 %v823, %v822
          %v829 = vpack.c.b16 %v825, %v824
          %v830 = vpack.c.b16 %v827, %v826
          %v835 = vsel %vm754, %v794, 0
          %837 = vmatpush.bf16.msra.mxu0 0
          %838 = vmatpush.bf16.msra.mxu0 0
          %839 = vmatpush.bf16.msra.mxu0 0
          %840 = vmatpush.bf16.msra.mxu0 0
          %841 = vmatpush.bf16.msra.mxu0 0
          %842 = vmatpush.bf16.msra.mxu0 %v830
          %843 = vmatpush.bf16.msra.mxu0 %v829
          %844 = vmatpush.bf16.msra.mxu0 %v828
          %845 = vmatmul.bf16.gmra.mxu0 %v835
          %v846 = vpop.f32.mrf.mxu0
          %v847 = vadd.f32 %v814, %v846
          %v848 = vpop.f32.mrf.mxu0
          %849 = vdwg.mxu0
          %v850 = vpack.c.bf16 %v847, %v847
          %851 = vst [vmem:[#allocation2] sm:$0xf] %v850
          %v852 = vld [vmem:[#allocation21] sm:$0xf]
          %v853 = vld [vmem:[#allocation21 + $0x4] sm:$0xf]
          %v854 = vld [vmem:[#allocation21 + $0x8] sm:$0xf]
          %v855 = vld [vmem:[#allocation21 + $0xc] sm:$0xf]
          %v856 = vld [vmem:[#allocation21 + $0x10] sm:$0xf]
          %v857 = vld [vmem:[#allocation21 + $0x14] sm:$0xf]
          %v858 = vld [vmem:[%s13] sm:$0x1]
          %v860 = vperm.slane %v858, 0
          %v868 = vunpack.c.l.b16 %v852
          %v869 = vunpack.c.l.b16 %v853
          %v870 = vunpack.c.l.b16 %v854
          %v871 = vunpack.c.l.b16 %v855
          %v872 = vunpack.c.l.b16 %v856
          %v873 = vunpack.c.l.b16 %v857
          %v874 = vpack.c.b16 %v869, %v868
          %v875 = vpack.c.b16 %v871, %v870
          %v876 = vpack.c.b16 %v873, %v872
          %v881 = vsel %vm754, %v805, 0
          %883 = vmatpush.bf16.msra.mxu0 0
          %884 = vmatpush.bf16.msra.mxu0 0
          %885 = vmatpush.bf16.msra.mxu0 0
          %886 = vmatpush.bf16.msra.mxu0 0
          %887 = vmatpush.bf16.msra.mxu0 0
          %888 = vmatpush.bf16.msra.mxu0 %v876
          %889 = vmatpush.bf16.msra.mxu0 %v875
          %890 = vmatpush.bf16.msra.mxu0 %v874
          %891 = vmatmul.bf16.gmra.mxu0 %v881
          %v892 = vpop.f32.mrf.mxu0
          %v893 = vadd.f32 %v860, %v892
          %v894 = vpop.f32.mrf.mxu0
          %895 = vdwg.mxu0
          %v896 = vpack.c.bf16 %v893, %v893
          %897 = vst [vmem:[#allocation3] sm:$0xf] %v896
          %s898 = scalar_lea.vmem [#allocation16], 24
          %v899 = vld [vmem:[%s898] sm:$0xf]
          %v900 = vld [vmem:[%s898 + $0x4] sm:$0xf]
          %v901 = vld [vmem:[%s898 + $0x8] sm:$0xf]
          %v902 = vld [vmem:[%s898 + $0xc] sm:$0xf]
          %v903 = vld [vmem:[%s898 + $0x10] sm:$0xf]
          %v904 = vld [vmem:[%s898 + $0x14] sm:$0xf]
          %s905 = scalar_lea.vmem %s9, 1
          %v906 = vld [vmem:[%s905] sm:$0x1]
          %v908 = vperm.slane %v906, 0
          %v916 = vunpack.c.l.b16 %v899
          %v917 = vunpack.c.l.b16 %v900
          %v918 = vunpack.c.l.b16 %v901
          %v919 = vunpack.c.l.b16 %v902
          %v920 = vunpack.c.l.b16 %v903
          %v921 = vunpack.c.l.b16 %v904
          %v922 = vpack.c.b16 %v917, %v916
          %v923 = vpack.c.b16 %v919, %v918
          %v924 = vpack.c.b16 %v921, %v920
          %928 = vmatpush.bf16.msra.mxu0 0
          %929 = vmatpush.bf16.msra.mxu0 0
          %930 = vmatpush.bf16.msra.mxu0 0
          %931 = vmatpush.bf16.msra.mxu0 0
          %932 = vmatpush.bf16.msra.mxu0 0
          %933 = vmatpush.bf16.msra.mxu0 %v924
          %934 = vmatpush.bf16.msra.mxu0 %v923
          %935 = vmatpush.bf16.msra.mxu0 %v922
          %936 = vmatmul.bf16.gmra.mxu0 %v835
          %v937 = vpop.f32.mrf.mxu0
          %v938 = vadd.f32 %v908, %v937
          %v939 = vpop.f32.mrf.mxu0
          %940 = vdwg.mxu0
          %v941 = vpack.c.bf16 %v938, %v938
          %s942 = scalar_lea.vmem [#allocation2], 4
          %943 = vst [vmem:[%s942] sm:$0xf] %v941
          %s944 = scalar_lea.vmem [#allocation21], 24
          %v945 = vld [vmem:[%s944] sm:$0xf]
          %v946 = vld [vmem:[%s944 + $0x4] sm:$0xf]
          %v947 = vld [vmem:[%s944 + $0x8] sm:$0xf]
          %v948 = vld [vmem:[%s944 + $0xc] sm:$0xf]
          %v949 = vld [vmem:[%s944 + $0x10] sm:$0xf]
          %v950 = vld [vmem:[%s944 + $0x14] sm:$0xf]
          %s951 = scalar_lea.vmem %s13, 1
          %v952 = vld [vmem:[%s951] sm:$0x1]
          %v954 = vperm.slane %v952, 0
          %v962 = vunpack.c.l.b16 %v945
          %v963 = vunpack.c.l.b16 %v946
          %v964 = vunpack.c.l.b16 %v947
          %v965 = vunpack.c.l.b16 %v948
          %v966 = vunpack.c.l.b16 %v949
          %v967 = vunpack.c.l.b16 %v950
          %v968 = vpack.c.b16 %v963, %v962
          %v969 = vpack.c.b16 %v965, %v964
          %v970 = vpack.c.b16 %v967, %v966
          %974 = vmatpush.bf16.msra.mxu0 0
          %975 = vmatpush.bf16.msra.mxu0 0
          %976 = vmatpush.bf16.msra.mxu0 0
          %977 = vmatpush.bf16.msra.mxu0 0
          %978 = vmatpush.bf16.msra.mxu0 0
          %979 = vmatpush.bf16.msra.mxu0 %v970
          %980 = vmatpush.bf16.msra.mxu0 %v969
          %981 = vmatpush.bf16.msra.mxu0 %v968
          %982 = vmatmul.bf16.gmra.mxu0 %v881
          %v983 = vpop.f32.mrf.mxu0
          %v984 = vadd.f32 %v954, %v983
          %v985 = vpop.f32.mrf.mxu0
          %986 = vdwg.mxu0
          %v987 = vpack.c.bf16 %v984, %v984
          %s988 = scalar_lea.vmem [#allocation3], 4
          %989 = vst [vmem:[%s988] sm:$0xf] %v987
          %s990 = scalar_lea.vmem [#allocation16], 48
          %v991 = vld [vmem:[%s990] sm:$0xf]
          %v992 = vld [vmem:[%s990 + $0x4] sm:$0xf]
          %v993 = vld [vmem:[%s990 + $0x8] sm:$0xf]
          %v994 = vld [vmem:[%s990 + $0xc] sm:$0xf]
          %v995 = vld [vmem:[%s990 + $0x10] sm:$0xf]
          %v996 = vld [vmem:[%s990 + $0x14] sm:$0xf]
          %s997 = scalar_lea.vmem %s9, 2
          %v998 = vld [vmem:[%s997] sm:$0x1]
          %v1000 = vperm.slane %v998, 0
          %v1008 = vunpack.c.l.b16 %v991
          %v1009 = vunpack.c.l.b16 %v992
          %v1010 = vunpack.c.l.b16 %v993
          %v1011 = vunpack.c.l.b16 %v994
          %v1012 = vunpack.c.l.b16 %v995
          %v1013 = vunpack.c.l.b16 %v996
          %v1014 = vpack.c.b16 %v1009, %v1008
          %v1015 = vpack.c.b16 %v1011, %v1010
          %v1016 = vpack.c.b16 %v1013, %v1012
          %1020 = vmatpush.bf16.msra.mxu0 0
          %1021 = vmatpush.bf16.msra.mxu0 0
          %1022 = vmatpush.bf16.msra.mxu0 0
          %1023 = vmatpush.bf16.msra.mxu0 0
          %1024 = vmatpush.bf16.msra.mxu0 0
          %1025 = vmatpush.bf16.msra.mxu0 %v1016
          %1026 = vmatpush.bf16.msra.mxu0 %v1015
          %1027 = vmatpush.bf16.msra.mxu0 %v1014
          %1028 = vmatmul.bf16.gmra.mxu0 %v835
          %v1029 = vpop.f32.mrf.mxu0
          %v1030 = vadd.f32 %v1000, %v1029
          %v1031 = vpop.f32.mrf.mxu0
          %1032 = vdwg.mxu0
          %v1033 = vpack.c.bf16 %v1030, %v1030
          %s1034 = scalar_lea.vmem [#allocation2], 8
          %1035 = vst [vmem:[%s1034] sm:$0xf] %v1033
          %s1036 = scalar_lea.vmem [#allocation21], 48
          %v1037 = vld [vmem:[%s1036] sm:$0xf]
          %v1038 = vld [vmem:[%s1036 + $0x4] sm:$0xf]
          %v1039 = vld [vmem:[%s1036 + $0x8] sm:$0xf]
          %v1040 = vld [vmem:[%s1036 + $0xc] sm:$0xf]
          %v1041 = vld [vmem:[%s1036 + $0x10] sm:$0xf]
          %v1042 = vld [vmem:[%s1036 + $0x14] sm:$0xf]
          %s1043 = scalar_lea.vmem %s13, 2
          %v1044 = vld [vmem:[%s1043] sm:$0x1]
          %v1046 = vperm.slane %v1044, 0
          %v1054 = vunpack.c.l.b16 %v1037
          %v1055 = vunpack.c.l.b16 %v1038
          %v1056 = vunpack.c.l.b16 %v1039
          %v1057 = vunpack.c.l.b16 %v1040
          %v1058 = vunpack.c.l.b16 %v1041
          %v1059 = vunpack.c.l.b16 %v1042
          %v1060 = vpack.c.b16 %v1055, %v1054
          %v1061 = vpack.c.b16 %v1057, %v1056
          %v1062 = vpack.c.b16 %v1059, %v1058
          %1066 = vmatpush.bf16.msra.mxu0 0
          %1067 = vmatpush.bf16.msra.mxu0 0
          %1068 = vmatpush.bf16.msra.mxu0 0
          %1069 = vmatpush.bf16.msra.mxu0 0
          %1070 = vmatpush.bf16.msra.mxu0 0
          %1071 = vmatpush.bf16.msra.mxu0 %v1062
          %1072 = vmatpush.bf16.msra.mxu0 %v1061
          %1073 = vmatpush.bf16.msra.mxu0 %v1060
          %1074 = vmatmul.bf16.gmra.mxu0 %v881
          %v1075 = vpop.f32.mrf.mxu0
          %v1076 = vadd.f32 %v1046, %v1075
          %v1077 = vpop.f32.mrf.mxu0
          %1078 = vdwg.mxu0
          %v1079 = vpack.c.bf16 %v1076, %v1076
          %s1080 = scalar_lea.vmem [#allocation3], 8
          %1081 = vst [vmem:[%s1080] sm:$0xf] %v1079
          %s1082 = scalar_lea.vmem [#allocation16], 72
          %v1083 = vld [vmem:[%s1082] sm:$0xf]
          %v1084 = vld [vmem:[%s1082 + $0x4] sm:$0xf]
          %v1085 = vld [vmem:[%s1082 + $0x8] sm:$0xf]
          %v1086 = vld [vmem:[%s1082 + $0xc] sm:$0xf]
          %v1087 = vld [vmem:[%s1082 + $0x10] sm:$0xf]
          %v1088 = vld [vmem:[%s1082 + $0x14] sm:$0xf]
          %s1089 = scalar_lea.vmem %s9, 3
          %v1090 = vld [vmem:[%s1089] sm:$0x1]
          %v1092 = vperm.slane %v1090, 0
          %v1100 = vunpack.c.l.b16 %v1083
          %v1101 = vunpack.c.l.b16 %v1084
          %v1102 = vunpack.c.l.b16 %v1085
          %v1103 = vunpack.c.l.b16 %v1086
          %v1104 = vunpack.c.l.b16 %v1087
          %v1105 = vunpack.c.l.b16 %v1088
          %v1106 = vpack.c.b16 %v1101, %v1100
          %v1107 = vpack.c.b16 %v1103, %v1102
          %v1108 = vpack.c.b16 %v1105, %v1104
          %1112 = vmatpush.bf16.msra.mxu0 0
          %1113 = vmatpush.bf16.msra.mxu0 0
          %1114 = vmatpush.bf16.msra.mxu0 0
          %1115 = vmatpush.bf16.msra.mxu0 0
          %1116 = vmatpush.bf16.msra.mxu0 0
          %1117 = vmatpush.bf16.msra.mxu0 %v1108
          %1118 = vmatpush.bf16.msra.mxu0 %v1107
          %1119 = vmatpush.bf16.msra.mxu0 %v1106
          %1120 = vmatmul.bf16.gmra.mxu0 %v835
          %v1121 = vpop.f32.mrf.mxu0
          %v1122 = vadd.f32 %v1092, %v1121
          %v1123 = vpop.f32.mrf.mxu0
          %1124 = vdwg.mxu0
          %v1125 = vpack.c.bf16 %v1122, %v1122
          %s1126 = scalar_lea.vmem [#allocation2], 12
          %1127 = vst [vmem:[%s1126] sm:$0xf] %v1125
          %s1128 = scalar_lea.vmem [#allocation21], 72
          %v1129 = vld [vmem:[%s1128] sm:$0xf]
          %v1130 = vld [vmem:[%s1128 + $0x4] sm:$0xf]
          %v1131 = vld [vmem:[%s1128 + $0x8] sm:$0xf]
          %v1132 = vld [vmem:[%s1128 + $0xc] sm:$0xf]
          %v1133 = vld [vmem:[%s1128 + $0x10] sm:$0xf]
          %v1134 = vld [vmem:[%s1128 + $0x14] sm:$0xf]
          %s1135 = scalar_lea.vmem %s13, 3
          %v1136 = vld [vmem:[%s1135] sm:$0x1]
          %v1138 = vperm.slane %v1136, 0
          %v1146 = vunpack.c.l.b16 %v1129
          %v1147 = vunpack.c.l.b16 %v1130
          %v1148 = vunpack.c.l.b16 %v1131
          %v1149 = vunpack.c.l.b16 %v1132
          %v1150 = vunpack.c.l.b16 %v1133
          %v1151 = vunpack.c.l.b16 %v1134
          %v1152 = vpack.c.b16 %v1147, %v1146
          %v1153 = vpack.c.b16 %v1149, %v1148
          %v1154 = vpack.c.b16 %v1151, %v1150
          %1158 = vmatpush.bf16.msra.mxu0 0
          %1159 = vmatpush.bf16.msra.mxu0 0
          %1160 = vmatpush.bf16.msra.mxu0 0
          %1161 = vmatpush.bf16.msra.mxu0 0
          %1162 = vmatpush.bf16.msra.mxu0 0
          %1163 = vmatpush.bf16.msra.mxu0 %v1154
          %1164 = vmatpush.bf16.msra.mxu0 %v1153
          %1165 = vmatpush.bf16.msra.mxu0 %v1152
          %1166 = vmatmul.bf16.gmra.mxu0 %v881
          %v1167 = vpop.f32.mrf.mxu0
          %v1168 = vadd.f32 %v1138, %v1167
          %v1169 = vpop.f32.mrf.mxu0
          %1170 = vdwg.mxu0
          %v1171 = vpack.c.bf16 %v1168, %v1168
          %s1172 = scalar_lea.vmem [#allocation3], 12
          %1173 = vst [vmem:[%s1172] sm:$0xf] %v1171
        $region136: #{tpu_custom_call.1} parent=83 // pred_fallthru
          _
        %v1174 = vld [vmem:[%s633] sm:$0xff]
        %vm1175 = vcmask 261120
        %v1176 = vsel %vm1175, %v1174, 0.0
        %1177 = vadd.xlane.f32.xlu0 %v1176
        %v1178 = vpop.xlane.xlu0 %1177
        %v1179 = vrcp.pop 32.0
        %v1180 = vmul.f32 32.0, %v1179
        %v1181 = vsub.f32 1.0, %v1180
        %v1182 = vmul.f32 %v1179, %v1181
        %v1183 = vadd.f32 %v1179, %v1182
        %vm1184 = vweird.f32 %v1179
        %v1185 = vsel %vm1184, %v1179, %v1183
        %v1186 = vmul.f32 %v1178, %v1185
        %v1187 = vsub.f32 %v1174, %v1186
        %v1188 = vmul.f32 %v1187, %v1187
        %v1189 = vsel %vm1175, %v1188, 0.0
        %1190 = vadd.xlane.f32.xlu0 %v1189
        %v1191 = vpop.xlane.xlu0 %1190
        %v1192 = vmul.f32 %v1191, %v1185
        %v1193 = vadd.f32 %v1192, 1e-05
        %v1194 = vrsqrt.pop %v1193
        %v1195 = vmul.f32 %v1194, %v1193
        %v1196 = vmul.f32 %v1195, %v1194
        %v1197 = vmul.f32 0.5, %v1196
        %v1198 = vsub.f32 1.5, %v1197
        %v1199 = vmul.f32 %v1194, %v1198
        %vm1200 = vweird.f32 %v1193
        %vm1201 = vweird.f32 %v1194
        %vm1202 = vmor %vm1200, %vm1201
        %v1203 = vsel %vm1202, %v1194, %v1199
        %v1204 = vmul.f32 %v1187, %v1203
        %v1205 = vld [vmem:[#allocation9] sm:$0x1]
        %v1207 = vperm.slane %v1205, 0
        %v1209 = vmul.f32 %v1204, %v1207
        %v1210 = vld [vmem:[#allocation10] sm:$0x1]
        %v1212 = vperm.slane %v1210, 0
        %v1214 = vadd.f32 %v1209, %v1212
        %v1215 = vpack.c.bf16 %v1214, %v1214
        %v1216 = vld [vmem:[#allocation12] sm:$0xf]
        %v1217 = vld [vmem:[#allocation12 + $0x4] sm:$0xf]
        %v1218 = vld [vmem:[#allocation12 + $0x8] sm:$0xf]
        %v1219 = vld [vmem:[#allocation12 + $0xc] sm:$0xf]
        %v1220 = vld [vmem:[%s5] sm:$0x1]
        %v1222 = vperm.slane %v1220, 0
        %v1228 = vunpack.c.l.b16 %v1216
        %v1229 = vunpack.c.l.b16 %v1217
        %v1230 = vunpack.c.l.b16 %v1218
        %v1231 = vunpack.c.l.b16 %v1219
        %v1232 = vpack.c.b16 %v1229, %v1228
        %v1233 = vpack.c.b16 %v1231, %v1230
        %v1237 = vsel %vm1175, %v1215, 0
        %1239 = vmatpush.bf16.msra.mxu0 0
        %1240 = vmatpush.bf16.msra.mxu0 0
        %1241 = vmatpush.bf16.msra.mxu0 0
        %1242 = vmatpush.bf16.msra.mxu0 0
        %1243 = vmatpush.bf16.msra.mxu0 0
        %1244 = vmatpush.bf16.msra.mxu0 0
        %1245 = vmatpush.bf16.msra.mxu0 %v1233
        %1246 = vmatpush.bf16.msra.mxu0 %v1232
        %1247 = vmatmul.bf16.gmra.mxu0 %v1237
        %v1248 = vpop.f32.mrf.mxu0
        %v1249 = vadd.f32 %v1222, %v1248
        %v1250 = vpop.f32.mrf.mxu0
        %1251 = vdwg.mxu0
        %v1252 = vpack.c.bf16 %v1249, %v1249
        %v1253 = vld [vmem:[#allocation2] sm:$0xf]
        %1254 = vmatpush.bf16.xpose.msra.mxu0 0
        %1255 = vmatpush.bf16.xpose.msra.mxu0 0
        %1256 = vmatpush.bf16.xpose.msra.mxu0 0
        %1257 = vmatpush.bf16.xpose.msra.mxu0 0
        %1258 = vmatpush.bf16.xpose.msra.mxu0 0
        %1259 = vmatpush.bf16.xpose.msra.mxu0 0
        %1260 = vmatpush.bf16.xpose.msra.mxu0 0
        %1261 = vmatpush.bf16.xpose.msra.mxu0 %v1253
        %1262 = vmatmul.bf16.gmra.mxu0 %v1252
        %v1263 = vpop.f32.mrf.mxu0
        %v1264 = vadd.f32 0.0, %v1263
        %v1265 = vpop.f32.mrf.mxu0
        %1266 = vdwg.mxu0
        %vm1267 = vcmask 64512
        %v1268 = vsel %vm1267, %v1264, -inf
        %1269 = vmax.xlane.f32.xlu0 %v1268
        %v1270 = vpop.xlane.xlu0 %1269
        %v1271 = vsub.f32 %v1264, %v1270
        %v1272 = vmul.f32 %v1271, 1.442695
        %v1273 = vpow.pop %v1272
        %v1274 = vsel %vm1267, %v1273, 0.0
        %1275 = vadd.xlane.f32.xlu0 %v1274
        %v1276 = vpop.xlane.xlu0 %1275
        %v1277 = vpack.c.bf16 %v1273, %v1273
        %v1278 = vld [vmem:[#allocation3] sm:$0xf]
        %v1280 = vsel %vm1267, %v1277, 0
        %vm1282 = vcmask 1043456
        %v1284 = vsel %vm1282, %v1278, 0
        %1286 = vmatpush.bf16.msra.mxu0 0
        %1287 = vmatpush.bf16.msra.mxu0 0
        %1288 = vmatpush.bf16.msra.mxu0 0
        %1289 = vmatpush.bf16.msra.mxu0 0
        %1290 = vmatpush.bf16.msra.mxu0 0
        %1291 = vmatpush.bf16.msra.mxu0 0
        %1292 = vmatpush.bf16.msra.mxu0 0
        %1293 = vmatpush.bf16.msra.mxu0 %v1284
        %1294 = vmatmul.bf16.gmra.mxu0 %v1280
        %v1295 = vpop.f32.mrf.mxu0
        %v1296 = vadd.f32 0.0, %v1295
        %v1297 = vpop.f32.mrf.mxu0
        %1298 = vdwg.mxu0
        %v1299 = vrcp.pop %v1276
        %v1300 = vmul.f32 %v1296, %v1299
        %v1301 = vpack.c.bf16 %v1300, %v1300
        %v1302 = vld [vmem:[#allocation22] sm:$0xf]
        %v1303 = vld [vmem:[#allocation22 + $0x4] sm:$0xf]
        %v1304 = vld [vmem:[#allocation22 + $0x8] sm:$0xf]
        %v1305 = vld [vmem:[#allocation22 + $0xc] sm:$0xf]
        %v1306 = vld [vmem:[#allocation22 + $0x10] sm:$0xf]
        %v1307 = vld [vmem:[#allocation22 + $0x14] sm:$0xf]
        %v1308 = vld [vmem:[#allocation22 + $0x18] sm:$0xf]
        %v1309 = vld [vmem:[#allocation22 + $0x1c] sm:$0xf]
        %v1310 = vld [vmem:[#allocation22 + $0x20] sm:$0xf]
        %v1311 = vld [vmem:[#allocation22 + $0x24] sm:$0xf]
        %v1312 = vld [vmem:[#allocation22 + $0x28] sm:$0xf]
        %v1313 = vld [vmem:[#allocation22 + $0x2c] sm:$0xf]
        %v1314 = vld [vmem:[#allocation22 + $0x30] sm:$0xf]
        %v1315 = vld [vmem:[#allocation22 + $0x34] sm:$0xf]
        %v1316 = vld [vmem:[#allocation22 + $0x38] sm:$0xf]
        %v1317 = vld [vmem:[#allocation22 + $0x3c] sm:$0xf]
        %s1318 = scalar_lea.vmem [#allocation12], 16
        %v1319 = vld [vmem:[%s1318] sm:$0xf]
        %v1320 = vld [vmem:[%s1318 + $0x4] sm:$0xf]
        %v1321 = vld [vmem:[%s1318 + $0x8] sm:$0xf]
        %v1322 = vld [vmem:[%s1318 + $0xc] sm:$0xf]
        %s1323 = scalar_lea.vmem %s5, 1
        %v1324 = vld [vmem:[%s1323] sm:$0x1]
        %v1326 = vperm.slane %v1324, 0
        %v1332 = vunpack.c.l.b16 %v1319
        %v1333 = vunpack.c.l.b16 %v1320
        %v1334 = vunpack.c.l.b16 %v1321
        %v1335 = vunpack.c.l.b16 %v1322
        %v1336 = vpack.c.b16 %v1333, %v1332
        %v1337 = vpack.c.b16 %v1335, %v1334
        %1340 = vmatpush.bf16.msra.mxu0 0
        %1341 = vmatpush.bf16.msra.mxu0 0
        %1342 = vmatpush.bf16.msra.mxu0 0
        %1343 = vmatpush.bf16.msra.mxu0 0
        %1344 = vmatpush.bf16.msra.mxu0 0
        %1345 = vmatpush.bf16.msra.mxu0 0
        %1346 = vmatpush.bf16.msra.mxu0 %v1337
        %1347 = vmatpush.bf16.msra.mxu0 %v1336
        %1348 = vmatmul.bf16.gmra.mxu0 %v1237
        %v1349 = vpop.f32.mrf.mxu0
        %v1350 = vadd.f32 %v1326, %v1349
        %v1351 = vpop.f32.mrf.mxu0
        %1352 = vdwg.mxu0
        %v1353 = vpack.c.bf16 %v1350, %v1350
        %s1354 = scalar_lea.vmem [#allocation2], 4
        %v1355 = vld [vmem:[%s1354] sm:$0xf]
        %1356 = vmatpush.bf16.xpose.msra.mxu0 0
        %1357 = vmatpush.bf16.xpose.msra.mxu0 0
        %1358 = vmatpush.bf16.xpose.msra.mxu0 0
        %1359 = vmatpush.bf16.xpose.msra.mxu0 0
        %1360 = vmatpush.bf16.xpose.msra.mxu0 0
        %1361 = vmatpush.bf16.xpose.msra.mxu0 0
        %1362 = vmatpush.bf16.xpose.msra.mxu0 0
        %1363 = vmatpush.bf16.xpose.msra.mxu0 %v1355
        %1364 = vmatmul.bf16.gmra.mxu0 %v1353
        %v1365 = vpop.f32.mrf.mxu0
        %v1366 = vadd.f32 0.0, %v1365
        %v1367 = vpop.f32.mrf.mxu0
        %1368 = vdwg.mxu0
        %v1369 = vsel %vm1267, %v1366, -inf
        %1370 = vmax.xlane.f32.xlu0 %v1369
        %v1371 = vpop.xlane.xlu0 %1370
        %v1372 = vsub.f32 %v1366, %v1371
        %v1373 = vmul.f32 %v1372, 1.442695
        %v1374 = vpow.pop %v1373
        %v1375 = vsel %vm1267, %v1374, 0.0
        %1376 = vadd.xlane.f32.xlu0 %v1375
        %v1377 = vpop.xlane.xlu0 %1376
        %v1378 = vpack.c.bf16 %v1374, %v1374
        %s1379 = scalar_lea.vmem [#allocation3], 4
        %v1380 = vld [vmem:[%s1379] sm:$0xf]
        %v1382 = vsel %vm1267, %v1378, 0
        %v1385 = vsel %vm1282, %v1380, 0
        %1387 = vmatpush.bf16.msra.mxu0 0
        %1388 = vmatpush.bf16.msra.mxu0 0
        %1389 = vmatpush.bf16.msra.mxu0 0
        %1390 = vmatpush.bf16.msra.mxu0 0
        %1391 = vmatpush.bf16.msra.mxu0 0
        %1392 = vmatpush.bf16.msra.mxu0 0
        %1393 = vmatpush.bf16.msra.mxu0 0
        %1394 = vmatpush.bf16.msra.mxu0 %v1385
        %1395 = vmatmul.bf16.gmra.mxu0 %v1382
        %v1396 = vpop.f32.mrf.mxu0
        %v1397 = vadd.f32 0.0, %v1396
        %v1398 = vpop.f32.mrf.mxu0
        %1399 = vdwg.mxu0
        %v1400 = vrcp.pop %v1377
        %v1401 = vmul.f32 %v1397, %v1400
        %v1402 = vpack.c.bf16 %v1401, %v1401
        %s1403 = scalar_lea.vmem [#allocation22], 64
        %v1404 = vld [vmem:[%s1403] sm:$0xf]
        %v1405 = vld [vmem:[%s1403 + $0x4] sm:$0xf]
        %v1406 = vld [vmem:[%s1403 + $0x8] sm:$0xf]
        %v1407 = vld [vmem:[%s1403 + $0xc] sm:$0xf]
        %v1408 = vld [vmem:[%s1403 + $0x10] sm:$0xf]
        %v1409 = vld [vmem:[%s1403 + $0x14] sm:$0xf]
        %v1410 = vld [vmem:[%s1403 + $0x18] sm:$0xf]
        %v1411 = vld [vmem:[%s1403 + $0x1c] sm:$0xf]
        %v1412 = vld [vmem:[%s1403 + $0x20] sm:$0xf]
        %v1413 = vld [vmem:[%s1403 + $0x24] sm:$0xf]
        %v1414 = vld [vmem:[%s1403 + $0x28] sm:$0xf]
        %v1415 = vld [vmem:[%s1403 + $0x2c] sm:$0xf]
        %v1416 = vld [vmem:[%s1403 + $0x30] sm:$0xf]
        %v1417 = vld [vmem:[%s1403 + $0x34] sm:$0xf]
        %v1418 = vld [vmem:[%s1403 + $0x38] sm:$0xf]
        %v1419 = vld [vmem:[%s1403 + $0x3c] sm:$0xf]
        %v1436 = vunpack.c.l.b16 %v1404
        %v1437 = vunpack.c.l.b16 %v1405
        %v1438 = vunpack.c.l.b16 %v1406
        %v1439 = vunpack.c.l.b16 %v1407
        %v1440 = vunpack.c.l.b16 %v1408
        %v1441 = vunpack.c.l.b16 %v1409
        %v1442 = vunpack.c.l.b16 %v1410
        %v1443 = vunpack.c.l.b16 %v1411
        %v1444 = vunpack.c.l.b16 %v1412
        %v1445 = vunpack.c.l.b16 %v1413
        %v1446 = vunpack.c.l.b16 %v1414
        %v1447 = vunpack.c.l.b16 %v1415
        %v1448 = vunpack.c.l.b16 %v1416
        %v1449 = vunpack.c.l.b16 %v1417
        %v1450 = vunpack.c.l.b16 %v1418
        %v1451 = vunpack.c.l.b16 %v1419
        %v1452 = vpack.c.b16 %v1437, %v1436
        %v1453 = vpack.c.b16 %v1439, %v1438
        %v1454 = vpack.c.b16 %v1441, %v1440
        %v1455 = vpack.c.b16 %v1443, %v1442
        %v1456 = vpack.c.b16 %v1445, %v1444
        %v1457 = vpack.c.b16 %v1447, %v1446
        %v1458 = vpack.c.b16 %v1449, %v1448
        %v1459 = vpack.c.b16 %v1451, %v1450
        %1468 = vmatpush.bf16.msra.mxu0 %v1459
        %1469 = vmatpush.bf16.msra.mxu0 %v1458
        %1470 = vmatpush.bf16.msra.mxu0 %v1457
        %1471 = vmatpush.bf16.msra.mxu0 %v1456
        %1472 = vmatpush.bf16.msra.mxu0 %v1455
        %1473 = vmatpush.bf16.msra.mxu0 %v1454
        %1474 = vmatpush.bf16.msra.mxu0 %v1453
        %1475 = vmatpush.bf16.msra.mxu0 %v1452
        %1476 = vmatmul.bf16.gmra.mxu0 %v1402
        %v1477 = vpop.f32.mrf.mxu0
        %v1478 = vadd.f32 0.0, %v1477
        %v1479 = vpop.f32.mrf.mxu0
        %1480 = vdwg.mxu0
        %v1497 = vunpack.c.l.b16 %v1302
        %v1498 = vunpack.c.l.b16 %v1303
        %v1499 = vunpack.c.l.b16 %v1304
        %v1500 = vunpack.c.l.b16 %v1305
        %v1501 = vunpack.c.l.b16 %v1306
        %v1502 = vunpack.c.l.b16 %v1307
        %v1503 = vunpack.c.l.b16 %v1308
        %v1504 = vunpack.c.l.b16 %v1309
        %v1505 = vunpack.c.l.b16 %v1310
        %v1506 = vunpack.c.l.b16 %v1311
        %v1507 = vunpack.c.l.b16 %v1312
        %v1508 = vunpack.c.l.b16 %v1313
        %v1509 = vunpack.c.l.b16 %v1314
        %v1510 = vunpack.c.l.b16 %v1315
        %v1511 = vunpack.c.l.b16 %v1316
        %v1512 = vunpack.c.l.b16 %v1317
        %v1513 = vpack.c.b16 %v1498, %v1497
        %v1514 = vpack.c.b16 %v1500, %v1499
        %v1515 = vpack.c.b16 %v1502, %v1501
        %v1516 = vpack.c.b16 %v1504, %v1503
        %v1517 = vpack.c.b16 %v1506, %v1505
        %v1518 = vpack.c.b16 %v1508, %v1507
        %v1519 = vpack.c.b16 %v1510, %v1509
        %v1520 = vpack.c.b16 %v1512, %v1511
        %1529 = vmatpush.bf16.msra.mxu0 %v1520
        %1530 = vmatpush.bf16.msra.mxu0 %v1519
        %1531 = vmatpush.bf16.msra.mxu0 %v1518
        %1532 = vmatpush.bf16.msra.mxu0 %v1517
        %1533 = vmatpush.bf16.msra.mxu0 %v1516
        %1534 = vmatpush.bf16.msra.mxu0 %v1515
        %1535 = vmatpush.bf16.msra.mxu0 %v1514
        %1536 = vmatpush.bf16.msra.mxu0 %v1513
        %1537 = vmatmul.bf16.gmra.mxu0 %v1301
        %v1538 = vpop.f32.mrf.mxu0
        %v1539 = vadd.f32 %v1478, %v1538
        %v1540 = vpop.f32.mrf.mxu0
        %1541 = vdwg.mxu0
        %s1542 = scalar_lea.vmem [#allocation12], 32
        %v1543 = vld [vmem:[%s1542] sm:$0xf]
        %v1544 = vld [vmem:[%s1542 + $0x4] sm:$0xf]
        %v1545 = vld [vmem:[%s1542 + $0x8] sm:$0xf]
        %v1546 = vld [vmem:[%s1542 + $0xc] sm:$0xf]
        %s1547 = scalar_lea.vmem %s5, 2
        %v1548 = vld [vmem:[%s1547] sm:$0x1]
        %v1550 = vperm.slane %v1548, 0
        %v1556 = vunpack.c.l.b16 %v1543
        %v1557 = vunpack.c.l.b16 %v1544
        %v1558 = vunpack.c.l.b16 %v1545
        %v1559 = vunpack.c.l.b16 %v1546
        %v1560 = vpack.c.b16 %v1557, %v1556
        %v1561 = vpack.c.b16 %v1559, %v1558
        %1564 = vmatpush.bf16.msra.mxu0 0
        %1565 = vmatpush.bf16.msra.mxu0 0
        %1566 = vmatpush.bf16.msra.mxu0 0
        %1567 = vmatpush.bf16.msra.mxu0 0
        %1568 = vmatpush.bf16.msra.mxu0 0
        %1569 = vmatpush.bf16.msra.mxu0 0
        %1570 = vmatpush.bf16.msra.mxu0 %v1561
        %1571 = vmatpush.bf16.msra.mxu0 %v1560
        %1572 = vmatmul.bf16.gmra.mxu0 %v1237
        %v1573 = vpop.f32.mrf.mxu0
        %v1574 = vadd.f32 %v1550, %v1573
        %v1575 = vpop.f32.mrf.mxu0
        %1576 = vdwg.mxu0
        %v1577 = vpack.c.bf16 %v1574, %v1574
        %s1578 = scalar_lea.vmem [#allocation2], 8
        %v1579 = vld [vmem:[%s1578] sm:$0xf]
        %1580 = vmatpush.bf16.xpose.msra.mxu0 0
        %1581 = vmatpush.bf16.xpose.msra.mxu0 0
        %1582 = vmatpush.bf16.xpose.msra.mxu0 0
        %1583 = vmatpush.bf16.xpose.msra.mxu0 0
        %1584 = vmatpush.bf16.xpose.msra.mxu0 0
        %1585 = vmatpush.bf16.xpose.msra.mxu0 0
        %1586 = vmatpush.bf16.xpose.msra.mxu0 0
        %1587 = vmatpush.bf16.xpose.msra.mxu0 %v1579
        %1588 = vmatmul.bf16.gmra.mxu0 %v1577
        %v1589 = vpop.f32.mrf.mxu0
        %v1590 = vadd.f32 0.0, %v1589
        %v1591 = vpop.f32.mrf.mxu0
        %1592 = vdwg.mxu0
        %v1593 = vsel %vm1267, %v1590, -inf
        %1594 = vmax.xlane.f32.xlu0 %v1593
        %v1595 = vpop.xlane.xlu0 %1594
        %v1596 = vsub.f32 %v1590, %v1595
        %v1597 = vmul.f32 %v1596, 1.442695
        %v1598 = vpow.pop %v1597
        %v1599 = vsel %vm1267, %v1598, 0.0
        %1600 = vadd.xlane.f32.xlu0 %v1599
        %v1601 = vpop.xlane.xlu0 %1600
        %v1602 = vpack.c.bf16 %v1598, %v1598
        %s1603 = scalar_lea.vmem [#allocation3], 8
        %v1604 = vld [vmem:[%s1603] sm:$0xf]
        %v1606 = vsel %vm1267, %v1602, 0
        %v1609 = vsel %vm1282, %v1604, 0
        %1611 = vmatpush.bf16.msra.mxu0 0
        %1612 = vmatpush.bf16.msra.mxu0 0
        %1613 = vmatpush.bf16.msra.mxu0 0
        %1614 = vmatpush.bf16.msra.mxu0 0
        %1615 = vmatpush.bf16.msra.mxu0 0
        %1616 = vmatpush.bf16.msra.mxu0 0
        %1617 = vmatpush.bf16.msra.mxu0 0
        %1618 = vmatpush.bf16.msra.mxu0 %v1609
        %1619 = vmatmul.bf16.gmra.mxu0 %v1606
        %v1620 = vpop.f32.mrf.mxu0
        %v1621 = vadd.f32 0.0, %v1620
        %v1622 = vpop.f32.mrf.mxu0
        %1623 = vdwg.mxu0
        %v1624 = vrcp.pop %v1601
        %v1625 = vmul.f32 %v1621, %v1624
        %v1626 = vpack.c.bf16 %v1625, %v1625
        %s1627 = scalar_lea.vmem [#allocation22], 128
        %v1628 = vld [vmem:[%s1627] sm:$0xf]
        %v1629 = vld [vmem:[%s1627 + $0x4] sm:$0xf]
        %v1630 = vld [vmem:[%s1627 + $0x8] sm:$0xf]
        %v1631 = vld [vmem:[%s1627 + $0xc] sm:$0xf]
        %v1632 = vld [vmem:[%s1627 + $0x10] sm:$0xf]
        %v1633 = vld [vmem:[%s1627 + $0x14] sm:$0xf]
        %v1634 = vld [vmem:[%s1627 + $0x18] sm:$0xf]
        %v1635 = vld [vmem:[%s1627 + $0x1c] sm:$0xf]
        %v1636 = vld [vmem:[%s1627 + $0x20] sm:$0xf]
        %v1637 = vld [vmem:[%s1627 + $0x24] sm:$0xf]
        %v1638 = vld [vmem:[%s1627 + $0x28] sm:$0xf]
        %v1639 = vld [vmem:[%s1627 + $0x2c] sm:$0xf]
        %v1640 = vld [vmem:[%s1627 + $0x30] sm:$0xf]
        %v1641 = vld [vmem:[%s1627 + $0x34] sm:$0xf]
        %v1642 = vld [vmem:[%s1627 + $0x38] sm:$0xf]
        %v1643 = vld [vmem:[%s1627 + $0x3c] sm:$0xf]
        %v1660 = vunpack.c.l.b16 %v1628
        %v1661 = vunpack.c.l.b16 %v1629
        %v1662 = vunpack.c.l.b16 %v1630
        %v1663 = vunpack.c.l.b16 %v1631
        %v1664 = vunpack.c.l.b16 %v1632
        %v1665 = vunpack.c.l.b16 %v1633
        %v1666 = vunpack.c.l.b16 %v1634
        %v1667 = vunpack.c.l.b16 %v1635
        %v1668 = vunpack.c.l.b16 %v1636
        %v1669 = vunpack.c.l.b16 %v1637
        %v1670 = vunpack.c.l.b16 %v1638
        %v1671 = vunpack.c.l.b16 %v1639
        %v1672 = vunpack.c.l.b16 %v1640
        %v1673 = vunpack.c.l.b16 %v1641
        %v1674 = vunpack.c.l.b16 %v1642
        %v1675 = vunpack.c.l.b16 %v1643
        %v1676 = vpack.c.b16 %v1661, %v1660
        %v1677 = vpack.c.b16 %v1663, %v1662
        %v1678 = vpack.c.b16 %v1665, %v1664
        %v1679 = vpack.c.b16 %v1667, %v1666
        %v1680 = vpack.c.b16 %v1669, %v1668
        %v1681 = vpack.c.b16 %v1671, %v1670
        %v1682 = vpack.c.b16 %v1673, %v1672
        %v1683 = vpack.c.b16 %v1675, %v1674
        %1692 = vmatpush.bf16.msra.mxu0 %v1683
        %1693 = vmatpush.bf16.msra.mxu0 %v1682
        %1694 = vmatpush.bf16.msra.mxu0 %v1681
        %1695 = vmatpush.bf16.msra.mxu0 %v1680
        %1696 = vmatpush.bf16.msra.mxu0 %v1679
        %1697 = vmatpush.bf16.msra.mxu0 %v1678
        %1698 = vmatpush.bf16.msra.mxu0 %v1677
        %1699 = vmatpush.bf16.msra.mxu0 %v1676
        %1700 = vmatmul.bf16.gmra.mxu0 %v1626
        %v1701 = vpop.f32.mrf.mxu0
        %v1702 = vadd.f32 0.0, %v1701
        %v1703 = vpop.f32.mrf.mxu0
        %1704 = vdwg.mxu0
        %v1705 = vadd.f32 %v1539, %v1702
        %s1706 = scalar_lea.vmem [#allocation12], 48
        %v1707 = vld [vmem:[%s1706] sm:$0xf]
        %v1708 = vld [vmem:[%s1706 + $0x4] sm:$0xf]
        %v1709 = vld [vmem:[%s1706 + $0x8] sm:$0xf]
        %v1710 = vld [vmem:[%s1706 + $0xc] sm:$0xf]
        %s1711 = scalar_lea.vmem %s5, 3
        %v1712 = vld [vmem:[%s1711] sm:$0x1]
        %v1714 = vperm.slane %v1712, 0
        %v1720 = vunpack.c.l.b16 %v1707
        %v1721 = vunpack.c.l.b16 %v1708
        %v1722 = vunpack.c.l.b16 %v1709
        %v1723 = vunpack.c.l.b16 %v1710
        %v1724 = vpack.c.b16 %v1721, %v1720
        %v1725 = vpack.c.b16 %v1723, %v1722
        %1728 = vmatpush.bf16.msra.mxu0 0
        %1729 = vmatpush.bf16.msra.mxu0 0
        %1730 = vmatpush.bf16.msra.mxu0 0
        %1731 = vmatpush.bf16.msra.mxu0 0
        %1732 = vmatpush.bf16.msra.mxu0 0
        %1733 = vmatpush.bf16.msra.mxu0 0
        %1734 = vmatpush.bf16.msra.mxu0 %v1725
        %1735 = vmatpush.bf16.msra.mxu0 %v1724
        %1736 = vmatmul.bf16.gmra.mxu0 %v1237
        %v1737 = vpop.f32.mrf.mxu0
        %v1738 = vadd.f32 %v1714, %v1737
        %v1739 = vpop.f32.mrf.mxu0
        %1740 = vdwg.mxu0
        %v1741 = vpack.c.bf16 %v1738, %v1738
        %s1742 = scalar_lea.vmem [#allocation2], 12
        %v1743 = vld [vmem:[%s1742] sm:$0xf]
        %1744 = vmatpush.bf16.xpose.msra.mxu0 0
        %1745 = vmatpush.bf16.xpose.msra.mxu0 0
        %1746 = vmatpush.bf16.xpose.msra.mxu0 0
        %1747 = vmatpush.bf16.xpose.msra.mxu0 0
        %1748 = vmatpush.bf16.xpose.msra.mxu0 0
        %1749 = vmatpush.bf16.xpose.msra.mxu0 0
        %1750 = vmatpush.bf16.xpose.msra.mxu0 0
        %1751 = vmatpush.bf16.xpose.msra.mxu0 %v1743
        %1752 = vmatmul.bf16.gmra.mxu0 %v1741
        %v1753 = vpop.f32.mrf.mxu0
        %v1754 = vadd.f32 0.0, %v1753
        %v1755 = vpop.f32.mrf.mxu0
        %1756 = vdwg.mxu0
        %v1757 = vsel %vm1267, %v1754, -inf
        %1758 = vmax.xlane.f32.xlu0 %v1757
        %v1759 = vpop.xlane.xlu0 %1758
        %v1760 = vsub.f32 %v1754, %v1759
        %v1761 = vmul.f32 %v1760, 1.442695
        %v1762 = vpow.pop %v1761
        %v1763 = vsel %vm1267, %v1762, 0.0
        %1764 = vadd.xlane.f32.xlu0 %v1763
        %v1765 = vpop.xlane.xlu0 %1764
        %v1766 = vpack.c.bf16 %v1762, %v1762
        %s1767 = scalar_lea.vmem [#allocation3], 12
        %v1768 = vld [vmem:[%s1767] sm:$0xf]
        %v1770 = vsel %vm1267, %v1766, 0
        %v1773 = vsel %vm1282, %v1768, 0
        %1775 = vmatpush.bf16.msra.mxu0 0
        %1776 = vmatpush.bf16.msra.mxu0 0
        %1777 = vmatpush.bf16.msra.mxu0 0
        %1778 = vmatpush.bf16.msra.mxu0 0
        %1779 = vmatpush.bf16.msra.mxu0 0
        %1780 = vmatpush.bf16.msra.mxu0 0
        %1781 = vmatpush.bf16.msra.mxu0 0
        %1782 = vmatpush.bf16.msra.mxu0 %v1773
        %1783 = vmatmul.bf16.gmra.mxu0 %v1770
        %v1784 = vpop.f32.mrf.mxu0
        %v1785 = vadd.f32 0.0, %v1784
        %v1786 = vpop.f32.mrf.mxu0
        %1787 = vdwg.mxu0
        %v1788 = vrcp.pop %v1765
        %v1789 = vmul.f32 %v1785, %v1788
        %v1790 = vpack.c.bf16 %v1789, %v1789
        %s1791 = scalar_lea.vmem [#allocation22], 192
        %v1792 = vld [vmem:[%s1791] sm:$0xf]
        %v1793 = vld [vmem:[%s1791 + $0x4] sm:$0xf]
        %v1794 = vld [vmem:[%s1791 + $0x8] sm:$0xf]
        %v1795 = vld [vmem:[%s1791 + $0xc] sm:$0xf]
        %v1796 = vld [vmem:[%s1791 + $0x10] sm:$0xf]
        %v1797 = vld [vmem:[%s1791 + $0x14] sm:$0xf]
        %v1798 = vld [vmem:[%s1791 + $0x18] sm:$0xf]
        %v1799 = vld [vmem:[%s1791 + $0x1c] sm:$0xf]
        %v1800 = vld [vmem:[%s1791 + $0x20] sm:$0xf]
        %v1801 = vld [vmem:[%s1791 + $0x24] sm:$0xf]
        %v1802 = vld [vmem:[%s1791 + $0x28] sm:$0xf]
        %v1803 = vld [vmem:[%s1791 + $0x2c] sm:$0xf]
        %v1804 = vld [vmem:[%s1791 + $0x30] sm:$0xf]
        %v1805 = vld [vmem:[%s1791 + $0x34] sm:$0xf]
        %v1806 = vld [vmem:[%s1791 + $0x38] sm:$0xf]
        %v1807 = vld [vmem:[%s1791 + $0x3c] sm:$0xf]
        %v1824 = vunpack.c.l.b16 %v1792
        %v1825 = vunpack.c.l.b16 %v1793
        %v1826 = vunpack.c.l.b16 %v1794
        %v1827 = vunpack.c.l.b16 %v1795
        %v1828 = vunpack.c.l.b16 %v1796
        %v1829 = vunpack.c.l.b16 %v1797
        %v1830 = vunpack.c.l.b16 %v1798
        %v1831 = vunpack.c.l.b16 %v1799
        %v1832 = vunpack.c.l.b16 %v1800
        %v1833 = vunpack.c.l.b16 %v1801
        %v1834 = vunpack.c.l.b16 %v1802
        %v1835 = vunpack.c.l.b16 %v1803
        %v1836 = vunpack.c.l.b16 %v1804
        %v1837 = vunpack.c.l.b16 %v1805
        %v1838 = vunpack.c.l.b16 %v1806
        %v1839 = vunpack.c.l.b16 %v1807
        %v1840 = vpack.c.b16 %v1825, %v1824
        %v1841 = vpack.c.b16 %v1827, %v1826
        %v1842 = vpack.c.b16 %v1829, %v1828
        %v1843 = vpack.c.b16 %v1831, %v1830
        %v1844 = vpack.c.b16 %v1833, %v1832
        %v1845 = vpack.c.b16 %v1835, %v1834
        %v1846 = vpack.c.b16 %v1837, %v1836
        %v1847 = vpack.c.b16 %v1839, %v1838
        %1856 = vmatpush.bf16.msra.mxu0 %v1847
        %1857 = vmatpush.bf16.msra.mxu0 %v1846
        %1858 = vmatpush.bf16.msra.mxu0 %v1845
        %1859 = vmatpush.bf16.msra.mxu0 %v1844
        %1860 = vmatpush.bf16.msra.mxu0 %v1843
        %1861 = vmatpush.bf16.msra.mxu0 %v1842
        %1862 = vmatpush.bf16.msra.mxu0 %v1841
        %1863 = vmatpush.bf16.msra.mxu0 %v1840
        %1864 = vmatmul.bf16.gmra.mxu0 %v1790
        %v1865 = vpop.f32.mrf.mxu0
        %v1866 = vadd.f32 0.0, %v1865
        %v1867 = vpop.f32.mrf.mxu0
        %1868 = vdwg.mxu0
        %v1869 = vadd.f32 %v1705, %v1866
        %v1870 = vld [vmem:[%s15] sm:$0x1]
        %v1872 = vperm.slane %v1870, 0
        %v1874 = vadd.f32 %v1869, %v1872
        %1875 = vst [vmem:[%s747] sm:$0xff] %v1874
        %s1876 = sand.u32 %s411, 1
        %s1877 = scalar_lea.sflag [#allocation6], %s1876
        %s1878 = sand.u32 %s411, 1
        %s1879 = smul.addr %s1878, 8
        %s1880 = scalar_lea.vmem [#allocation24], %s1879
        // Predicated region
        $region137: #{tpu_custom_call.1} parent=83 // pred_check
          %p1881 = pneg %p421
        $region138: #{tpu_custom_call.1} parent=83 // pred_check_branch
          %1883 = sbr.rel (%p1881) target = $region140
        $region139: #{tpu_custom_call.1} parent=83 // pred_region
          %1885 = vsyncadd %s1877, 0
          %s1886 = sadd.s32 %s46, %s45
          %s1887 = smul.addr %s1886, 8
          %s1888 = scalar_lea.hbm %s16, %s1887
          %s1890 = sshll.u32 %s1880, 4
          %s1891 = int_to_ptr.vmem [resolvable:$true] %s1890
          %s1892 = sshll.u32 %s1888, 4
          %s1893 = int_to_ptr.hbm [resolvable:$true] %s1892
          %1895 = dma.vmem_to_hbm [thread:$0]  %s1891, 128, %s1893, %s1877
        $region140: #{tpu_custom_call.1} parent=83 // pred_fallthru
          _
      $region84: #{tpu_custom_call.1} parent=5 // pred_fallthru
        _
      %p1896 = scmp.le.s32.totalorder 2, %s36
      // Predicated region
      $region141: #{tpu_custom_call.1} parent=5 // pred_check
        %p1897 = pneg %p1896
      $region142: #{tpu_custom_call.1} parent=5 // pred_check_branch
        %1899 = sbr.rel (%p1897) target = $region144
      $region143: #{tpu_custom_call.1} parent=5 // pred_region
        %s1900 = ssub.s32 %s36, 2
        // Predicated region
        $region145: #{tpu_custom_call.1} parent=143 // pred_check
          %p1901 = pneg %p427
        $region146: #{tpu_custom_call.1} parent=143 // pred_check_branch
          %1903 = sbr.rel (%p1901) target = $region148
        $region147: #{tpu_custom_call.1} parent=143 // pred_region
          %s1904 = sand.u32 %s412, 1
          %s1905 = scalar_lea.sflag [#allocation6], %s1904
          %s1906 = sand.u32 %s412, 1
          %s1907 = smul.addr %s1906, 8
          %s1908 = scalar_lea.vmem [#allocation24], %s1907
          %1910 = dma.done %s1905, 128
        $region148: #{tpu_custom_call.1} parent=143 // pred_fallthru
          _
      $region144: #{tpu_custom_call.1} parent=5 // pred_fallthru
        _
    $region6: #{tpu_custom_call.1} parent=1 // loop_footer
      %s40 = sadd.s32 1, %s36
    $region7: #{tpu_custom_call.1} parent=1 // loop_footer_branch
      %35 = sbr.rel target = $region3
    $region8: #{tpu_custom_call.1} parent=1 // loop_exit
      _
    %1911 = vsyncpa [#allocation5], 1
    %s1912 = scalar_lea.sflag [#allocation5], 1
    %1913 = vsyncpa %s1912, 1
    %1914 = vsyncpa [#allocation8], 1
    %s1915 = scalar_lea.sflag [#allocation8], 1
    %1916 = vsyncpa %s1915, 1
    %1917 = vsyncpa [#allocation11], 1
    %1918 = vsyncpa [#allocation14], 1
    %1919 = vsyncpa [#allocation17], 1
    %1920 = vsyncpa [#allocation20], 1
    %1921 = vsyncpa [#allocation23], 1
    %1922 = vsyncpa [#allocation6], 1
    %s1923 = scalar_lea.sflag [#allocation6], 1
    %1924 = vsyncpa %s1923, 1

</llo_original>
